<compile_context>
chip_gen: v7x
topology: tpu7x:2x2x1
jax: 0.10.0
libtpu: 0.0.40
codegen_flags: <defaults>
</compile_context>

<pallas_src>
import functools

import jax
import jax.numpy as jnp
from jax.experimental import pallas as pl
from jax.experimental.pallas import tpu as pltpu

_EPS = 1e-5
_ALPHA = 0.2
_LANES = 128
_VMEM_LIMIT = 32 * 1024 * 1024      # explicit scoped-VMEM limit (safe on v5e/v6e/v7x)
_TILE_BUDGET = 12 * 1024 * 1024     # target double-buffered working set per layer


def _round_up(x, m):
    return (x + m - 1) // m * m


def _choose_tm(M, K, Cpad, tm_max=1024):
    """Largest row tile (multiple of 8, <= tm_max) whose double-buffered
    working set (bf16 patches + bf16 weights + bf16 output) fits the budget.
    Capped at ceil(M/2) so the 1-D grid always has >= 2 tiles and
    dimension_semantics=("parallel",) can use both v7x TensorCores."""
    tm = tm_max
    while tm > 8:
        work = 2 * tm * K * 2 + 2 * K * Cpad * 2 + 2 * tm * Cpad * 2
        if work <= _TILE_BUDGET:
            break
        tm //= 2
    if M > 8:
        tm = min(tm, _round_up((M + 1) // 2, 8))
    else:
        tm = 8
    return max(tm, 8)


# ---------------------------------------------------------------------------
# Pallas kernels
# ---------------------------------------------------------------------------
def _matmul_lrelu_kernel(x_ref, w_ref, o_ref, *, alpha):
    # (TM, Kp) bf16 @ (Kp, Cpad) bf16 -> f32 acc on the MXU, LeakyReLU, bf16 store.
    y = jnp.dot(x_ref[...], w_ref[...], preferred_element_type=jnp.float32)
    y = jnp.where(y > 0, y, alpha * y)
    o_ref[...] = y.astype(o_ref.dtype)


def _matmul_stats_kernel(x_ref, w_ref, stats_ref):
    # BatchNorm pass 1: matmul + per-tile per-channel (sum, sum-of-squares) ONLY.
    # No full-size activation is written (it is recomputed in pass 2).
    y = jnp.dot(x_ref[...], w_ref[...], preferred_element_type=jnp.float32)
    s = jnp.sum(y, axis=0, keepdims=True)           # (1, Cpad) f32
    ss = jnp.sum(y * y, axis=0, keepdims=True)      # (1, Cpad) f32
    stats_ref[...] = jnp.concatenate([s, ss], axis=0)[None]   # (1, 2, Cpad)


def _matmul_bn_lrelu_kernel(x_ref, w_ref, scale_ref, shift_ref, o_ref, *, alpha):
    # BatchNorm pass 2: recomputed matmul fused with per-channel affine + LeakyReLU.
    y = jnp.dot(x_ref[...], w_ref[...], preferred_element_type=jnp.float32)
    y = y * scale_ref[...] + shift_ref[...]
    o_ref[...] = jnp.where(y > 0, y, alpha * y).astype(o_ref.dtype)


# ---------------------------------------------------------------------------
# XLA glue: NHWC patch extraction (pure data movement, channels stay on lanes).
# Input is already bf16, so the expanded patches matrix is materialized in bf16.
# ---------------------------------------------------------------------------
def _extract_patches_nhwc(x, kh, kw, stride, pad):
    # x: (N, H, W, C) -> (N*OH*OW, KH*KW*C), K ordered (kh, kw, c).
    N, H, W, C = x.shape
    xp = jnp.pad(x, ((0, 0), (pad, pad), (pad, pad), (0, 0)))
    OH = (H + 2 * pad - kh) // stride + 1
    OW = (W + 2 * pad - kw) // stride + 1
    taps = []
    for i in range(kh):
        for j in range(kw):
            taps.append(xp[:, i:i + stride * OH:stride, j:j + stride * OW:stride, :])
    patches = jnp.stack(taps, axis=3)                  # (N, OH, OW, KH*KW, C)
    return patches.reshape(N * OH * OW, kh * kw * C), OH, OW
    # TODO(synk): replace this XLA-side im2col with in-kernel shifted-matmul
    # accumulation over the 16 taps (manual DMA of overlapping input rows) to
    # remove the remaining ~4x HBM read expansion and the patches materialization.


# ---------------------------------------------------------------------------
# One conv layer: tiled matmul (+ optional two-pass BN) + LeakyReLU, bf16 out
# ---------------------------------------------------------------------------
def _conv_layer(x, w, *, stride, pad, use_bn):
    # x: (N, H, W, Cin) NHWC bf16; w: (Cout, Cin, KH, KW) f32 (PyTorch layout).
    N = x.shape[0]
    Cout, Cin, KH, KW = w.shape
    patches, OH, OW = _extract_patches_nhwc(x, KH, KW, stride, pad)
    M, K = patches.shape
    Cpad = _round_up(Cout, _LANES)
    Kp = _round_up(K, _LANES)

    w2d = jnp.transpose(w, (2, 3, 1, 0)).reshape(K, Cout)
    if Kp != K or Cpad != Cout:
        w2d = jnp.pad(w2d, ((0, Kp - K), (0, Cpad - Cout)))
    if Kp != K:
        patches = jnp.pad(patches, ((0, 0), (0, Kp - K)))

    TM = _choose_tm(M, Kp, Cpad)
    Mp = _round_up(M, TM)
    if Mp != M:
        patches = jnp.pad(patches, ((0, Mp - M), (0, 0)))   # zero rows: inert for BN sums
    n_tiles = Mp // TM

    x_bf = patches.astype(jnp.bfloat16)
    w_bf = w2d.astype(jnp.bfloat16)

    cparams = pltpu.CompilerParams(
        dimension_semantics=("parallel",),
        vmem_limit_bytes=_VMEM_LIMIT)

    x_spec = pl.BlockSpec((TM, Kp), lambda i: (i, 0))
    w_spec = pl.BlockSpec((Kp, Cpad), lambda i: (0, 0))
    y_spec = pl.BlockSpec((TM, Cpad), lambda i: (i, 0))

    if not use_bn:
        y = pl.pallas_call(
            functools.partial(_matmul_lrelu_kernel, alpha=_ALPHA),
            out_shape=jax.ShapeDtypeStruct((Mp, Cpad), jnp.bfloat16),
            grid=(n_tiles,),
            in_specs=[x_spec, w_spec],
            out_specs=y_spec,
            compiler_params=cparams,
            cost_estimate=pl.CostEstimate(
                flops=2 * Mp * Kp * Cpad, transcendentals=0,
                bytes_accessed=Mp * Kp * 2 + Kp * Cpad * 2 + Mp * Cpad * 2),
        )(x_bf, w_bf)
    else:
        # Pass 1: stats only (no full-size intermediate written to HBM).
        part = pl.pallas_call(
            _matmul_stats_kernel,
            out_shape=jax.ShapeDtypeStruct((n_tiles, 2, Cpad), jnp.float32),
            grid=(n_tiles,),
            in_specs=[x_spec, w_spec],
            out_specs=pl.BlockSpec((1, 2, Cpad), lambda i: (i, 0, 0)),
            compiler_params=cparams,
            cost_estimate=pl.CostEstimate(
                flops=2 * Mp * Kp * Cpad + 3 * Mp * Cpad, transcendentals=0,
                bytes_accessed=Mp * Kp * 2 + Kp * Cpad * 2 + n_tiles * 2 * Cpad * 4),
        )(x_bf, w_bf)

        # Tiny cross-tile reduction + BN affine in f32 (training-mode batch
        # stats, biased variance, gamma=1, beta=0).  Padded Cout lanes are
        # masked out of scale/shift so results never depend on weight padding.
        tot = jnp.sum(part, axis=0)                       # (2, Cpad)
        mean = tot[0] / M                                 # divide by true row count
        var = jnp.maximum(tot[1] / M - mean * mean, 0.0)
        scale = jax.lax.rsqrt(var + _EPS)
        shift = -mean * scale
        lane = jnp.arange(Cpad)
        scale = jnp.where(lane < Cout, scale, 0.0)
        shift = jnp.where(lane < Cout, shift, 0.0)

        # Pass 2: recompute the matmul fused with scale/shift + LeakyReLU,
        # single bf16 writeback.
        y = pl.pallas_call(
            functools.partial(_matmul_bn_lrelu_kernel, alpha=_ALPHA),
            out_shape=jax.ShapeDtypeStruct((Mp, Cpad), jnp.bfloat16),
            grid=(n_tiles,),
            in_specs=[x_spec, w_spec,
                      pl.BlockSpec((1, Cpad), lambda i: (0, 0)),
                      pl.BlockSpec((1, Cpad), lambda i: (0, 0))],
            out_specs=y_spec,
            compiler_params=cparams,
            cost_estimate=pl.CostEstimate(
                flops=2 * Mp * Kp * Cpad + 3 * Mp * Cpad, transcendentals=0,
                bytes_accessed=Mp * Kp * 2 + Kp * Cpad * 2 + Mp * Cpad * 2 + 2 * Cpad * 4),
        )(x_bf, w_bf, scale[None, :], shift[None, :])

    # Drop M/Cout padding; stay NHWC bf16 (no per-layer transposes).
    return y[:M, :Cout].reshape(N, OH, OW, Cout)


# ---------------------------------------------------------------------------
# Final 4x4 conv (Cout=1, 1x1 map) + exact sigmoid: trivially small -> XLA.
# ---------------------------------------------------------------------------
def _final_head(h, w5):
    # h: (N, 4, 4, C) bf16, w5: (1, C, 4, 4) f32.
    N = h.shape[0]
    wv = jnp.transpose(w5, (2, 3, 1, 0)).reshape(-1).astype(jnp.float32)  # (16*C,)
    hv = h.reshape(N, -1).astype(jnp.float32)                             # (N, 16*C)
    logits = hv @ wv                                                      # (N,)
    return jax.nn.sigmoid(logits)


# ---------------------------------------------------------------------------
# Discriminator forward (PyTorch-compatible NCHW input, (N,) output)
# ---------------------------------------------------------------------------
def discriminator_forward(x_nchw, params):
    w1, w2, w3, w4, w5 = params
    # Single boundary NCHW -> NHWC transpose; bf16 before any patch extraction
    # so every materialized patches matrix is already half-width in HBM.
    h = jnp.transpose(x_nchw, (0, 2, 3, 1)).astype(jnp.bfloat16)
    h = _conv_layer(h, w1, stride=2, pad=1, use_bn=False)
    h = _conv_layer(h, w2, stride=2, pad=1, use_bn=True)
    h = _conv_layer(h, w3, stride=2, pad=1, use_bn=True)
    h = _conv_layer(h, w4, stride=2, pad=1, use_bn=True)
    # h: (N, 4, 4, ndf*8) -> Conv(ndf*8 -> 1, 4, 1, 0) + Sigmoid -> view(-1,1).squeeze(1)
    return _final_head(h, w5)


def init_params(key, nc, ndf):
    shapes = [
        (ndf, nc, 4, 4),
        (ndf * 2, ndf, 4, 4),
        (ndf * 4, ndf * 2, 4, 4),
        (ndf * 8, ndf * 4, 4, 4),
        (1, ndf * 8, 4, 4),
    ]
    keys = jax.random.split(key, len(shapes))
    # Deterministic synthetic init (DCGAN-style N(0, 0.02)).
    return [0.02 * jax.random.normal(k, s, jnp.float32) for k, s in zip(keys, shapes)]


if __name__ == "__main__":
    key = jax.random.PRNGKey(0)
    k_x, k_w = jax.random.split(key)

    # The 5-layer DCGAN discriminator needs 64x64 input so the final 4x4
    # (stride 1, pad 0) conv produces a 1x1 map.  Keep N / ndf small.
    N, nc, ndf = 2, 3, 8
    x = jax.random.normal(k_x, (N, nc, 64, 64), jnp.float32)
    params = init_params(k_w, nc, ndf)

    out = jax.jit(discriminator_forward)(x, params)
    out = jax.block_until_ready(out)

    assert out.shape == (N,), out.shape
    assert bool(jnp.all(jnp.isfinite(out)))
    # Exact sigmoid on the final head -> strict [0, 1] range.
    assert bool(jnp.all((out >= 0.0) & (out <= 1.0)))
    print("KERNEL_OK")
</pallas_src>

<mosaic_0001>
module attributes {stable_mosaic.version = 11 : i64} {
  func.func @_matmul_lrelu_kernel(%arg0: i32, %arg1: memref<1024x128xbf16, #tpu.memory_space<vmem>>, %arg2: memref<128x128xbf16, #tpu.memory_space<vmem>>, %arg3: memref<1024x128xbf16, #tpu.memory_space<vmem>>) attributes {dimension_semantics = [#tpu.dimension_semantics<parallel>], iteration_bounds = array<i64: 2>, scalar_prefetch = 0 : i64, scratch_operands = 0 : i64, tpu.core_type = #tpu.core_type<tc>, window_params = [{transform_indices = @transform_0, window_bounds = array<i64: 1024, 128>}, {pipeline_mode = #tpu.pipeline_mode<synchronous>, transform_indices = @transform_1, window_bounds = array<i64: 128, 128>}, {transform_indices = @transform_2, window_bounds = array<i64: 1024, 128>}]} {
    %c0 = arith.constant 0 : index
    %c0_0 = arith.constant 0 : index
    %0 = vector.load %arg1[%c0, %c0_0] : memref<1024x128xbf16, #tpu.memory_space<vmem>>, vector<1024x128xbf16>
    %c0_1 = arith.constant 0 : index
    %c0_2 = arith.constant 0 : index
    %1 = vector.load %arg2[%c0_1, %c0_2] : memref<128x128xbf16, #tpu.memory_space<vmem>>, vector<128x128xbf16>
    %cst = arith.constant dense<0.000000e+00> : vector<1024x128xf32>
    %2 = tpu.matmul %0, %1, %cst {dimension_numbers = #tpu.dot_dimension_numbers<[1], [0], [0], [1], [0, 0, 1, 1], [], []>} : vector<1024x128xbf16>, vector<128x128xbf16>, vector<1024x128xf32> -> vector<1024x128xf32>
    %cst_3 = arith.constant 0.000000e+00 : f32
    %3 = vector.broadcast %cst_3 : f32 to vector<1024x128xf32>
    %4 = arith.cmpf ogt, %2, %3 : vector<1024x128xf32>
    %cst_4 = arith.constant 2.000000e-01 : f32
    %5 = vector.broadcast %cst_4 : f32 to vector<1024x128xf32>
    %6 = arith.mulf %5, %2 : vector<1024x128xf32>
    %7 = arith.select %4, %2, %6 : vector<1024x128xi1>, vector<1024x128xf32>
    %8 = arith.truncf %7 : vector<1024x128xf32> to vector<1024x128xbf16>
    %c0_5 = arith.constant 0 : index
    %c0_6 = arith.constant 0 : index
    %9 = vector.load %arg3[%c0_5, %c0_6] : memref<1024x128xbf16, #tpu.memory_space<vmem>>, vector<1024x128xbf16>
    tpu.vector_store %arg3[%c0_5, %c0_6], %8 {strides = array<i32>} : memref<1024x128xbf16, #tpu.memory_space<vmem>>, vector<1024x128xbf16>,
    return
  }
  func.func @transform_0(%arg0: i32) -> (i32, i32) {
    %c0_i32 = arith.constant 0 : i32
    %c0_i32_0 = arith.constant 0 : i32
    return %arg0, %c0_i32 : i32, i32
  }
  func.func @transform_1(%arg0: i32) -> (i32, i32) {
    %c0_i32 = arith.constant 0 : i32
    %c0_i32_0 = arith.constant 0 : i32
    %c0_i32_1 = arith.constant 0 : i32
    return %c0_i32, %c0_i32_0 : i32, i32
  }
  func.func @transform_2(%arg0: i32) -> (i32, i32) {
    %c0_i32 = arith.constant 0 : i32
    %c0_i32_0 = arith.constant 0 : i32
    return %arg0, %c0_i32 : i32, i32
  }
}

module attributes {stable_mosaic.version = 11 : i64} {
  func.func @_matmul_stats_kernel(%arg0: i32, %arg1: memref<256x128xbf16, #tpu.memory_space<vmem>>, %arg2: memref<128x128xbf16, #tpu.memory_space<vmem>>, %arg3: memref<1x2x128xf32, #tpu.memory_space<vmem>>) attributes {dimension_semantics = [#tpu.dimension_semantics<parallel>], iteration_bounds = array<i64: 2>, scalar_prefetch = 0 : i64, scratch_operands = 0 : i64, tpu.core_type = #tpu.core_type<tc>, window_params = [{transform_indices = @transform_0, window_bounds = array<i64: 256, 128>}, {pipeline_mode = #tpu.pipeline_mode<synchronous>, transform_indices = @transform_1, window_bounds = array<i64: 128, 128>}, {transform_indices = @transform_2, window_bounds = array<i64: 1, 2, 128>}]} {
    %c0 = arith.constant 0 : index
    %c0_0 = arith.constant 0 : index
    %0 = vector.load %arg1[%c0, %c0_0] : memref<256x128xbf16, #tpu.memory_space<vmem>>, vector<256x128xbf16>
    %c0_1 = arith.constant 0 : index
    %c0_2 = arith.constant 0 : index
    %1 = vector.load %arg2[%c0_1, %c0_2] : memref<128x128xbf16, #tpu.memory_space<vmem>>, vector<128x128xbf16>
    %cst = arith.constant dense<0.000000e+00> : vector<256x128xf32>
    %2 = tpu.matmul %0, %1, %cst {dimension_numbers = #tpu.dot_dimension_numbers<[1], [0], [0], [1], [0, 0, 1, 1], [], []>} : vector<256x128xbf16>, vector<128x128xbf16>, vector<256x128xf32> -> vector<256x128xf32>
    %cst_3 = arith.constant dense<0.000000e+00> : vector<128xf32>
    %3 = vector.multi_reduction <add>, %2, %cst_3 [0] : vector<256x128xf32> to vector<128xf32>
    %4 = vector.shape_cast %3 : vector<128xf32> to vector<1x128xf32>
    %5 = arith.mulf %2, %2 : vector<256x128xf32>
    %cst_4 = arith.constant dense<0.000000e+00> : vector<128xf32>
    %6 = vector.multi_reduction <add>, %5, %cst_4 [0] : vector<256x128xf32> to vector<128xf32>
    %7 = vector.shape_cast %6 : vector<128xf32> to vector<1x128xf32>
    %8 = tpu.concatenate %4, %7 in 0 : vector<1x128xf32>, vector<1x128xf32> -> vector<2x128xf32>
    %9 = vector.shape_cast %8 : vector<2x128xf32> to vector<1x2x128xf32>
    %c0_5 = arith.constant 0 : index
    %c0_6 = arith.constant 0 : index
    %c0_7 = arith.constant 0 : index
    %10 = vector.load %arg3[%c0_5, %c0_6, %c0_7] : memref<1x2x128xf32, #tpu.memory_space<vmem>>, vector<1x2x128xf32>
    tpu.vector_store %arg3[%c0_5, %c0_6, %c0_7], %9 {strides = array<i32>} : memref<1x2x128xf32, #tpu.memory_space<vmem>>, vector<1x2x128xf32>,
    return
  }
  func.func @transform_0(%arg0: i32) -> (i32, i32) {
    %c0_i32 = arith.constant 0 : i32
    %c0_i32_0 = arith.constant 0 : i32
    return %arg0, %c0_i32 : i32, i32
  }
  func.func @transform_1(%arg0: i32) -> (i32, i32) {
    %c0_i32 = arith.constant 0 : i32
    %c0_i32_0 = arith.constant 0 : i32
    %c0_i32_1 = arith.constant 0 : i32
    return %c0_i32, %c0_i32_0 : i32, i32
  }
  func.func @transform_2(%arg0: i32) -> (i32, i32, i32) {
    %c0_i32 = arith.constant 0 : i32
    %c0_i32_0 = arith.constant 0 : i32
    %c0_i32_1 = arith.constant 0 : i32
    return %arg0, %c0_i32, %c0_i32_0 : i32, i32, i32
  }
}

module attributes {stable_mosaic.version = 11 : i64} {
  func.func @_matmul_bn_lrelu_kernel(%arg0: i32, %arg1: memref<256x128xbf16, #tpu.memory_space<vmem>>, %arg2: memref<128x128xbf16, #tpu.memory_space<vmem>>, %arg3: memref<1x128xf32, #tpu.memory_space<vmem>>, %arg4: memref<1x128xf32, #tpu.memory_space<vmem>>, %arg5: memref<256x128xbf16, #tpu.memory_space<vmem>>) attributes {dimension_semantics = [#tpu.dimension_semantics<parallel>], iteration_bounds = array<i64: 2>, scalar_prefetch = 0 : i64, scratch_operands = 0 : i64, tpu.core_type = #tpu.core_type<tc>, window_params = [{transform_indices = @transform_0, window_bounds = array<i64: 256, 128>}, {pipeline_mode = #tpu.pipeline_mode<synchronous>, transform_indices = @transform_1, window_bounds = array<i64: 128, 128>}, {pipeline_mode = #tpu.pipeline_mode<synchronous>, transform_indices = @transform_2, window_bounds = array<i64: 1, 128>}, {pipeline_mode = #tpu.pipeline_mode<synchronous>, transform_indices = @transform_3, window_bounds = array<i64: 1, 128>}, {transform_indices = @transform_4, window_bounds = array<i64: 256, 128>}]} {
    %c0 = arith.constant 0 : index
    %c0_0 = arith.constant 0 : index
    %0 = vector.load %arg1[%c0, %c0_0] : memref<256x128xbf16, #tpu.memory_space<vmem>>, vector<256x128xbf16>
    %c0_1 = arith.constant 0 : index
    %c0_2 = arith.constant 0 : index
    %1 = vector.load %arg2[%c0_1, %c0_2] : memref<128x128xbf16, #tpu.memory_space<vmem>>, vector<128x128xbf16>
    %cst = arith.constant dense<0.000000e+00> : vector<256x128xf32>
    %2 = tpu.matmul %0, %1, %cst {dimension_numbers = #tpu.dot_dimension_numbers<[1], [0], [0], [1], [0, 0, 1, 1], [], []>} : vector<256x128xbf16>, vector<128x128xbf16>, vector<256x128xf32> -> vector<256x128xf32>
    %c0_3 = arith.constant 0 : index
    %c0_4 = arith.constant 0 : index
    %3 = vector.load %arg3[%c0_3, %c0_4] : memref<1x128xf32, #tpu.memory_space<vmem>>, vector<1x128xf32>
    %4 = vector.broadcast %3 : vector<1x128xf32> to vector<256x128xf32>
    %5 = arith.mulf %2, %4 : vector<256x128xf32>
    %c0_5 = arith.constant 0 : index
    %c0_6 = arith.constant 0 : index
    %6 = vector.load %arg4[%c0_5, %c0_6] : memref<1x128xf32, #tpu.memory_space<vmem>>, vector<1x128xf32>
    %7 = vector.broadcast %6 : vector<1x128xf32> to vector<256x128xf32>
    %8 = arith.addf %5, %7 : vector<256x128xf32>
    %cst_7 = arith.constant 0.000000e+00 : f32
    %9 = vector.broadcast %cst_7 : f32 to vector<256x128xf32>
    %10 = arith.cmpf ogt, %8, %9 : vector<256x128xf32>
    %cst_8 = arith.constant 2.000000e-01 : f32
    %11 = vector.broadcast %cst_8 : f32 to vector<256x128xf32>
    %12 = arith.mulf %11, %8 : vector<256x128xf32>
    %13 = arith.select %10, %8, %12 : vector<256x128xi1>, vector<256x128xf32>
    %14 = arith.truncf %13 : vector<256x128xf32> to vector<256x128xbf16>
    %c0_9 = arith.constant 0 : index
    %c0_10 = arith.constant 0 : index
    %15 = vector.load %arg5[%c0_9, %c0_10] : memref<256x128xbf16, #tpu.memory_space<vmem>>, vector<256x128xbf16>
    tpu.vector_store %arg5[%c0_9, %c0_10], %14 {strides = array<i32>} : memref<256x128xbf16, #tpu.memory_space<vmem>>, vector<256x128xbf16>,
    return
  }
  func.func @transform_0(%arg0: i32) -> (i32, i32) {
    %c0_i32 = arith.constant 0 : i32
    %c0_i32_0 = arith.constant 0 : i32
    return %arg0, %c0_i32 : i32, i32
  }
  func.func @transform_1(%arg0: i32) -> (i32, i32) {
    %c0_i32 = arith.constant 0 : i32
    %c0_i32_0 = arith.constant 0 : i32
    %c0_i32_1 = arith.constant 0 : i32
    return %c0_i32, %c0_i32_0 : i32, i32
  }
  func.func @transform_2(%arg0: i32) -> (i32, i32) {
    %c0_i32 = arith.constant 0 : i32
    %c0_i32_0 = arith.constant 0 : i32
    %c0_i32_1 = arith.constant 0 : i32
    return %c0_i32, %c0_i32_0 : i32, i32
  }
  func.func @transform_3(%arg0: i32) -> (i32, i32) {
    %c0_i32 = arith.constant 0 : i32
    %c0_i32_0 = arith.constant 0 : i32
    %c0_i32_1 = arith.constant 0 : i32
    return %c0_i32, %c0_i32_0 : i32, i32
  }
  func.func @transform_4(%arg0: i32) -> (i32, i32) {
    %c0_i32 = arith.constant 0 : i32
    %c0_i32_0 = arith.constant 0 : i32
    return %arg0, %c0_i32 : i32, i32
  }
}

module attributes {stable_mosaic.version = 11 : i64} {
  func.func @_matmul_stats_kernel(%arg0: i32, %arg1: memref<64x256xbf16, #tpu.memory_space<vmem>>, %arg2: memref<256x128xbf16, #tpu.memory_space<vmem>>, %arg3: memref<1x2x128xf32, #tpu.memory_space<vmem>>) attributes {dimension_semantics = [#tpu.dimension_semantics<parallel>], iteration_bounds = array<i64: 2>, scalar_prefetch = 0 : i64, scratch_operands = 0 : i64, tpu.core_type = #tpu.core_type<tc>, window_params = [{transform_indices = @transform_0, window_bounds = array<i64: 64, 256>}, {pipeline_mode = #tpu.pipeline_mode<synchronous>, transform_indices = @transform_1, window_bounds = array<i64: 256, 128>}, {transform_indices = @transform_2, window_bounds = array<i64: 1, 2, 128>}]} {
    %c0 = arith.constant 0 : index
    %c0_0 = arith.constant 0 : index
    %0 = vector.load %arg1[%c0, %c0_0] : memref<64x256xbf16, #tpu.memory_space<vmem>>, vector<64x256xbf16>
    %c0_1 = arith.constant 0 : index
    %c0_2 = arith.constant 0 : index
    %1 = vector.load %arg2[%c0_1, %c0_2] : memref<256x128xbf16, #tpu.memory_space<vmem>>, vector<256x128xbf16>
    %cst = arith.constant dense<0.000000e+00> : vector<64x128xf32>
    %2 = tpu.matmul %0, %1, %cst {dimension_numbers = #tpu.dot_dimension_numbers<[1], [0], [0], [1], [0, 0, 1, 1], [], []>} : vector<64x256xbf16>, vector<256x128xbf16>, vector<64x128xf32> -> vector<64x128xf32>
    %cst_3 = arith.constant dense<0.000000e+00> : vector<128xf32>
    %3 = vector.multi_reduction <add>, %2, %cst_3 [0] : vector<64x128xf32> to vector<128xf32>
    %4 = vector.shape_cast %3 : vector<128xf32> to vector<1x128xf32>
    %5 = arith.mulf %2, %2 : vector<64x128xf32>
    %cst_4 = arith.constant dense<0.000000e+00> : vector<128xf32>
    %6 = vector.multi_reduction <add>, %5, %cst_4 [0] : vector<64x128xf32> to vector<128xf32>
    %7 = vector.shape_cast %6 : vector<128xf32> to vector<1x128xf32>
    %8 = tpu.concatenate %4, %7 in 0 : vector<1x128xf32>, vector<1x128xf32> -> vector<2x128xf32>
    %9 = vector.shape_cast %8 : vector<2x128xf32> to vector<1x2x128xf32>
    %c0_5 = arith.constant 0 : index
    %c0_6 = arith.constant 0 : index
    %c0_7 = arith.constant 0 : index
    %10 = vector.load %arg3[%c0_5, %c0_6, %c0_7] : memref<1x2x128xf32, #tpu.memory_space<vmem>>, vector<1x2x128xf32>
    tpu.vector_store %arg3[%c0_5, %c0_6, %c0_7], %9 {strides = array<i32>} : memref<1x2x128xf32, #tpu.memory_space<vmem>>, vector<1x2x128xf32>,
    return
  }
  func.func @transform_0(%arg0: i32) -> (i32, i32) {
    %c0_i32 = arith.constant 0 : i32
    %c0_i32_0 = arith.constant 0 : i32
    return %arg0, %c0_i32 : i32, i32
  }
  func.func @transform_1(%arg0: i32) -> (i32, i32) {
    %c0_i32 = arith.constant 0 : i32
    %c0_i32_0 = arith.constant 0 : i32
    %c0_i32_1 = arith.constant 0 : i32
    return %c0_i32, %c0_i32_0 : i32, i32
  }
  func.func @transform_2(%arg0: i32) -> (i32, i32, i32) {
    %c0_i32 = arith.constant 0 : i32
    %c0_i32_0 = arith.constant 0 : i32
    %c0_i32_1 = arith.constant 0 : i32
    return %arg0, %c0_i32, %c0_i32_0 : i32, i32, i32
  }
}

module attributes {stable_mosaic.version = 11 : i64} {
  func.func @_matmul_bn_lrelu_kernel(%arg0: i32, %arg1: memref<64x256xbf16, #tpu.memory_space<vmem>>, %arg2: memref<256x128xbf16, #tpu.memory_space<vmem>>, %arg3: memref<1x128xf32, #tpu.memory_space<vmem>>, %arg4: memref<1x128xf32, #tpu.memory_space<vmem>>, %arg5: memref<64x128xbf16, #tpu.memory_space<vmem>>) attributes {dimension_semantics = [#tpu.dimension_semantics<parallel>], iteration_bounds = array<i64: 2>, scalar_prefetch = 0 : i64, scratch_operands = 0 : i64, tpu.core_type = #tpu.core_type<tc>, window_params = [{transform_indices = @transform_0, window_bounds = array<i64: 64, 256>}, {pipeline_mode = #tpu.pipeline_mode<synchronous>, transform_indices = @transform_1, window_bounds = array<i64: 256, 128>}, {pipeline_mode = #tpu.pipeline_mode<synchronous>, transform_indices = @transform_2, window_bounds = array<i64: 1, 128>}, {pipeline_mode = #tpu.pipeline_mode<synchronous>, transform_indices = @transform_3, window_bounds = array<i64: 1, 128>}, {transform_indices = @transform_4, window_bounds = array<i64: 64, 128>}]} {
    %c0 = arith.constant 0 : index
    %c0_0 = arith.constant 0 : index
    %0 = vector.load %arg1[%c0, %c0_0] : memref<64x256xbf16, #tpu.memory_space<vmem>>, vector<64x256xbf16>
    %c0_1 = arith.constant 0 : index
    %c0_2 = arith.constant 0 : index
    %1 = vector.load %arg2[%c0_1, %c0_2] : memref<256x128xbf16, #tpu.memory_space<vmem>>, vector<256x128xbf16>
    %cst = arith.constant dense<0.000000e+00> : vector<64x128xf32>
    %2 = tpu.matmul %0, %1, %cst {dimension_numbers = #tpu.dot_dimension_numbers<[1], [0], [0], [1], [0, 0, 1, 1], [], []>} : vector<64x256xbf16>, vector<256x128xbf16>, vector<64x128xf32> -> vector<64x128xf32>
    %c0_3 = arith.constant 0 : index
    %c0_4 = arith.constant 0 : index
    %3 = vector.load %arg3[%c0_3, %c0_4] : memref<1x128xf32, #tpu.memory_space<vmem>>, vector<1x128xf32>
    %4 = vector.broadcast %3 : vector<1x128xf32> to vector<64x128xf32>
    %5 = arith.mulf %2, %4 : vector<64x128xf32>
    %c0_5 = arith.constant 0 : index
    %c0_6 = arith.constant 0 : index
    %6 = vector.load %arg4[%c0_5, %c0_6] : memref<1x128xf32, #tpu.memory_space<vmem>>, vector<1x128xf32>
    %7 = vector.broadcast %6 : vector<1x128xf32> to vector<64x128xf32>
    %8 = arith.addf %5, %7 : vector<64x128xf32>
    %cst_7 = arith.constant 0.000000e+00 : f32
    %9 = vector.broadcast %cst_7 : f32 to vector<64x128xf32>
    %10 = arith.cmpf ogt, %8, %9 : vector<64x128xf32>
    %cst_8 = arith.constant 2.000000e-01 : f32
    %11 = vector.broadcast %cst_8 : f32 to vector<64x128xf32>
    %12 = arith.mulf %11, %8 : vector<64x128xf32>
    %13 = arith.select %10, %8, %12 : vector<64x128xi1>, vector<64x128xf32>
    %14 = arith.truncf %13 : vector<64x128xf32> to vector<64x128xbf16>
    %c0_9 = arith.constant 0 : index
    %c0_10 = arith.constant 0 : index
    %15 = vector.load %arg5[%c0_9, %c0_10] : memref<64x128xbf16, #tpu.memory_space<vmem>>, vector<64x128xbf16>
    tpu.vector_store %arg5[%c0_9, %c0_10], %14 {strides = array<i32>} : memref<64x128xbf16, #tpu.memory_space<vmem>>, vector<64x128xbf16>,
    return
  }
  func.func @transform_0(%arg0: i32) -> (i32, i32) {
    %c0_i32 = arith.constant 0 : i32
    %c0_i32_0 = arith.constant 0 : i32
    return %arg0, %c0_i32 : i32, i32
  }
  func.func @transform_1(%arg0: i32) -> (i32, i32) {
    %c0_i32 = arith.constant 0 : i32
    %c0_i32_0 = arith.constant 0 : i32
    %c0_i32_1 = arith.constant 0 : i32
    return %c0_i32, %c0_i32_0 : i32, i32
  }
  func.func @transform_2(%arg0: i32) -> (i32, i32) {
    %c0_i32 = arith.constant 0 : i32
    %c0_i32_0 = arith.constant 0 : i32
    %c0_i32_1 = arith.constant 0 : i32
    return %c0_i32, %c0_i32_0 : i32, i32
  }
  func.func @transform_3(%arg0: i32) -> (i32, i32) {
    %c0_i32 = arith.constant 0 : i32
    %c0_i32_0 = arith.constant 0 : i32
    %c0_i32_1 = arith.constant 0 : i32
    return %c0_i32, %c0_i32_0 : i32, i32
  }
  func.func @transform_4(%arg0: i32) -> (i32, i32) {
    %c0_i32 = arith.constant 0 : i32
    %c0_i32_0 = arith.constant 0 : i32
    return %arg0, %c0_i32 : i32, i32
  }
}

module attributes {stable_mosaic.version = 11 : i64} {
  func.func @_matmul_stats_kernel(%arg0: i32, %arg1: memref<16x512xbf16, #tpu.memory_space<vmem>>, %arg2: memref<512x128xbf16, #tpu.memory_space<vmem>>, %arg3: memref<1x2x128xf32, #tpu.memory_space<vmem>>) attributes {dimension_semantics = [#tpu.dimension_semantics<parallel>], iteration_bounds = array<i64: 2>, scalar_prefetch = 0 : i64, scratch_operands = 0 : i64, tpu.core_type = #tpu.core_type<tc>, window_params = [{transform_indices = @transform_0, window_bounds = array<i64: 16, 512>}, {pipeline_mode = #tpu.pipeline_mode<synchronous>, transform_indices = @transform_1, window_bounds = array<i64: 512, 128>}, {transform_indices = @transform_2, window_bounds = array<i64: 1, 2, 128>}]} {
    %c0 = arith.constant 0 : index
    %c0_0 = arith.constant 0 : index
    %0 = vector.load %arg1[%c0, %c0_0] : memref<16x512xbf16, #tpu.memory_space<vmem>>, vector<16x512xbf16>
    %c0_1 = arith.constant 0 : index
    %c0_2 = arith.constant 0 : index
    %1 = vector.load %arg2[%c0_1, %c0_2] : memref<512x128xbf16, #tpu.memory_space<vmem>>, vector<512x128xbf16>
    %cst = arith.constant dense<0.000000e+00> : vector<16x128xf32>
    %2 = tpu.matmul %0, %1, %cst {dimension_numbers = #tpu.dot_dimension_numbers<[1], [0], [0], [1], [0, 0, 1, 1], [], []>} : vector<16x512xbf16>, vector<512x128xbf16>, vector<16x128xf32> -> vector<16x128xf32>
    %cst_3 = arith.constant dense<0.000000e+00> : vector<128xf32>
    %3 = vector.multi_reduction <add>, %2, %cst_3 [0] : vector<16x128xf32> to vector<128xf32>
    %4 = vector.shape_cast %3 : vector<128xf32> to vector<1x128xf32>
    %5 = arith.mulf %2, %2 : vector<16x128xf32>
    %cst_4 = arith.constant dense<0.000000e+00> : vector<128xf32>
    %6 = vector.multi_reduction <add>, %5, %cst_4 [0] : vector<16x128xf32> to vector<128xf32>
    %7 = vector.shape_cast %6 : vector<128xf32> to vector<1x128xf32>
    %8 = tpu.concatenate %4, %7 in 0 : vector<1x128xf32>, vector<1x128xf32> -> vector<2x128xf32>
    %9 = vector.shape_cast %8 : vector<2x128xf32> to vector<1x2x128xf32>
    %c0_5 = arith.constant 0 : index
    %c0_6 = arith.constant 0 : index
    %c0_7 = arith.constant 0 : index
    %10 = vector.load %arg3[%c0_5, %c0_6, %c0_7] : memref<1x2x128xf32, #tpu.memory_space<vmem>>, vector<1x2x128xf32>
    tpu.vector_store %arg3[%c0_5, %c0_6, %c0_7], %9 {strides = array<i32>} : memref<1x2x128xf32, #tpu.memory_space<vmem>>, vector<1x2x128xf32>,
    return
  }
  func.func @transform_0(%arg0: i32) -> (i32, i32) {
    %c0_i32 = arith.constant 0 : i32
    %c0_i32_0 = arith.constant 0 : i32
    return %arg0, %c0_i32 : i32, i32
  }
  func.func @transform_1(%arg0: i32) -> (i32, i32) {
    %c0_i32 = arith.constant 0 : i32
    %c0_i32_0 = arith.constant 0 : i32
    %c0_i32_1 = arith.constant 0 : i32
    return %c0_i32, %c0_i32_0 : i32, i32
  }
  func.func @transform_2(%arg0: i32) -> (i32, i32, i32) {
    %c0_i32 = arith.constant 0 : i32
    %c0_i32_0 = arith.constant 0 : i32
    %c0_i32_1 = arith.constant 0 : i32
    return %arg0, %c0_i32, %c0_i32_0 : i32, i32, i32
  }
}

module attributes {stable_mosaic.version = 11 : i64} {
  func.func @_matmul_bn_lrelu_kernel(%arg0: i32, %arg1: memref<16x512xbf16, #tpu.memory_space<vmem>>, %arg2: memref<512x128xbf16, #tpu.memory_space<vmem>>, %arg3: memref<1x128xf32, #tpu.memory_space<vmem>>, %arg4: memref<1x128xf32, #tpu.memory_space<vmem>>, %arg5: memref<16x128xbf16, #tpu.memory_space<vmem>>) attributes {dimension_semantics = [#tpu.dimension_semantics<parallel>], iteration_bounds = array<i64: 2>, scalar_prefetch = 0 : i64, scratch_operands = 0 : i64, tpu.core_type = #tpu.core_type<tc>, window_params = [{transform_indices = @transform_0, window_bounds = array<i64: 16, 512>}, {pipeline_mode = #tpu.pipeline_mode<synchronous>, transform_indices = @transform_1, window_bounds = array<i64: 512, 128>}, {pipeline_mode = #tpu.pipeline_mode<synchronous>, transform_indices = @transform_2, window_bounds = array<i64: 1, 128>}, {pipeline_mode = #tpu.pipeline_mode<synchronous>, transform_indices = @transform_3, window_bounds = array<i64: 1, 128>}, {transform_indices = @transform_4, window_bounds = array<i64: 16, 128>}]} {
    %c0 = arith.constant 0 : index
    %c0_0 = arith.constant 0 : index
    %0 = vector.load %arg1[%c0, %c0_0] : memref<16x512xbf16, #tpu.memory_space<vmem>>, vector<16x512xbf16>
    %c0_1 = arith.constant 0 : index
    %c0_2 = arith.constant 0 : index
    %1 = vector.load %arg2[%c0_1, %c0_2] : memref<512x128xbf16, #tpu.memory_space<vmem>>, vector<512x128xbf16>
    %cst = arith.constant dense<0.000000e+00> : vector<16x128xf32>
    %2 = tpu.matmul %0, %1, %cst {dimension_numbers = #tpu.dot_dimension_numbers<[1], [0], [0], [1], [0, 0, 1, 1], [], []>} : vector<16x512xbf16>, vector<512x128xbf16>, vector<16x128xf32> -> vector<16x128xf32>
    %c0_3 = arith.constant 0 : index
    %c0_4 = arith.constant 0 : index
    %3 = vector.load %arg3[%c0_3, %c0_4] : memref<1x128xf32, #tpu.memory_space<vmem>>, vector<1x128xf32>
    %4 = vector.broadcast %3 : vector<1x128xf32> to vector<16x128xf32>
    %5 = arith.mulf %2, %4 : vector<16x128xf32>
    %c0_5 = arith.constant 0 : index
    %c0_6 = arith.constant 0 : index
    %6 = vector.load %arg4[%c0_5, %c0_6] : memref<1x128xf32, #tpu.memory_space<vmem>>, vector<1x128xf32>
    %7 = vector.broadcast %6 : vector<1x128xf32> to vector<16x128xf32>
    %8 = arith.addf %5, %7 : vector<16x128xf32>
    %cst_7 = arith.constant 0.000000e+00 : f32
    %9 = vector.broadcast %cst_7 : f32 to vector<16x128xf32>
    %10 = arith.cmpf ogt, %8, %9 : vector<16x128xf32>
    %cst_8 = arith.constant 2.000000e-01 : f32
    %11 = vector.broadcast %cst_8 : f32 to vector<16x128xf32>
    %12 = arith.mulf %11, %8 : vector<16x128xf32>
    %13 = arith.select %10, %8, %12 : vector<16x128xi1>, vector<16x128xf32>
    %14 = arith.truncf %13 : vector<16x128xf32> to vector<16x128xbf16>
    %c0_9 = arith.constant 0 : index
    %c0_10 = arith.constant 0 : index
    %15 = vector.load %arg5[%c0_9, %c0_10] : memref<16x128xbf16, #tpu.memory_space<vmem>>, vector<16x128xbf16>
    tpu.vector_store %arg5[%c0_9, %c0_10], %14 {strides = array<i32>} : memref<16x128xbf16, #tpu.memory_space<vmem>>, vector<16x128xbf16>,
    return
  }
  func.func @transform_0(%arg0: i32) -> (i32, i32) {
    %c0_i32 = arith.constant 0 : i32
    %c0_i32_0 = arith.constant 0 : i32
    return %arg0, %c0_i32 : i32, i32
  }
  func.func @transform_1(%arg0: i32) -> (i32, i32) {
    %c0_i32 = arith.constant 0 : i32
    %c0_i32_0 = arith.constant 0 : i32
    %c0_i32_1 = arith.constant 0 : i32
    return %c0_i32, %c0_i32_0 : i32, i32
  }
  func.func @transform_2(%arg0: i32) -> (i32, i32) {
    %c0_i32 = arith.constant 0 : i32
    %c0_i32_0 = arith.constant 0 : i32
    %c0_i32_1 = arith.constant 0 : i32
    return %c0_i32, %c0_i32_0 : i32, i32
  }
  func.func @transform_3(%arg0: i32) -> (i32, i32) {
    %c0_i32 = arith.constant 0 : i32
    %c0_i32_0 = arith.constant 0 : i32
    %c0_i32_1 = arith.constant 0 : i32
    return %c0_i32, %c0_i32_0 : i32, i32
  }
  func.func @transform_4(%arg0: i32) -> (i32, i32) {
    %c0_i32 = arith.constant 0 : i32
    %c0_i32_0 = arith.constant 0 : i32
    return %arg0, %c0_i32 : i32, i32
  }
}

</mosaic_0001>

<llo_original>
// kernel: discriminator_forward.7
$region0: #{discriminator_forward.7}
  #allocation0 [shape = 'u32[]', space=smem, size = 0x4, offset = 0x4, fixed_abs, tag = 'smem constant byte address 0x4 - core index']
  #allocation1 [shape = 'u32[144,128]{1,0:T(1,128)}', space=vmem, size = 0x12000, scoped, tag = 'internal scratch']
  %s0 = inlined_call_operand.vmem [shape: bf16[2048,128], index: 0, kind: input, shape index: {}]
  %s1 = inlined_call_operand.vmem [shape: bf16[128,128], index: 1, kind: input, shape index: {}]
  %s2 = inlined_call_operand.vmem [shape: bf16[2048,128], index: 2, kind: output, shape index: {}]
  %s3 = sld [smem:[#allocation0]]
  $region41: #{discriminator_forward.7} parent=0
    _
  %s5 = ssub.s32 1, %s3
  %s6 = scalar_select 0, %s5, %s3
  loop: start=0, step=1, limit=4
  $region2: #{discriminator_forward.7} parent=0 // loop_pre_header
    _
  $region3: #{discriminator_forward.7} parent=0 // loop_header
    %s8 = sphi 0, %s12
    %p9 = scmp.ge.s32.totalorder %s8, 4
    %s18 = sphi 0, %s20
    %s21 = sphi 0, %s18
    %s22 = sphi 0, %s21
    %s38 = sphi 0, %s22
    %s42 = sphi 0, %s42
    %s44 = sphi 0, %s42
    %s45 = sphi 0, %s44
    %s59 = sphi 0, %s45
    %s65 = sphi 0, %s67
    %s68 = sphi 0, %s65
    %s69 = sphi 0, %s68
    %s85 = sphi 0, %s69
  $region4: #{discriminator_forward.7} parent=0 // loop_header_branch
    %11 = sbr.rel (%p9) target = $region8
  $region5: #{discriminator_forward.7} parent=0 // loop_body
    %s13 = ssub.s32 %s8, 1
    %s14 = ssub.s32 %s8, 2
    %s15 = sadd.s32 %s8, 1
    %s16 = ssub.s32 %s8, %s15
    %p17 = scmp.eq.s32.totalorder %s16, 0
    %s19 = sadd.s32 %s18, 1
    %s20 = scalar_select %p17, %s18, %s19
    %p23 = pneg %p17
    %p24 = scmp.eq.s32.totalorder %s8, 1
    %p25 = por %p23, %p24
    %p26 = scmp.ne.s32.totalorder %s18, %s21
    %p27 = scmp.eq.s32.totalorder %s8, 0
    %p28 = por %p26, %p27
    %p29 = scmp.ne.s32.totalorder %s18, %s21
    %p30 = scmp.eq.s32.totalorder %s13, 1
    %p31 = por %p29, %p30
    %p32 = scmp.ne.s32.totalorder %s21, %s22
    %p33 = scmp.eq.s32.totalorder %s13, 0
    %p34 = por %p32, %p33
    %p35 = scmp.ne.s32.totalorder %s21, %s22
    %p36 = scmp.eq.s32.totalorder %s14, 1
    %p37 = por %p35, %p36
    %p39 = scmp.ne.s32.totalorder %s22, %s38
    %p40 = scmp.eq.s32.totalorder %s14, 0
    %p41 = por %p39, %p40
    %s43 = sadd.s32 %s42, 1
    %p46 = scmp.eq.s32.totalorder %s8, 1
    %p47 = scmp.ne.s32.totalorder %s42, %s44
    %p48 = scmp.eq.s32.totalorder %s8, 0
    %p49 = por %p47, %p48
    %p50 = scmp.ne.s32.totalorder %s42, %s44
    %p51 = scmp.eq.s32.totalorder %s13, 1
    %p52 = por %p50, %p51
    %p53 = scmp.ne.s32.totalorder %s44, %s45
    %p54 = scmp.eq.s32.totalorder %s13, 0
    %p55 = por %p53, %p54
    %p56 = scmp.ne.s32.totalorder %s44, %s45
    %p57 = scmp.eq.s32.totalorder %s14, 1
    %p58 = por %p56, %p57
    %p60 = scmp.ne.s32.totalorder %s45, %s59
    %p61 = scmp.eq.s32.totalorder %s14, 0
    %p62 = por %p60, %p61
    %s63 = ssub.s32 %s8, %s15
    %p64 = scmp.eq.s32.totalorder %s63, 0
    %s66 = sadd.s32 %s65, 1
    %s67 = scalar_select %p64, %s65, %s66
    %p70 = pneg %p64
    %p71 = scmp.eq.s32.totalorder %s8, 1
    %p72 = por %p70, %p71
    %p73 = scmp.ne.s32.totalorder %s65, %s68
    %p74 = scmp.eq.s32.totalorder %s8, 0
    %p75 = por %p73, %p74
    %p76 = scmp.ne.s32.totalorder %s65, %s68
    %p77 = scmp.eq.s32.totalorder %s13, 1
    %p78 = por %p76, %p77
    %p79 = scmp.ne.s32.totalorder %s68, %s69
    %p80 = scmp.eq.s32.totalorder %s13, 0
    %p81 = por %p79, %p80
    %p82 = scmp.ne.s32.totalorder %s68, %s69
    %p83 = scmp.eq.s32.totalorder %s14, 1
    %p84 = por %p82, %p83
    %p86 = scmp.ne.s32.totalorder %s69, %s85
    %p87 = scmp.eq.s32.totalorder %s14, 0
    %p88 = por %p86, %p87
    %p89 = scmp.le.s32.totalorder 1, %s8
    %p90 = scmp.lt.s32.totalorder %s8, 3
    %p91 = pnand %p89, %p90
    %p92 = pneg %p91
    // Predicated region
    $region9: #{discriminator_forward.7} parent=5 // pred_check
      _
    $region10: #{discriminator_forward.7} parent=5 // pred_check_branch
      %94 = sbr.rel (%p91) target = $region12
    $region11: #{discriminator_forward.7} parent=5 // pred_region
      %s95 = ssub.s32 %s8, 1
      // Predicated region
      $region13: #{discriminator_forward.7} parent=11 // pred_check
        %p96 = pneg %p55
      $region14: #{discriminator_forward.7} parent=11 // pred_check_branch
        %98 = sbr.rel (%p96) target = $region16
      $region15: #{discriminator_forward.7} parent=11 // pred_region
        _
      $region16: #{discriminator_forward.7} parent=11 // pred_fallthru
        _
    $region12: #{discriminator_forward.7} parent=5 // pred_fallthru
      _
    %p99 = scmp.lt.s32.totalorder %s8, 2
    // Predicated region
    $region17: #{discriminator_forward.7} parent=5 // pred_check
      %p100 = pneg %p99
    $region18: #{discriminator_forward.7} parent=5 // pred_check_branch
      %102 = sbr.rel (%p100) target = $region20
    $region19: #{discriminator_forward.7} parent=5 // pred_region
      // Predicated region
      $region21: #{discriminator_forward.7} parent=19 // pred_check
        %p103 = pneg %p28
      $region22: #{discriminator_forward.7} parent=19 // pred_check_branch
        %105 = sbr.rel (%p103) target = $region24
      $region23: #{discriminator_forward.7} parent=19 // pred_region
        %s106 = smul.u32 128, %s8
        %p107 = scmp.lt.s32.totalorder %s106, 255
        %s108 = scalar_select %p107, %s106, 255
        %s109 = smul.addr %s108, 4
        %s110 = scalar_lea.vmem %s0, %s109
        %s111 = smul.u32 128, %s8
      $region24: #{discriminator_forward.7} parent=19 // pred_fallthru
        _
    $region20: #{discriminator_forward.7} parent=5 // pred_fallthru
      _
    %p112 = scmp.le.s32.totalorder 1, %s8
    %p113 = scmp.lt.s32.totalorder %s8, 3
    %p114 = pnand %p112, %p113
    %p115 = pneg %p114
    // Predicated region
    $region25: #{discriminator_forward.7} parent=5 // pred_check
      _
    $region26: #{discriminator_forward.7} parent=5 // pred_check_branch
      %117 = sbr.rel (%p114) target = $region28
    $region27: #{discriminator_forward.7} parent=5 // pred_region
      %s118 = ssub.s32 %s8, 1
      %s119 = smul.u32 128, %s13
      %p120 = scmp.lt.s32.totalorder %s119, 255
      %s121 = scalar_select %p120, %s119, 255
      %s122 = smul.addr %s121, 4
      %s123 = scalar_lea.vmem %s0, %s122
      %p124 = pneg %p34
      %p125 = pneg %p31
      %p126 = pneg %p55
      %p127 = pneg %p52
      %p128 = pneg %p81
      %p129 = pneg %p78
      %s130 = smul.u32 128, %s13
      %p131 = scmp.lt.s32.totalorder %s130, 255
      %s132 = scalar_select %p131, %s130, 255
      %s133 = smul.addr %s132, 4
      %s134 = scalar_lea.vmem %s2, %s133
      %s135 = smul.u32 128, %s13
      %p136 = scmp.lt.s32.totalorder %s135, 255
      %s137 = scalar_select %p136, %s135, 255
      %s138 = smul.addr %s137, 4
      %s139 = scalar_lea.vmem %s0, %s138
      %s140 = smul.u32 128, %s13
      %s141 = smul.u32 128, %s13
      %p142 = scmp.lt.s32.totalorder %s141, 255
      %s143 = scalar_select %p142, %s141, 255
      %s144 = smul.addr %s143, 4
      %s145 = scalar_lea.vmem %s2, %s144
      %s146 = smul.u32 128, %s13
      %v148 = vld [vmem:[%s139] sm:$0xf]
      %v149 = vld [vmem:[%s139 + $0x4] sm:$0xf]
      %v150 = vld [vmem:[%s139 + $0x8] sm:$0xf]
      %v151 = vld [vmem:[%s139 + $0xc] sm:$0xf]
      %v152 = vld [vmem:[%s139 + $0x10] sm:$0xf]
      %v153 = vld [vmem:[%s139 + $0x14] sm:$0xf]
      %v154 = vld [vmem:[%s139 + $0x18] sm:$0xf]
      %v155 = vld [vmem:[%s139 + $0x1c] sm:$0xf]
      %v156 = vld [vmem:[%s139 + $0x20] sm:$0xf]
      %v157 = vld [vmem:[%s139 + $0x24] sm:$0xf]
      %v158 = vld [vmem:[%s139 + $0x28] sm:$0xf]
      %v159 = vld [vmem:[%s139 + $0x2c] sm:$0xf]
      %v160 = vld [vmem:[%s139 + $0x30] sm:$0xf]
      %v161 = vld [vmem:[%s139 + $0x34] sm:$0xf]
      %v162 = vld [vmem:[%s139 + $0x38] sm:$0xf]
      %v163 = vld [vmem:[%s139 + $0x3c] sm:$0xf]
      %v164 = vld [vmem:[%s139 + $0x40] sm:$0xf]
      %v165 = vld [vmem:[%s139 + $0x44] sm:$0xf]
      %v166 = vld [vmem:[%s139 + $0x48] sm:$0xf]
      %v167 = vld [vmem:[%s139 + $0x4c] sm:$0xf]
      %v168 = vld [vmem:[%s139 + $0x50] sm:$0xf]
      %v169 = vld [vmem:[%s139 + $0x54] sm:$0xf]
      %v170 = vld [vmem:[%s139 + $0x58] sm:$0xf]
      %v171 = vld [vmem:[%s139 + $0x5c] sm:$0xf]
      %v172 = vld [vmem:[%s139 + $0x60] sm:$0xf]
      %v173 = vld [vmem:[%s139 + $0x64] sm:$0xf]
      %v174 = vld [vmem:[%s139 + $0x68] sm:$0xf]
      %v175 = vld [vmem:[%s139 + $0x6c] sm:$0xf]
      %v176 = vld [vmem:[%s139 + $0x70] sm:$0xf]
      %v177 = vld [vmem:[%s139 + $0x74] sm:$0xf]
      %v178 = vld [vmem:[%s139 + $0x78] sm:$0xf]
      %v179 = vld [vmem:[%s139 + $0x7c] sm:$0xf]
      %v180 = vld [vmem:[%s139 + $0x80] sm:$0xf]
      %v181 = vld [vmem:[%s139 + $0x84] sm:$0xf]
      %v182 = vld [vmem:[%s139 + $0x88] sm:$0xf]
      %v183 = vld [vmem:[%s139 + $0x8c] sm:$0xf]
      %v184 = vld [vmem:[%s139 + $0x90] sm:$0xf]
      %v185 = vld [vmem:[%s139 + $0x94] sm:$0xf]
      %v186 = vld [vmem:[%s139 + $0x98] sm:$0xf]
      %v187 = vld [vmem:[%s139 + $0x9c] sm:$0xf]
      %v188 = vld [vmem:[%s139 + $0xa0] sm:$0xf]
      %v189 = vld [vmem:[%s139 + $0xa4] sm:$0xf]
      %v190 = vld [vmem:[%s139 + $0xa8] sm:$0xf]
      %v191 = vld [vmem:[%s139 + $0xac] sm:$0xf]
      %v192 = vld [vmem:[%s139 + $0xb0] sm:$0xf]
      %v193 = vld [vmem:[%s139 + $0xb4] sm:$0xf]
      %v194 = vld [vmem:[%s139 + $0xb8] sm:$0xf]
      %v195 = vld [vmem:[%s139 + $0xbc] sm:$0xf]
      %v196 = vld [vmem:[%s139 + $0xc0] sm:$0xf]
      %v197 = vld [vmem:[%s139 + $0xc4] sm:$0xf]
      %v198 = vld [vmem:[%s139 + $0xc8] sm:$0xf]
      %v199 = vld [vmem:[%s139 + $0xcc] sm:$0xf]
      %v200 = vld [vmem:[%s139 + $0xd0] sm:$0xf]
      %v201 = vld [vmem:[%s139 + $0xd4] sm:$0xf]
      %v202 = vld [vmem:[%s139 + $0xd8] sm:$0xf]
      %v203 = vld [vmem:[%s139 + $0xdc] sm:$0xf]
      %v204 = vld [vmem:[%s139 + $0xe0] sm:$0xf]
      %v205 = vld [vmem:[%s139 + $0xe4] sm:$0xf]
      %v206 = vld [vmem:[%s139 + $0xe8] sm:$0xf]
      %v207 = vld [vmem:[%s139 + $0xec] sm:$0xf]
      %v208 = vld [vmem:[%s139 + $0xf0] sm:$0xf]
      %v209 = vld [vmem:[%s139 + $0xf4] sm:$0xf]
      %v210 = vld [vmem:[%s139 + $0xf8] sm:$0xf]
      %v211 = vld [vmem:[%s139 + $0xfc] sm:$0xf]
      %v212 = vld [vmem:[%s139 + $0x100] sm:$0xf]
      %v213 = vld [vmem:[%s139 + $0x104] sm:$0xf]
      %v214 = vld [vmem:[%s139 + $0x108] sm:$0xf]
      %v215 = vld [vmem:[%s139 + $0x10c] sm:$0xf]
      %v216 = vld [vmem:[%s139 + $0x110] sm:$0xf]
      %v217 = vld [vmem:[%s139 + $0x114] sm:$0xf]
      %v218 = vld [vmem:[%s139 + $0x118] sm:$0xf]
      %v219 = vld [vmem:[%s139 + $0x11c] sm:$0xf]
      %v220 = vld [vmem:[%s139 + $0x120] sm:$0xf]
      %v221 = vld [vmem:[%s139 + $0x124] sm:$0xf]
      %v222 = vld [vmem:[%s139 + $0x128] sm:$0xf]
      %v223 = vld [vmem:[%s139 + $0x12c] sm:$0xf]
      %v224 = vld [vmem:[%s139 + $0x130] sm:$0xf]
      %v225 = vld [vmem:[%s139 + $0x134] sm:$0xf]
      %v226 = vld [vmem:[%s139 + $0x138] sm:$0xf]
      %v227 = vld [vmem:[%s139 + $0x13c] sm:$0xf]
      %v228 = vld [vmem:[%s139 + $0x140] sm:$0xf]
      %v229 = vld [vmem:[%s139 + $0x144] sm:$0xf]
      %v230 = vld [vmem:[%s139 + $0x148] sm:$0xf]
      %v231 = vld [vmem:[%s139 + $0x14c] sm:$0xf]
      %v232 = vld [vmem:[%s139 + $0x150] sm:$0xf]
      %v233 = vld [vmem:[%s139 + $0x154] sm:$0xf]
      %v234 = vld [vmem:[%s139 + $0x158] sm:$0xf]
      %v235 = vld [vmem:[%s139 + $0x15c] sm:$0xf]
      %v236 = vld [vmem:[%s139 + $0x160] sm:$0xf]
      %v237 = vld [vmem:[%s139 + $0x164] sm:$0xf]
      %v238 = vld [vmem:[%s139 + $0x168] sm:$0xf]
      %v239 = vld [vmem:[%s139 + $0x16c] sm:$0xf]
      %v240 = vld [vmem:[%s139 + $0x170] sm:$0xf]
      %v241 = vld [vmem:[%s139 + $0x174] sm:$0xf]
      %v242 = vld [vmem:[%s139 + $0x178] sm:$0xf]
      %v243 = vld [vmem:[%s139 + $0x17c] sm:$0xf]
      %v244 = vld [vmem:[%s139 + $0x180] sm:$0xf]
      %v245 = vld [vmem:[%s139 + $0x184] sm:$0xf]
      %v246 = vld [vmem:[%s139 + $0x188] sm:$0xf]
      %v247 = vld [vmem:[%s139 + $0x18c] sm:$0xf]
      %v248 = vld [vmem:[%s139 + $0x190] sm:$0xf]
      %v249 = vld [vmem:[%s139 + $0x194] sm:$0xf]
      %v250 = vld [vmem:[%s139 + $0x198] sm:$0xf]
      %v251 = vld [vmem:[%s139 + $0x19c] sm:$0xf]
      %v252 = vld [vmem:[%s139 + $0x1a0] sm:$0xf]
      %v253 = vld [vmem:[%s139 + $0x1a4] sm:$0xf]
      %v254 = vld [vmem:[%s139 + $0x1a8] sm:$0xf]
      %v255 = vld [vmem:[%s139 + $0x1ac] sm:$0xf]
      %v256 = vld [vmem:[%s139 + $0x1b0] sm:$0xf]
      %v257 = vld [vmem:[%s139 + $0x1b4] sm:$0xf]
      %v258 = vld [vmem:[%s139 + $0x1b8] sm:$0xf]
      %v259 = vld [vmem:[%s139 + $0x1bc] sm:$0xf]
      %v260 = vld [vmem:[%s139 + $0x1c0] sm:$0xf]
      %v261 = vld [vmem:[%s139 + $0x1c4] sm:$0xf]
      %v262 = vld [vmem:[%s139 + $0x1c8] sm:$0xf]
      %v263 = vld [vmem:[%s139 + $0x1cc] sm:$0xf]
      %v264 = vld [vmem:[%s139 + $0x1d0] sm:$0xf]
      %v265 = vld [vmem:[%s139 + $0x1d4] sm:$0xf]
      %v266 = vld [vmem:[%s139 + $0x1d8] sm:$0xf]
      %v267 = vld [vmem:[%s139 + $0x1dc] sm:$0xf]
      %v268 = vld [vmem:[%s139 + $0x1e0] sm:$0xf]
      %v269 = vld [vmem:[%s139 + $0x1e4] sm:$0xf]
      %v270 = vld [vmem:[%s139 + $0x1e8] sm:$0xf]
      %v271 = vld [vmem:[%s139 + $0x1ec] sm:$0xf]
      %v272 = vld [vmem:[%s139 + $0x1f0] sm:$0xf]
      %v273 = vld [vmem:[%s139 + $0x1f4] sm:$0xf]
      %v274 = vld [vmem:[%s139 + $0x1f8] sm:$0xf]
      %v275 = vld [vmem:[%s139 + $0x1fc] sm:$0xf]
      %v276 = vld [vmem:[%s1] sm:$0xf]
      %v277 = vld [vmem:[%s1 + $0x4] sm:$0xf]
      %v278 = vld [vmem:[%s1 + $0x8] sm:$0xf]
      %v279 = vld [vmem:[%s1 + $0xc] sm:$0xf]
      %v280 = vld [vmem:[%s1 + $0x10] sm:$0xf]
      %v281 = vld [vmem:[%s1 + $0x14] sm:$0xf]
      %v282 = vld [vmem:[%s1 + $0x18] sm:$0xf]
      %v283 = vld [vmem:[%s1 + $0x1c] sm:$0xf]
      %v284 = vld [vmem:[%s1 + $0x20] sm:$0xf]
      %v285 = vld [vmem:[%s1 + $0x24] sm:$0xf]
      %v286 = vld [vmem:[%s1 + $0x28] sm:$0xf]
      %v287 = vld [vmem:[%s1 + $0x2c] sm:$0xf]
      %v288 = vld [vmem:[%s1 + $0x30] sm:$0xf]
      %v289 = vld [vmem:[%s1 + $0x34] sm:$0xf]
      %v290 = vld [vmem:[%s1 + $0x38] sm:$0xf]
      %v291 = vld [vmem:[%s1 + $0x3c] sm:$0xf]
      %v420 = vunpack.c.l.b16 %v148
      %v421 = vunpack.c.l.b16 %v149
      %v422 = vunpack.c.l.b16 %v150
      %v423 = vunpack.c.l.b16 %v151
      %v424 = vunpack.c.l.b16 %v152
      %v425 = vunpack.c.l.b16 %v153
      %v426 = vunpack.c.l.b16 %v154
      %v427 = vunpack.c.l.b16 %v155
      %v428 = vunpack.c.l.b16 %v156
      %v429 = vunpack.c.l.b16 %v157
      %v430 = vunpack.c.l.b16 %v158
      %v431 = vunpack.c.l.b16 %v159
      %v432 = vunpack.c.l.b16 %v160
      %v433 = vunpack.c.l.b16 %v161
      %v434 = vunpack.c.l.b16 %v162
      %v435 = vunpack.c.l.b16 %v163
      %v436 = vunpack.c.l.b16 %v164
      %v437 = vunpack.c.l.b16 %v165
      %v438 = vunpack.c.l.b16 %v166
      %v439 = vunpack.c.l.b16 %v167
      %v440 = vunpack.c.l.b16 %v168
      %v441 = vunpack.c.l.b16 %v169
      %v442 = vunpack.c.l.b16 %v170
      %v443 = vunpack.c.l.b16 %v171
      %v444 = vunpack.c.l.b16 %v172
      %v445 = vunpack.c.l.b16 %v173
      %v446 = vunpack.c.l.b16 %v174
      %v447 = vunpack.c.l.b16 %v175
      %v448 = vunpack.c.l.b16 %v176
      %v449 = vunpack.c.l.b16 %v177
      %v450 = vunpack.c.l.b16 %v178
      %v451 = vunpack.c.l.b16 %v179
      %v452 = vunpack.c.l.b16 %v180
      %v453 = vunpack.c.l.b16 %v181
      %v454 = vunpack.c.l.b16 %v182
      %v455 = vunpack.c.l.b16 %v183
      %v456 = vunpack.c.l.b16 %v184
      %v457 = vunpack.c.l.b16 %v185
      %v458 = vunpack.c.l.b16 %v186
      %v459 = vunpack.c.l.b16 %v187
      %v460 = vunpack.c.l.b16 %v188
      %v461 = vunpack.c.l.b16 %v189
      %v462 = vunpack.c.l.b16 %v190
      %v463 = vunpack.c.l.b16 %v191
      %v464 = vunpack.c.l.b16 %v192
      %v465 = vunpack.c.l.b16 %v193
      %v466 = vunpack.c.l.b16 %v194
      %v467 = vunpack.c.l.b16 %v195
      %v468 = vunpack.c.l.b16 %v196
      %v469 = vunpack.c.l.b16 %v197
      %v470 = vunpack.c.l.b16 %v198
      %v471 = vunpack.c.l.b16 %v199
      %v472 = vunpack.c.l.b16 %v200
      %v473 = vunpack.c.l.b16 %v201
      %v474 = vunpack.c.l.b16 %v202
      %v475 = vunpack.c.l.b16 %v203
      %v476 = vunpack.c.l.b16 %v204
      %v477 = vunpack.c.l.b16 %v205
      %v478 = vunpack.c.l.b16 %v206
      %v479 = vunpack.c.l.b16 %v207
      %v480 = vunpack.c.l.b16 %v208
      %v481 = vunpack.c.l.b16 %v209
      %v482 = vunpack.c.l.b16 %v210
      %v483 = vunpack.c.l.b16 %v211
      %v484 = vunpack.c.l.b16 %v212
      %v485 = vunpack.c.l.b16 %v213
      %v486 = vunpack.c.l.b16 %v214
      %v487 = vunpack.c.l.b16 %v215
      %v488 = vunpack.c.l.b16 %v216
      %v489 = vunpack.c.l.b16 %v217
      %v490 = vunpack.c.l.b16 %v218
      %v491 = vunpack.c.l.b16 %v219
      %v492 = vunpack.c.l.b16 %v220
      %v493 = vunpack.c.l.b16 %v221
      %v494 = vunpack.c.l.b16 %v222
      %v495 = vunpack.c.l.b16 %v223
      %v496 = vunpack.c.l.b16 %v224
      %v497 = vunpack.c.l.b16 %v225
      %v498 = vunpack.c.l.b16 %v226
      %v499 = vunpack.c.l.b16 %v227
      %v500 = vunpack.c.l.b16 %v228
      %v501 = vunpack.c.l.b16 %v229
      %v502 = vunpack.c.l.b16 %v230
      %v503 = vunpack.c.l.b16 %v231
      %v504 = vunpack.c.l.b16 %v232
      %v505 = vunpack.c.l.b16 %v233
      %v506 = vunpack.c.l.b16 %v234
      %v507 = vunpack.c.l.b16 %v235
      %v508 = vunpack.c.l.b16 %v236
      %v509 = vunpack.c.l.b16 %v237
      %v510 = vunpack.c.l.b16 %v238
      %v511 = vunpack.c.l.b16 %v239
      %v512 = vunpack.c.l.b16 %v240
      %v513 = vunpack.c.l.b16 %v241
      %v514 = vunpack.c.l.b16 %v242
      %v515 = vunpack.c.l.b16 %v243
      %v516 = vunpack.c.l.b16 %v244
      %v517 = vunpack.c.l.b16 %v245
      %v518 = vunpack.c.l.b16 %v246
      %v519 = vunpack.c.l.b16 %v247
      %v520 = vunpack.c.l.b16 %v248
      %v521 = vunpack.c.l.b16 %v249
      %v522 = vunpack.c.l.b16 %v250
      %v523 = vunpack.c.l.b16 %v251
      %v524 = vunpack.c.l.b16 %v252
      %v525 = vunpack.c.l.b16 %v253
      %v526 = vunpack.c.l.b16 %v254
      %v527 = vunpack.c.l.b16 %v255
      %v528 = vunpack.c.l.b16 %v256
      %v529 = vunpack.c.l.b16 %v257
      %v530 = vunpack.c.l.b16 %v258
      %v531 = vunpack.c.l.b16 %v259
      %v532 = vunpack.c.l.b16 %v260
      %v533 = vunpack.c.l.b16 %v261
      %v534 = vunpack.c.l.b16 %v262
      %v535 = vunpack.c.l.b16 %v263
      %v536 = vunpack.c.l.b16 %v264
      %v537 = vunpack.c.l.b16 %v265
      %v538 = vunpack.c.l.b16 %v266
      %v539 = vunpack.c.l.b16 %v267
      %v540 = vunpack.c.l.b16 %v268
      %v541 = vunpack.c.l.b16 %v269
      %v542 = vunpack.c.l.b16 %v270
      %v543 = vunpack.c.l.b16 %v271
      %v544 = vunpack.c.l.b16 %v272
      %v545 = vunpack.c.l.b16 %v273
      %v546 = vunpack.c.l.b16 %v274
      %v547 = vunpack.c.l.b16 %v275
      %v548 = vpack.c.b16 %v421, %v420
      %v549 = vpack.c.b16 %v423, %v422
      %v550 = vpack.c.b16 %v425, %v424
      %v551 = vpack.c.b16 %v427, %v426
      %v552 = vpack.c.b16 %v429, %v428
      %v553 = vpack.c.b16 %v431, %v430
      %v554 = vpack.c.b16 %v433, %v432
      %v555 = vpack.c.b16 %v435, %v434
      %v556 = vpack.c.b16 %v437, %v436
      %v557 = vpack.c.b16 %v439, %v438
      %v558 = vpack.c.b16 %v441, %v440
      %v559 = vpack.c.b16 %v443, %v442
      %v560 = vpack.c.b16 %v445, %v444
      %v561 = vpack.c.b16 %v447, %v446
      %v562 = vpack.c.b16 %v449, %v448
      %v563 = vpack.c.b16 %v451, %v450
      %v564 = vpack.c.b16 %v453, %v452
      %v565 = vpack.c.b16 %v455, %v454
      %v566 = vpack.c.b16 %v457, %v456
      %v567 = vpack.c.b16 %v459, %v458
      %v568 = vpack.c.b16 %v461, %v460
      %v569 = vpack.c.b16 %v463, %v462
      %v570 = vpack.c.b16 %v465, %v464
      %v571 = vpack.c.b16 %v467, %v466
      %v572 = vpack.c.b16 %v469, %v468
      %v573 = vpack.c.b16 %v471, %v470
      %v574 = vpack.c.b16 %v473, %v472
      %v575 = vpack.c.b16 %v475, %v474
      %v576 = vpack.c.b16 %v477, %v476
      %v577 = vpack.c.b16 %v479, %v478
      %v578 = vpack.c.b16 %v481, %v480
      %v579 = vpack.c.b16 %v483, %v482
      %v580 = vpack.c.b16 %v485, %v484
      %v581 = vpack.c.b16 %v487, %v486
      %v582 = vpack.c.b16 %v489, %v488
      %v583 = vpack.c.b16 %v491, %v490
      %v584 = vpack.c.b16 %v493, %v492
      %v585 = vpack.c.b16 %v495, %v494
      %v586 = vpack.c.b16 %v497, %v496
      %v587 = vpack.c.b16 %v499, %v498
      %v588 = vpack.c.b16 %v501, %v500
      %v589 = vpack.c.b16 %v503, %v502
      %v590 = vpack.c.b16 %v505, %v504
      %v591 = vpack.c.b16 %v507, %v506
      %v592 = vpack.c.b16 %v509, %v508
      %v593 = vpack.c.b16 %v511, %v510
      %v594 = vpack.c.b16 %v513, %v512
      %v595 = vpack.c.b16 %v515, %v514
      %v596 = vpack.c.b16 %v517, %v516
      %v597 = vpack.c.b16 %v519, %v518
      %v598 = vpack.c.b16 %v521, %v520
      %v599 = vpack.c.b16 %v523, %v522
      %v600 = vpack.c.b16 %v525, %v524
      %v601 = vpack.c.b16 %v527, %v526
      %v602 = vpack.c.b16 %v529, %v528
      %v603 = vpack.c.b16 %v531, %v530
      %v604 = vpack.c.b16 %v533, %v532
      %v605 = vpack.c.b16 %v535, %v534
      %v606 = vpack.c.b16 %v537, %v536
      %v607 = vpack.c.b16 %v539, %v538
      %v608 = vpack.c.b16 %v541, %v540
      %v609 = vpack.c.b16 %v543, %v542
      %v610 = vpack.c.b16 %v545, %v544
      %v611 = vpack.c.b16 %v547, %v546
      %v692 = vunpack.c.l.b16 %v276
      %v693 = vunpack.c.l.b16 %v277
      %v694 = vunpack.c.l.b16 %v278
      %v695 = vunpack.c.l.b16 %v279
      %v696 = vunpack.c.l.b16 %v280
      %v697 = vunpack.c.l.b16 %v281
      %v698 = vunpack.c.l.b16 %v282
      %v699 = vunpack.c.l.b16 %v283
      %v700 = vunpack.c.l.b16 %v284
      %v701 = vunpack.c.l.b16 %v285
      %v702 = vunpack.c.l.b16 %v286
      %v703 = vunpack.c.l.b16 %v287
      %v704 = vunpack.c.l.b16 %v288
      %v705 = vunpack.c.l.b16 %v289
      %v706 = vunpack.c.l.b16 %v290
      %v707 = vunpack.c.l.b16 %v291
      %v708 = vpack.c.b16 %v693, %v692
      %v709 = vpack.c.b16 %v695, %v694
      %v710 = vpack.c.b16 %v697, %v696
      %v711 = vpack.c.b16 %v699, %v698
      %v712 = vpack.c.b16 %v701, %v700
      %v713 = vpack.c.b16 %v703, %v702
      %v714 = vpack.c.b16 %v705, %v704
      %v715 = vpack.c.b16 %v707, %v706
      %724 = vmatprep.subr.bf16.mxu0 0
      %725 = vmatpush1.bf16.msra.mxu0 %v708
      %726 = vmatprep.subr.bf16.mxu0 0
      %727 = vmatpush1.bf16.msra.mxu0 %v709
      %728 = vmatprep.subr.bf16.mxu0 0
      %729 = vmatpush1.bf16.msra.mxu0 %v710
      %730 = vmatprep.subr.bf16.mxu0 0
      %731 = vmatpush1.bf16.msra.mxu0 %v711
      %732 = vmatprep.subr.bf16.mxu0 0
      %733 = vmatpush1.bf16.msra.mxu0 %v712
      %734 = vmatprep.subr.bf16.mxu0 0
      %735 = vmatpush1.bf16.msra.mxu0 %v713
      %736 = vmatprep.subr.bf16.mxu0 0
      %737 = vmatpush1.bf16.msra.mxu0 %v714
      %738 = vmatprep.subr.bf16.mxu0 0
      %739 = vmatpush1.bf16.msra.mxu0 %v715
      %740 = vmatprep.subr.bf16.mxu0 0
      %741 = vmatpush1.bf16.msra.mxu0 0
      %742 = vmatprep.subr.bf16.mxu0 0
      %743 = vmatpush1.bf16.msra.mxu0 0
      %744 = vmatprep.subr.bf16.mxu0 0
      %745 = vmatpush1.bf16.msra.mxu0 0
      %746 = vmatprep.subr.bf16.mxu0 0
      %747 = vmatpush1.bf16.msra.mxu0 0
      %748 = vmatprep.subr.bf16.mxu0 0
      %749 = vmatpush1.bf16.msra.mxu0 0
      %750 = vmatprep.subr.bf16.mxu0 0
      %751 = vmatpush1.bf16.msra.mxu0 0
      %752 = vmatprep.subr.bf16.mxu0 0
      %753 = vmatpush1.bf16.msra.mxu0 0
      %754 = vmatprep.subr.bf16.mxu0 0
      %755 = vmatpush1.bf16.msra.mxu0 0
      %756 = vmatprep.mubr.bf16.mxu0 0
      %757 = vmatmul.mubr.bf16.gmra.mrb[0].mxu0 %v548
      %v758 = vpop.f32.mrb[0].mxu0
      %v759 = vadd.f32 0.0, %v758
      %v760 = vpop.f32.mrb[0].mxu0
      %v761 = vpop.f32.mrb[0].mxu0
      %v762 = vadd.f32 0.0, %v761
      %v763 = vpop.f32.mrb[0].mxu0
      %764 = vmatprep.mubr.bf16.mxu0 0
      %765 = vmatmul.mubr.bf16.gmra.mrb[0].mxu0 %v549
      %v766 = vpop.f32.mrb[0].mxu0
      %v767 = vadd.f32 0.0, %v766
      %v768 = vpop.f32.mrb[0].mxu0
      %v769 = vpop.f32.mrb[0].mxu0
      %v770 = vadd.f32 0.0, %v769
      %v771 = vpop.f32.mrb[0].mxu0
      %772 = vmatprep.mubr.bf16.mxu0 0
      %773 = vmatmul.mubr.bf16.gmra.mrb[0].mxu0 %v550
      %v774 = vpop.f32.mrb[0].mxu0
      %v775 = vadd.f32 0.0, %v774
      %v776 = vpop.f32.mrb[0].mxu0
      %v777 = vpop.f32.mrb[0].mxu0
      %v778 = vadd.f32 0.0, %v777
      %v779 = vpop.f32.mrb[0].mxu0
      %780 = vmatprep.mubr.bf16.mxu0 0
      %781 = vmatmul.mubr.bf16.gmra.mrb[0].mxu0 %v551
      %v782 = vpop.f32.mrb[0].mxu0
      %v783 = vadd.f32 0.0, %v782
      %v784 = vpop.f32.mrb[0].mxu0
      %v785 = vpop.f32.mrb[0].mxu0
      %v786 = vadd.f32 0.0, %v785
      %v787 = vpop.f32.mrb[0].mxu0
      %788 = vmatprep.mubr.bf16.mxu0 0
      %789 = vmatmul.mubr.bf16.gmra.mrb[0].mxu0 %v552
      %v790 = vpop.f32.mrb[0].mxu0
      %v791 = vadd.f32 0.0, %v790
      %v792 = vpop.f32.mrb[0].mxu0
      %v793 = vpop.f32.mrb[0].mxu0
      %v794 = vadd.f32 0.0, %v793
      %v795 = vpop.f32.mrb[0].mxu0
      %796 = vmatprep.mubr.bf16.mxu0 0
      %797 = vmatmul.mubr.bf16.gmra.mrb[0].mxu0 %v553
      %v798 = vpop.f32.mrb[0].mxu0
      %v799 = vadd.f32 0.0, %v798
      %v800 = vpop.f32.mrb[0].mxu0
      %v801 = vpop.f32.mrb[0].mxu0
      %v802 = vadd.f32 0.0, %v801
      %v803 = vpop.f32.mrb[0].mxu0
      %804 = vmatprep.mubr.bf16.mxu0 0
      %805 = vmatmul.mubr.bf16.gmra.mrb[0].mxu0 %v554
      %v806 = vpop.f32.mrb[0].mxu0
      %v807 = vadd.f32 0.0, %v806
      %v808 = vpop.f32.mrb[0].mxu0
      %v809 = vpop.f32.mrb[0].mxu0
      %v810 = vadd.f32 0.0, %v809
      %v811 = vpop.f32.mrb[0].mxu0
      %812 = vmatprep.mubr.bf16.mxu0 0
      %813 = vmatmul.mubr.bf16.gmra.mrb[0].mxu0 %v555
      %v814 = vpop.f32.mrb[0].mxu0
      %v815 = vadd.f32 0.0, %v814
      %v816 = vpop.f32.mrb[0].mxu0
      %v817 = vpop.f32.mrb[0].mxu0
      %v818 = vadd.f32 0.0, %v817
      %v819 = vpop.f32.mrb[0].mxu0
      %820 = vmatprep.mubr.bf16.mxu0 0
      %821 = vmatmul.mubr.bf16.gmra.mrb[0].mxu0 %v556
      %v822 = vpop.f32.mrb[0].mxu0
      %v823 = vadd.f32 0.0, %v822
      %v824 = vpop.f32.mrb[0].mxu0
      %v825 = vpop.f32.mrb[0].mxu0
      %v826 = vadd.f32 0.0, %v825
      %v827 = vpop.f32.mrb[0].mxu0
      %828 = vmatprep.mubr.bf16.mxu0 0
      %829 = vmatmul.mubr.bf16.gmra.mrb[0].mxu0 %v557
      %v830 = vpop.f32.mrb[0].mxu0
      %v831 = vadd.f32 0.0, %v830
      %v832 = vpop.f32.mrb[0].mxu0
      %v833 = vpop.f32.mrb[0].mxu0
      %v834 = vadd.f32 0.0, %v833
      %v835 = vpop.f32.mrb[0].mxu0
      %836 = vmatprep.mubr.bf16.mxu0 0
      %837 = vmatmul.mubr.bf16.gmra.mrb[0].mxu0 %v558
      %v838 = vpop.f32.mrb[0].mxu0
      %v839 = vadd.f32 0.0, %v838
      %v840 = vpop.f32.mrb[0].mxu0
      %v841 = vpop.f32.mrb[0].mxu0
      %v842 = vadd.f32 0.0, %v841
      %v843 = vpop.f32.mrb[0].mxu0
      %844 = vmatprep.mubr.bf16.mxu0 0
      %845 = vmatmul.mubr.bf16.gmra.mrb[0].mxu0 %v559
      %v846 = vpop.f32.mrb[0].mxu0
      %v847 = vadd.f32 0.0, %v846
      %v848 = vpop.f32.mrb[0].mxu0
      %v849 = vpop.f32.mrb[0].mxu0
      %v850 = vadd.f32 0.0, %v849
      %v851 = vpop.f32.mrb[0].mxu0
      %852 = vmatprep.mubr.bf16.mxu0 0
      %853 = vmatmul.mubr.bf16.gmra.mrb[0].mxu0 %v560
      %v854 = vpop.f32.mrb[0].mxu0
      %v855 = vadd.f32 0.0, %v854
      %v856 = vpop.f32.mrb[0].mxu0
      %v857 = vpop.f32.mrb[0].mxu0
      %v858 = vadd.f32 0.0, %v857
      %v859 = vpop.f32.mrb[0].mxu0
      %860 = vmatprep.mubr.bf16.mxu0 0
      %861 = vmatmul.mubr.bf16.gmra.mrb[0].mxu0 %v561
      %v862 = vpop.f32.mrb[0].mxu0
      %v863 = vadd.f32 0.0, %v862
      %v864 = vpop.f32.mrb[0].mxu0
      %v865 = vpop.f32.mrb[0].mxu0
      %v866 = vadd.f32 0.0, %v865
      %v867 = vpop.f32.mrb[0].mxu0
      %868 = vmatprep.mubr.bf16.mxu0 0
      %869 = vmatmul.mubr.bf16.gmra.mrb[0].mxu0 %v562
      %v870 = vpop.f32.mrb[0].mxu0
      %v871 = vadd.f32 0.0, %v870
      %v872 = vpop.f32.mrb[0].mxu0
      %v873 = vpop.f32.mrb[0].mxu0
      %v874 = vadd.f32 0.0, %v873
      %v875 = vpop.f32.mrb[0].mxu0
      %876 = vmatprep.mubr.bf16.mxu0 0
      %877 = vmatmul.mubr.bf16.gmra.mrb[0].mxu0 %v563
      %v878 = vpop.f32.mrb[0].mxu0
      %v879 = vadd.f32 0.0, %v878
      %v880 = vpop.f32.mrb[0].mxu0
      %v881 = vpop.f32.mrb[0].mxu0
      %v882 = vadd.f32 0.0, %v881
      %v883 = vpop.f32.mrb[0].mxu0
      %884 = vmatprep.mubr.bf16.mxu0 0
      %885 = vmatmul.mubr.bf16.gmra.mrb[0].mxu0 %v564
      %v886 = vpop.f32.mrb[0].mxu0
      %v887 = vadd.f32 0.0, %v886
      %v888 = vpop.f32.mrb[0].mxu0
      %v889 = vpop.f32.mrb[0].mxu0
      %v890 = vadd.f32 0.0, %v889
      %v891 = vpop.f32.mrb[0].mxu0
      %892 = vmatprep.mubr.bf16.mxu0 0
      %893 = vmatmul.mubr.bf16.gmra.mrb[0].mxu0 %v565
      %v894 = vpop.f32.mrb[0].mxu0
      %v895 = vadd.f32 0.0, %v894
      %v896 = vpop.f32.mrb[0].mxu0
      %v897 = vpop.f32.mrb[0].mxu0
      %v898 = vadd.f32 0.0, %v897
      %v899 = vpop.f32.mrb[0].mxu0
      %900 = vmatprep.mubr.bf16.mxu0 0
      %901 = vmatmul.mubr.bf16.gmra.mrb[0].mxu0 %v566
      %v902 = vpop.f32.mrb[0].mxu0
      %v903 = vadd.f32 0.0, %v902
      %v904 = vpop.f32.mrb[0].mxu0
      %v905 = vpop.f32.mrb[0].mxu0
      %v906 = vadd.f32 0.0, %v905
      %v907 = vpop.f32.mrb[0].mxu0
      %908 = vmatprep.mubr.bf16.mxu0 0
      %909 = vmatmul.mubr.bf16.gmra.mrb[0].mxu0 %v567
      %v910 = vpop.f32.mrb[0].mxu0
      %v911 = vadd.f32 0.0, %v910
      %v912 = vpop.f32.mrb[0].mxu0
      %v913 = vpop.f32.mrb[0].mxu0
      %v914 = vadd.f32 0.0, %v913
      %v915 = vpop.f32.mrb[0].mxu0
      %916 = vmatprep.mubr.bf16.mxu0 0
      %917 = vmatmul.mubr.bf16.gmra.mrb[0].mxu0 %v568
      %v918 = vpop.f32.mrb[0].mxu0
      %v919 = vadd.f32 0.0, %v918
      %v920 = vpop.f32.mrb[0].mxu0
      %v921 = vpop.f32.mrb[0].mxu0
      %v922 = vadd.f32 0.0, %v921
      %v923 = vpop.f32.mrb[0].mxu0
      %924 = vmatprep.mubr.bf16.mxu0 0
      %925 = vmatmul.mubr.bf16.gmra.mrb[0].mxu0 %v569
      %v926 = vpop.f32.mrb[0].mxu0
      %v927 = vadd.f32 0.0, %v926
      %v928 = vpop.f32.mrb[0].mxu0
      %v929 = vpop.f32.mrb[0].mxu0
      %v930 = vadd.f32 0.0, %v929
      %v931 = vpop.f32.mrb[0].mxu0
      %932 = vmatprep.mubr.bf16.mxu0 0
      %933 = vmatmul.mubr.bf16.gmra.mrb[0].mxu0 %v570
      %v934 = vpop.f32.mrb[0].mxu0
      %v935 = vadd.f32 0.0, %v934
      %v936 = vpop.f32.mrb[0].mxu0
      %v937 = vpop.f32.mrb[0].mxu0
      %v938 = vadd.f32 0.0, %v937
      %v939 = vpop.f32.mrb[0].mxu0
      %940 = vmatprep.mubr.bf16.mxu0 0
      %941 = vmatmul.mubr.bf16.gmra.mrb[0].mxu0 %v571
      %v942 = vpop.f32.mrb[0].mxu0
      %v943 = vadd.f32 0.0, %v942
      %v944 = vpop.f32.mrb[0].mxu0
      %v945 = vpop.f32.mrb[0].mxu0
      %v946 = vadd.f32 0.0, %v945
      %v947 = vpop.f32.mrb[0].mxu0
      %948 = vmatprep.mubr.bf16.mxu0 0
      %949 = vmatmul.mubr.bf16.gmra.mrb[0].mxu0 %v572
      %v950 = vpop.f32.mrb[0].mxu0
      %v951 = vadd.f32 0.0, %v950
      %v952 = vpop.f32.mrb[0].mxu0
      %v953 = vpop.f32.mrb[0].mxu0
      %v954 = vadd.f32 0.0, %v953
      %v955 = vpop.f32.mrb[0].mxu0
      %956 = vmatprep.mubr.bf16.mxu0 0
      %957 = vmatmul.mubr.bf16.gmra.mrb[0].mxu0 %v573
      %v958 = vpop.f32.mrb[0].mxu0
      %v959 = vadd.f32 0.0, %v958
      %v960 = vpop.f32.mrb[0].mxu0
      %v961 = vpop.f32.mrb[0].mxu0
      %v962 = vadd.f32 0.0, %v961
      %v963 = vpop.f32.mrb[0].mxu0
      %964 = vmatprep.mubr.bf16.mxu0 0
      %965 = vmatmul.mubr.bf16.gmra.mrb[0].mxu0 %v574
      %v966 = vpop.f32.mrb[0].mxu0
      %v967 = vadd.f32 0.0, %v966
      %v968 = vpop.f32.mrb[0].mxu0
      %v969 = vpop.f32.mrb[0].mxu0
      %v970 = vadd.f32 0.0, %v969
      %v971 = vpop.f32.mrb[0].mxu0
      %972 = vmatprep.mubr.bf16.mxu0 0
      %973 = vmatmul.mubr.bf16.gmra.mrb[0].mxu0 %v575
      %v974 = vpop.f32.mrb[0].mxu0
      %v975 = vadd.f32 0.0, %v974
      %v976 = vpop.f32.mrb[0].mxu0
      %v977 = vpop.f32.mrb[0].mxu0
      %v978 = vadd.f32 0.0, %v977
      %v979 = vpop.f32.mrb[0].mxu0
      %980 = vmatprep.mubr.bf16.mxu0 0
      %981 = vmatmul.mubr.bf16.gmra.mrb[0].mxu0 %v576
      %v982 = vpop.f32.mrb[0].mxu0
      %v983 = vadd.f32 0.0, %v982
      %v984 = vpop.f32.mrb[0].mxu0
      %v985 = vpop.f32.mrb[0].mxu0
      %v986 = vadd.f32 0.0, %v985
      %v987 = vpop.f32.mrb[0].mxu0
      %988 = vmatprep.mubr.bf16.mxu0 0
      %989 = vmatmul.mubr.bf16.gmra.mrb[0].mxu0 %v577
      %v990 = vpop.f32.mrb[0].mxu0
      %v991 = vadd.f32 0.0, %v990
      %v992 = vpop.f32.mrb[0].mxu0
      %v993 = vpop.f32.mrb[0].mxu0
      %v994 = vadd.f32 0.0, %v993
      %v995 = vpop.f32.mrb[0].mxu0
      %996 = vmatprep.mubr.bf16.mxu0 0
      %997 = vmatmul.mubr.bf16.gmra.mrb[0].mxu0 %v578
      %v998 = vpop.f32.mrb[0].mxu0
      %v999 = vadd.f32 0.0, %v998
      %v1000 = vpop.f32.mrb[0].mxu0
      %v1001 = vpop.f32.mrb[0].mxu0
      %v1002 = vadd.f32 0.0, %v1001
      %v1003 = vpop.f32.mrb[0].mxu0
      %1004 = vmatprep.mubr.bf16.mxu0 0
      %1005 = vmatmul.mubr.bf16.gmra.mrb[0].mxu0 %v579
      %v1006 = vpop.f32.mrb[0].mxu0
      %v1007 = vadd.f32 0.0, %v1006
      %v1008 = vpop.f32.mrb[0].mxu0
      %v1009 = vpop.f32.mrb[0].mxu0
      %v1010 = vadd.f32 0.0, %v1009
      %v1011 = vpop.f32.mrb[0].mxu0
      %1012 = vmatprep.mubr.bf16.mxu0 0
      %1013 = vmatmul.mubr.bf16.gmra.mrb[0].mxu0 %v580
      %v1014 = vpop.f32.mrb[0].mxu0
      %v1015 = vadd.f32 0.0, %v1014
      %v1016 = vpop.f32.mrb[0].mxu0
      %v1017 = vpop.f32.mrb[0].mxu0
      %v1018 = vadd.f32 0.0, %v1017
      %v1019 = vpop.f32.mrb[0].mxu0
      %1020 = vmatprep.mubr.bf16.mxu0 0
      %1021 = vmatmul.mubr.bf16.gmra.mrb[0].mxu0 %v581
      %v1022 = vpop.f32.mrb[0].mxu0
      %v1023 = vadd.f32 0.0, %v1022
      %v1024 = vpop.f32.mrb[0].mxu0
      %v1025 = vpop.f32.mrb[0].mxu0
      %v1026 = vadd.f32 0.0, %v1025
      %v1027 = vpop.f32.mrb[0].mxu0
      %1028 = vmatprep.mubr.bf16.mxu0 0
      %1029 = vmatmul.mubr.bf16.gmra.mrb[0].mxu0 %v582
      %v1030 = vpop.f32.mrb[0].mxu0
      %v1031 = vadd.f32 0.0, %v1030
      %v1032 = vpop.f32.mrb[0].mxu0
      %v1033 = vpop.f32.mrb[0].mxu0
      %v1034 = vadd.f32 0.0, %v1033
      %v1035 = vpop.f32.mrb[0].mxu0
      %1036 = vmatprep.mubr.bf16.mxu0 0
      %1037 = vmatmul.mubr.bf16.gmra.mrb[0].mxu0 %v583
      %v1038 = vpop.f32.mrb[0].mxu0
      %v1039 = vadd.f32 0.0, %v1038
      %v1040 = vpop.f32.mrb[0].mxu0
      %v1041 = vpop.f32.mrb[0].mxu0
      %v1042 = vadd.f32 0.0, %v1041
      %v1043 = vpop.f32.mrb[0].mxu0
      %1044 = vmatprep.mubr.bf16.mxu0 0
      %1045 = vmatmul.mubr.bf16.gmra.mrb[0].mxu0 %v584
      %v1046 = vpop.f32.mrb[0].mxu0
      %v1047 = vadd.f32 0.0, %v1046
      %v1048 = vpop.f32.mrb[0].mxu0
      %v1049 = vpop.f32.mrb[0].mxu0
      %v1050 = vadd.f32 0.0, %v1049
      %v1051 = vpop.f32.mrb[0].mxu0
      %1052 = vmatprep.mubr.bf16.mxu0 0
      %1053 = vmatmul.mubr.bf16.gmra.mrb[0].mxu0 %v585
      %v1054 = vpop.f32.mrb[0].mxu0
      %v1055 = vadd.f32 0.0, %v1054
      %v1056 = vpop.f32.mrb[0].mxu0
      %v1057 = vpop.f32.mrb[0].mxu0
      %v1058 = vadd.f32 0.0, %v1057
      %v1059 = vpop.f32.mrb[0].mxu0
      %1060 = vmatprep.mubr.bf16.mxu0 0
      %1061 = vmatmul.mubr.bf16.gmra.mrb[0].mxu0 %v586
      %v1062 = vpop.f32.mrb[0].mxu0
      %v1063 = vadd.f32 0.0, %v1062
      %v1064 = vpop.f32.mrb[0].mxu0
      %v1065 = vpop.f32.mrb[0].mxu0
      %v1066 = vadd.f32 0.0, %v1065
      %v1067 = vpop.f32.mrb[0].mxu0
      %1068 = vmatprep.mubr.bf16.mxu0 0
      %1069 = vmatmul.mubr.bf16.gmra.mrb[0].mxu0 %v587
      %v1070 = vpop.f32.mrb[0].mxu0
      %v1071 = vadd.f32 0.0, %v1070
      %v1072 = vpop.f32.mrb[0].mxu0
      %v1073 = vpop.f32.mrb[0].mxu0
      %v1074 = vadd.f32 0.0, %v1073
      %v1075 = vpop.f32.mrb[0].mxu0
      %1076 = vmatprep.mubr.bf16.mxu0 0
      %1077 = vmatmul.mubr.bf16.gmra.mrb[0].mxu0 %v588
      %v1078 = vpop.f32.mrb[0].mxu0
      %v1079 = vadd.f32 0.0, %v1078
      %v1080 = vpop.f32.mrb[0].mxu0
      %v1081 = vpop.f32.mrb[0].mxu0
      %v1082 = vadd.f32 0.0, %v1081
      %v1083 = vpop.f32.mrb[0].mxu0
      %1084 = vmatprep.mubr.bf16.mxu0 0
      %1085 = vmatmul.mubr.bf16.gmra.mrb[0].mxu0 %v589
      %v1086 = vpop.f32.mrb[0].mxu0
      %v1087 = vadd.f32 0.0, %v1086
      %v1088 = vpop.f32.mrb[0].mxu0
      %v1089 = vpop.f32.mrb[0].mxu0
      %v1090 = vadd.f32 0.0, %v1089
      %v1091 = vpop.f32.mrb[0].mxu0
      %1092 = vmatprep.mubr.bf16.mxu0 0
      %1093 = vmatmul.mubr.bf16.gmra.mrb[0].mxu0 %v590
      %v1094 = vpop.f32.mrb[0].mxu0
      %v1095 = vadd.f32 0.0, %v1094
      %v1096 = vpop.f32.mrb[0].mxu0
      %v1097 = vpop.f32.mrb[0].mxu0
      %v1098 = vadd.f32 0.0, %v1097
      %v1099 = vpop.f32.mrb[0].mxu0
      %1100 = vmatprep.mubr.bf16.mxu0 0
      %1101 = vmatmul.mubr.bf16.gmra.mrb[0].mxu0 %v591
      %v1102 = vpop.f32.mrb[0].mxu0
      %v1103 = vadd.f32 0.0, %v1102
      %v1104 = vpop.f32.mrb[0].mxu0
      %v1105 = vpop.f32.mrb[0].mxu0
      %v1106 = vadd.f32 0.0, %v1105
      %v1107 = vpop.f32.mrb[0].mxu0
      %1108 = vmatprep.mubr.bf16.mxu0 0
      %1109 = vmatmul.mubr.bf16.gmra.mrb[0].mxu0 %v592
      %v1110 = vpop.f32.mrb[0].mxu0
      %v1111 = vadd.f32 0.0, %v1110
      %v1112 = vpop.f32.mrb[0].mxu0
      %v1113 = vpop.f32.mrb[0].mxu0
      %v1114 = vadd.f32 0.0, %v1113
      %v1115 = vpop.f32.mrb[0].mxu0
      %1116 = vmatprep.mubr.bf16.mxu0 0
      %1117 = vmatmul.mubr.bf16.gmra.mrb[0].mxu0 %v593
      %v1118 = vpop.f32.mrb[0].mxu0
      %v1119 = vadd.f32 0.0, %v1118
      %v1120 = vpop.f32.mrb[0].mxu0
      %v1121 = vpop.f32.mrb[0].mxu0
      %v1122 = vadd.f32 0.0, %v1121
      %v1123 = vpop.f32.mrb[0].mxu0
      %1124 = vmatprep.mubr.bf16.mxu0 0
      %1125 = vmatmul.mubr.bf16.gmra.mrb[0].mxu0 %v594
      %v1126 = vpop.f32.mrb[0].mxu0
      %v1127 = vadd.f32 0.0, %v1126
      %v1128 = vpop.f32.mrb[0].mxu0
      %v1129 = vpop.f32.mrb[0].mxu0
      %v1130 = vadd.f32 0.0, %v1129
      %v1131 = vpop.f32.mrb[0].mxu0
      %1132 = vmatprep.mubr.bf16.mxu0 0
      %1133 = vmatmul.mubr.bf16.gmra.mrb[0].mxu0 %v595
      %v1134 = vpop.f32.mrb[0].mxu0
      %v1135 = vadd.f32 0.0, %v1134
      %v1136 = vpop.f32.mrb[0].mxu0
      %v1137 = vpop.f32.mrb[0].mxu0
      %v1138 = vadd.f32 0.0, %v1137
      %v1139 = vpop.f32.mrb[0].mxu0
      %1140 = vmatprep.mubr.bf16.mxu0 0
      %1141 = vmatmul.mubr.bf16.gmra.mrb[0].mxu0 %v596
      %v1142 = vpop.f32.mrb[0].mxu0
      %v1143 = vadd.f32 0.0, %v1142
      %v1144 = vpop.f32.mrb[0].mxu0
      %v1145 = vpop.f32.mrb[0].mxu0
      %v1146 = vadd.f32 0.0, %v1145
      %v1147 = vpop.f32.mrb[0].mxu0
      %1148 = vmatprep.mubr.bf16.mxu0 0
      %1149 = vmatmul.mubr.bf16.gmra.mrb[0].mxu0 %v597
      %v1150 = vpop.f32.mrb[0].mxu0
      %v1151 = vadd.f32 0.0, %v1150
      %v1152 = vpop.f32.mrb[0].mxu0
      %v1153 = vpop.f32.mrb[0].mxu0
      %v1154 = vadd.f32 0.0, %v1153
      %v1155 = vpop.f32.mrb[0].mxu0
      %1156 = vmatprep.mubr.bf16.mxu0 0
      %1157 = vmatmul.mubr.bf16.gmra.mrb[0].mxu0 %v598
      %v1158 = vpop.f32.mrb[0].mxu0
      %v1159 = vadd.f32 0.0, %v1158
      %v1160 = vpop.f32.mrb[0].mxu0
      %v1161 = vpop.f32.mrb[0].mxu0
      %v1162 = vadd.f32 0.0, %v1161
      %v1163 = vpop.f32.mrb[0].mxu0
      %1164 = vmatprep.mubr.bf16.mxu0 0
      %1165 = vmatmul.mubr.bf16.gmra.mrb[0].mxu0 %v599
      %v1166 = vpop.f32.mrb[0].mxu0
      %v1167 = vadd.f32 0.0, %v1166
      %v1168 = vpop.f32.mrb[0].mxu0
      %v1169 = vpop.f32.mrb[0].mxu0
      %v1170 = vadd.f32 0.0, %v1169
      %v1171 = vpop.f32.mrb[0].mxu0
      %1172 = vmatprep.mubr.bf16.mxu0 0
      %1173 = vmatmul.mubr.bf16.gmra.mrb[0].mxu0 %v600
      %v1174 = vpop.f32.mrb[0].mxu0
      %v1175 = vadd.f32 0.0, %v1174
      %v1176 = vpop.f32.mrb[0].mxu0
      %v1177 = vpop.f32.mrb[0].mxu0
      %v1178 = vadd.f32 0.0, %v1177
      %v1179 = vpop.f32.mrb[0].mxu0
      %1180 = vmatprep.mubr.bf16.mxu0 0
      %1181 = vmatmul.mubr.bf16.gmra.mrb[0].mxu0 %v601
      %v1182 = vpop.f32.mrb[0].mxu0
      %v1183 = vadd.f32 0.0, %v1182
      %v1184 = vpop.f32.mrb[0].mxu0
      %v1185 = vpop.f32.mrb[0].mxu0
      %v1186 = vadd.f32 0.0, %v1185
      %v1187 = vpop.f32.mrb[0].mxu0
      %1188 = vmatprep.mubr.bf16.mxu0 0
      %1189 = vmatmul.mubr.bf16.gmra.mrb[0].mxu0 %v602
      %v1190 = vpop.f32.mrb[0].mxu0
      %v1191 = vadd.f32 0.0, %v1190
      %v1192 = vpop.f32.mrb[0].mxu0
      %v1193 = vpop.f32.mrb[0].mxu0
      %v1194 = vadd.f32 0.0, %v1193
      %v1195 = vpop.f32.mrb[0].mxu0
      %1196 = vmatprep.mubr.bf16.mxu0 0
      %1197 = vmatmul.mubr.bf16.gmra.mrb[0].mxu0 %v603
      %v1198 = vpop.f32.mrb[0].mxu0
      %v1199 = vadd.f32 0.0, %v1198
      %v1200 = vpop.f32.mrb[0].mxu0
      %v1201 = vpop.f32.mrb[0].mxu0
      %v1202 = vadd.f32 0.0, %v1201
      %v1203 = vpop.f32.mrb[0].mxu0
      %1204 = vmatprep.mubr.bf16.mxu0 0
      %1205 = vmatmul.mubr.bf16.gmra.mrb[0].mxu0 %v604
      %v1206 = vpop.f32.mrb[0].mxu0
      %v1207 = vadd.f32 0.0, %v1206
      %v1208 = vpop.f32.mrb[0].mxu0
      %v1209 = vpop.f32.mrb[0].mxu0
      %v1210 = vadd.f32 0.0, %v1209
      %v1211 = vpop.f32.mrb[0].mxu0
      %1212 = vmatprep.mubr.bf16.mxu0 0
      %1213 = vmatmul.mubr.bf16.gmra.mrb[0].mxu0 %v605
      %v1214 = vpop.f32.mrb[0].mxu0
      %v1215 = vadd.f32 0.0, %v1214
      %v1216 = vpop.f32.mrb[0].mxu0
      %v1217 = vpop.f32.mrb[0].mxu0
      %v1218 = vadd.f32 0.0, %v1217
      %v1219 = vpop.f32.mrb[0].mxu0
      %1220 = vmatprep.mubr.bf16.mxu0 0
      %1221 = vmatmul.mubr.bf16.gmra.mrb[0].mxu0 %v606
      %v1222 = vpop.f32.mrb[0].mxu0
      %v1223 = vadd.f32 0.0, %v1222
      %v1224 = vpop.f32.mrb[0].mxu0
      %v1225 = vpop.f32.mrb[0].mxu0
      %v1226 = vadd.f32 0.0, %v1225
      %v1227 = vpop.f32.mrb[0].mxu0
      %1228 = vmatprep.mubr.bf16.mxu0 0
      %1229 = vmatmul.mubr.bf16.gmra.mrb[0].mxu0 %v607
      %v1230 = vpop.f32.mrb[0].mxu0
      %v1231 = vadd.f32 0.0, %v1230
      %v1232 = vpop.f32.mrb[0].mxu0
      %v1233 = vpop.f32.mrb[0].mxu0
      %v1234 = vadd.f32 0.0, %v1233
      %v1235 = vpop.f32.mrb[0].mxu0
      %1236 = vmatprep.mubr.bf16.mxu0 0
      %1237 = vmatmul.mubr.bf16.gmra.mrb[0].mxu0 %v608
      %v1238 = vpop.f32.mrb[0].mxu0
      %v1239 = vadd.f32 0.0, %v1238
      %v1240 = vpop.f32.mrb[0].mxu0
      %v1241 = vpop.f32.mrb[0].mxu0
      %v1242 = vadd.f32 0.0, %v1241
      %v1243 = vpop.f32.mrb[0].mxu0
      %1244 = vmatprep.mubr.bf16.mxu0 0
      %1245 = vmatmul.mubr.bf16.gmra.mrb[0].mxu0 %v609
      %v1246 = vpop.f32.mrb[0].mxu0
      %v1247 = vadd.f32 0.0, %v1246
      %v1248 = vpop.f32.mrb[0].mxu0
      %v1249 = vpop.f32.mrb[0].mxu0
      %v1250 = vadd.f32 0.0, %v1249
      %v1251 = vpop.f32.mrb[0].mxu0
      %1252 = vmatprep.mubr.bf16.mxu0 0
      %1253 = vmatmul.mubr.bf16.gmra.mrb[0].mxu0 %v610
      %v1254 = vpop.f32.mrb[0].mxu0
      %v1255 = vadd.f32 0.0, %v1254
      %v1256 = vpop.f32.mrb[0].mxu0
      %v1257 = vpop.f32.mrb[0].mxu0
      %v1258 = vadd.f32 0.0, %v1257
      %v1259 = vpop.f32.mrb[0].mxu0
      %1260 = vmatprep.mubr.bf16.mxu0 0
      %1261 = vmatmul.mubr.bf16.gmra.mrb[0].mxu0 %v611
      %v1262 = vpop.f32.mrb[0].mxu0
      %v1263 = vadd.f32 0.0, %v1262
      %v1264 = vpop.f32.mrb[0].mxu0
      %v1265 = vpop.f32.mrb[0].mxu0
      %v1266 = vadd.f32 0.0, %v1265
      %v1267 = vpop.f32.mrb[0].mxu0
      %1268 = vdwg.mxu0
      %vm1269 = vcmp.gt.f32.partialorder %v759, 0.0
      %vm1270 = vcmp.gt.f32.partialorder %v762, 0.0
      %vm1271 = vcmp.gt.f32.partialorder %v767, 0.0
      %vm1272 = vcmp.gt.f32.partialorder %v770, 0.0
      %vm1273 = vcmp.gt.f32.partialorder %v775, 0.0
      %vm1274 = vcmp.gt.f32.partialorder %v778, 0.0
      %vm1275 = vcmp.gt.f32.partialorder %v783, 0.0
      %vm1276 = vcmp.gt.f32.partialorder %v786, 0.0
      %vm1277 = vcmp.gt.f32.partialorder %v791, 0.0
      %vm1278 = vcmp.gt.f32.partialorder %v794, 0.0
      %vm1279 = vcmp.gt.f32.partialorder %v799, 0.0
      %vm1280 = vcmp.gt.f32.partialorder %v802, 0.0
      %vm1281 = vcmp.gt.f32.partialorder %v807, 0.0
      %vm1282 = vcmp.gt.f32.partialorder %v810, 0.0
      %vm1283 = vcmp.gt.f32.partialorder %v815, 0.0
      %vm1284 = vcmp.gt.f32.partialorder %v818, 0.0
      %vm1285 = vcmp.gt.f32.partialorder %v823, 0.0
      %vm1286 = vcmp.gt.f32.partialorder %v826, 0.0
      %vm1287 = vcmp.gt.f32.partialorder %v831, 0.0
      %vm1288 = vcmp.gt.f32.partialorder %v834, 0.0
      %vm1289 = vcmp.gt.f32.partialorder %v839, 0.0
      %vm1290 = vcmp.gt.f32.partialorder %v842, 0.0
      %vm1291 = vcmp.gt.f32.partialorder %v847, 0.0
      %vm1292 = vcmp.gt.f32.partialorder %v850, 0.0
      %vm1293 = vcmp.gt.f32.partialorder %v855, 0.0
      %vm1294 = vcmp.gt.f32.partialorder %v858, 0.0
      %vm1295 = vcmp.gt.f32.partialorder %v863, 0.0
      %vm1296 = vcmp.gt.f32.partialorder %v866, 0.0
      %vm1297 = vcmp.gt.f32.partialorder %v871, 0.0
      %vm1298 = vcmp.gt.f32.partialorder %v874, 0.0
      %vm1299 = vcmp.gt.f32.partialorder %v879, 0.0
      %vm1300 = vcmp.gt.f32.partialorder %v882, 0.0
      %vm1301 = vcmp.gt.f32.partialorder %v887, 0.0
      %vm1302 = vcmp.gt.f32.partialorder %v890, 0.0
      %vm1303 = vcmp.gt.f32.partialorder %v895, 0.0
      %vm1304 = vcmp.gt.f32.partialorder %v898, 0.0
      %vm1305 = vcmp.gt.f32.partialorder %v903, 0.0
      %vm1306 = vcmp.gt.f32.partialorder %v906, 0.0
      %vm1307 = vcmp.gt.f32.partialorder %v911, 0.0
      %vm1308 = vcmp.gt.f32.partialorder %v914, 0.0
      %vm1309 = vcmp.gt.f32.partialorder %v919, 0.0
      %vm1310 = vcmp.gt.f32.partialorder %v922, 0.0
      %vm1311 = vcmp.gt.f32.partialorder %v927, 0.0
      %vm1312 = vcmp.gt.f32.partialorder %v930, 0.0
      %vm1313 = vcmp.gt.f32.partialorder %v935, 0.0
      %vm1314 = vcmp.gt.f32.partialorder %v938, 0.0
      %vm1315 = vcmp.gt.f32.partialorder %v943, 0.0
      %vm1316 = vcmp.gt.f32.partialorder %v946, 0.0
      %vm1317 = vcmp.gt.f32.partialorder %v951, 0.0
      %vm1318 = vcmp.gt.f32.partialorder %v954, 0.0
      %vm1319 = vcmp.gt.f32.partialorder %v959, 0.0
      %vm1320 = vcmp.gt.f32.partialorder %v962, 0.0
      %vm1321 = vcmp.gt.f32.partialorder %v967, 0.0
      %vm1322 = vcmp.gt.f32.partialorder %v970, 0.0
      %vm1323 = vcmp.gt.f32.partialorder %v975, 0.0
      %vm1324 = vcmp.gt.f32.partialorder %v978, 0.0
      %vm1325 = vcmp.gt.f32.partialorder %v983, 0.0
      %vm1326 = vcmp.gt.f32.partialorder %v986, 0.0
      %vm1327 = vcmp.gt.f32.partialorder %v991, 0.0
      %vm1328 = vcmp.gt.f32.partialorder %v994, 0.0
      %vm1329 = vcmp.gt.f32.partialorder %v999, 0.0
      %vm1330 = vcmp.gt.f32.partialorder %v1002, 0.0
      %vm1331 = vcmp.gt.f32.partialorder %v1007, 0.0
      %vm1332 = vcmp.gt.f32.partialorder %v1010, 0.0
      %vm1333 = vcmp.gt.f32.partialorder %v1015, 0.0
      %vm1334 = vcmp.gt.f32.partialorder %v1018, 0.0
      %vm1335 = vcmp.gt.f32.partialorder %v1023, 0.0
      %vm1336 = vcmp.gt.f32.partialorder %v1026, 0.0
      %vm1337 = vcmp.gt.f32.partialorder %v1031, 0.0
      %vm1338 = vcmp.gt.f32.partialorder %v1034, 0.0
      %vm1339 = vcmp.gt.f32.partialorder %v1039, 0.0
      %vm1340 = vcmp.gt.f32.partialorder %v1042, 0.0
      %vm1341 = vcmp.gt.f32.partialorder %v1047, 0.0
      %vm1342 = vcmp.gt.f32.partialorder %v1050, 0.0
      %vm1343 = vcmp.gt.f32.partialorder %v1055, 0.0
      %vm1344 = vcmp.gt.f32.partialorder %v1058, 0.0
      %vm1345 = vcmp.gt.f32.partialorder %v1063, 0.0
      %vm1346 = vcmp.gt.f32.partialorder %v1066, 0.0
      %vm1347 = vcmp.gt.f32.partialorder %v1071, 0.0
      %vm1348 = vcmp.gt.f32.partialorder %v1074, 0.0
      %vm1349 = vcmp.gt.f32.partialorder %v1079, 0.0
      %vm1350 = vcmp.gt.f32.partialorder %v1082, 0.0
      %vm1351 = vcmp.gt.f32.partialorder %v1087, 0.0
      %vm1352 = vcmp.gt.f32.partialorder %v1090, 0.0
      %vm1353 = vcmp.gt.f32.partialorder %v1095, 0.0
      %vm1354 = vcmp.gt.f32.partialorder %v1098, 0.0
      %vm1355 = vcmp.gt.f32.partialorder %v1103, 0.0
      %vm1356 = vcmp.gt.f32.partialorder %v1106, 0.0
      %vm1357 = vcmp.gt.f32.partialorder %v1111, 0.0
      %vm1358 = vcmp.gt.f32.partialorder %v1114, 0.0
      %vm1359 = vcmp.gt.f32.partialorder %v1119, 0.0
      %vm1360 = vcmp.gt.f32.partialorder %v1122, 0.0
      %vm1361 = vcmp.gt.f32.partialorder %v1127, 0.0
      %vm1362 = vcmp.gt.f32.partialorder %v1130, 0.0
      %vm1363 = vcmp.gt.f32.partialorder %v1135, 0.0
      %vm1364 = vcmp.gt.f32.partialorder %v1138, 0.0
      %vm1365 = vcmp.gt.f32.partialorder %v1143, 0.0
      %vm1366 = vcmp.gt.f32.partialorder %v1146, 0.0
      %vm1367 = vcmp.gt.f32.partialorder %v1151, 0.0
      %vm1368 = vcmp.gt.f32.partialorder %v1154, 0.0
      %vm1369 = vcmp.gt.f32.partialorder %v1159, 0.0
      %vm1370 = vcmp.gt.f32.partialorder %v1162, 0.0
      %vm1371 = vcmp.gt.f32.partialorder %v1167, 0.0
      %vm1372 = vcmp.gt.f32.partialorder %v1170, 0.0
      %vm1373 = vcmp.gt.f32.partialorder %v1175, 0.0
      %vm1374 = vcmp.gt.f32.partialorder %v1178, 0.0
      %vm1375 = vcmp.gt.f32.partialorder %v1183, 0.0
      %vm1376 = vcmp.gt.f32.partialorder %v1186, 0.0
      %vm1377 = vcmp.gt.f32.partialorder %v1191, 0.0
      %vm1378 = vcmp.gt.f32.partialorder %v1194, 0.0
      %vm1379 = vcmp.gt.f32.partialorder %v1199, 0.0
      %vm1380 = vcmp.gt.f32.partialorder %v1202, 0.0
      %vm1381 = vcmp.gt.f32.partialorder %v1207, 0.0
      %vm1382 = vcmp.gt.f32.partialorder %v1210, 0.0
      %vm1383 = vcmp.gt.f32.partialorder %v1215, 0.0
      %vm1384 = vcmp.gt.f32.partialorder %v1218, 0.0
      %vm1385 = vcmp.gt.f32.partialorder %v1223, 0.0
      %vm1386 = vcmp.gt.f32.partialorder %v1226, 0.0
      %vm1387 = vcmp.gt.f32.partialorder %v1231, 0.0
      %vm1388 = vcmp.gt.f32.partialorder %v1234, 0.0
      %vm1389 = vcmp.gt.f32.partialorder %v1239, 0.0
      %vm1390 = vcmp.gt.f32.partialorder %v1242, 0.0
      %vm1391 = vcmp.gt.f32.partialorder %v1247, 0.0
      %vm1392 = vcmp.gt.f32.partialorder %v1250, 0.0
      %vm1393 = vcmp.gt.f32.partialorder %v1255, 0.0
      %vm1394 = vcmp.gt.f32.partialorder %v1258, 0.0
      %vm1395 = vcmp.gt.f32.partialorder %v1263, 0.0
      %vm1396 = vcmp.gt.f32.partialorder %v1266, 0.0
      %v1397 = vmul.f32 %v759, 0.2
      %v1398 = vmul.f32 %v762, 0.2
      %v1399 = vmul.f32 %v767, 0.2
      %v1400 = vmul.f32 %v770, 0.2
      %v1401 = vmul.f32 %v775, 0.2
      %v1402 = vmul.f32 %v778, 0.2
      %v1403 = vmul.f32 %v783, 0.2
      %v1404 = vmul.f32 %v786, 0.2
      %v1405 = vmul.f32 %v791, 0.2
      %v1406 = vmul.f32 %v794, 0.2
      %v1407 = vmul.f32 %v799, 0.2
      %v1408 = vmul.f32 %v802, 0.2
      %v1409 = vmul.f32 %v807, 0.2
      %v1410 = vmul.f32 %v810, 0.2
      %v1411 = vmul.f32 %v815, 0.2
      %v1412 = vmul.f32 %v818, 0.2
      %v1413 = vmul.f32 %v823, 0.2
      %v1414 = vmul.f32 %v826, 0.2
      %v1415 = vmul.f32 %v831, 0.2
      %v1416 = vmul.f32 %v834, 0.2
      %v1417 = vmul.f32 %v839, 0.2
      %v1418 = vmul.f32 %v842, 0.2
      %v1419 = vmul.f32 %v847, 0.2
      %v1420 = vmul.f32 %v850, 0.2
      %v1421 = vmul.f32 %v855, 0.2
      %v1422 = vmul.f32 %v858, 0.2
      %v1423 = vmul.f32 %v863, 0.2
      %v1424 = vmul.f32 %v866, 0.2
      %v1425 = vmul.f32 %v871, 0.2
      %v1426 = vmul.f32 %v874, 0.2
      %v1427 = vmul.f32 %v879, 0.2
      %v1428 = vmul.f32 %v882, 0.2
      %v1429 = vmul.f32 %v887, 0.2
      %v1430 = vmul.f32 %v890, 0.2
      %v1431 = vmul.f32 %v895, 0.2
      %v1432 = vmul.f32 %v898, 0.2
      %v1433 = vmul.f32 %v903, 0.2
      %v1434 = vmul.f32 %v906, 0.2
      %v1435 = vmul.f32 %v911, 0.2
      %v1436 = vmul.f32 %v914, 0.2
      %v1437 = vmul.f32 %v919, 0.2
      %v1438 = vmul.f32 %v922, 0.2
      %v1439 = vmul.f32 %v927, 0.2
      %v1440 = vmul.f32 %v930, 0.2
      %v1441 = vmul.f32 %v935, 0.2
      %v1442 = vmul.f32 %v938, 0.2
      %v1443 = vmul.f32 %v943, 0.2
      %v1444 = vmul.f32 %v946, 0.2
      %v1445 = vmul.f32 %v951, 0.2
      %v1446 = vmul.f32 %v954, 0.2
      %v1447 = vmul.f32 %v959, 0.2
      %v1448 = vmul.f32 %v962, 0.2
      %v1449 = vmul.f32 %v967, 0.2
      %v1450 = vmul.f32 %v970, 0.2
      %v1451 = vmul.f32 %v975, 0.2
      %v1452 = vmul.f32 %v978, 0.2
      %v1453 = vmul.f32 %v983, 0.2
      %v1454 = vmul.f32 %v986, 0.2
      %v1455 = vmul.f32 %v991, 0.2
      %v1456 = vmul.f32 %v994, 0.2
      %v1457 = vmul.f32 %v999, 0.2
      %v1458 = vmul.f32 %v1002, 0.2
      %v1459 = vmul.f32 %v1007, 0.2
      %v1460 = vmul.f32 %v1010, 0.2
      %v1461 = vmul.f32 %v1015, 0.2
      %v1462 = vmul.f32 %v1018, 0.2
      %v1463 = vmul.f32 %v1023, 0.2
      %v1464 = vmul.f32 %v1026, 0.2
      %v1465 = vmul.f32 %v1031, 0.2
      %v1466 = vmul.f32 %v1034, 0.2
      %v1467 = vmul.f32 %v1039, 0.2
      %v1468 = vmul.f32 %v1042, 0.2
      %v1469 = vmul.f32 %v1047, 0.2
      %v1470 = vmul.f32 %v1050, 0.2
      %v1471 = vmul.f32 %v1055, 0.2
      %v1472 = vmul.f32 %v1058, 0.2
      %v1473 = vmul.f32 %v1063, 0.2
      %v1474 = vmul.f32 %v1066, 0.2
      %v1475 = vmul.f32 %v1071, 0.2
      %v1476 = vmul.f32 %v1074, 0.2
      %v1477 = vmul.f32 %v1079, 0.2
      %v1478 = vmul.f32 %v1082, 0.2
      %v1479 = vmul.f32 %v1087, 0.2
      %v1480 = vmul.f32 %v1090, 0.2
      %v1481 = vmul.f32 %v1095, 0.2
      %v1482 = vmul.f32 %v1098, 0.2
      %v1483 = vmul.f32 %v1103, 0.2
      %v1484 = vmul.f32 %v1106, 0.2
      %v1485 = vmul.f32 %v1111, 0.2
      %v1486 = vmul.f32 %v1114, 0.2
      %v1487 = vmul.f32 %v1119, 0.2
      %v1488 = vmul.f32 %v1122, 0.2
      %v1489 = vmul.f32 %v1127, 0.2
      %v1490 = vmul.f32 %v1130, 0.2
      %v1491 = vmul.f32 %v1135, 0.2
      %v1492 = vmul.f32 %v1138, 0.2
      %v1493 = vmul.f32 %v1143, 0.2
      %v1494 = vmul.f32 %v1146, 0.2
      %v1495 = vmul.f32 %v1151, 0.2
      %v1496 = vmul.f32 %v1154, 0.2
      %v1497 = vmul.f32 %v1159, 0.2
      %v1498 = vmul.f32 %v1162, 0.2
      %v1499 = vmul.f32 %v1167, 0.2
      %v1500 = vmul.f32 %v1170, 0.2
      %v1501 = vmul.f32 %v1175, 0.2
      %v1502 = vmul.f32 %v1178, 0.2
      %v1503 = vmul.f32 %v1183, 0.2
      %v1504 = vmul.f32 %v1186, 0.2
      %v1505 = vmul.f32 %v1191, 0.2
      %v1506 = vmul.f32 %v1194, 0.2
      %v1507 = vmul.f32 %v1199, 0.2
      %v1508 = vmul.f32 %v1202, 0.2
      %v1509 = vmul.f32 %v1207, 0.2
      %v1510 = vmul.f32 %v1210, 0.2
      %v1511 = vmul.f32 %v1215, 0.2
      %v1512 = vmul.f32 %v1218, 0.2
      %v1513 = vmul.f32 %v1223, 0.2
      %v1514 = vmul.f32 %v1226, 0.2
      %v1515 = vmul.f32 %v1231, 0.2
      %v1516 = vmul.f32 %v1234, 0.2
      %v1517 = vmul.f32 %v1239, 0.2
      %v1518 = vmul.f32 %v1242, 0.2
      %v1519 = vmul.f32 %v1247, 0.2
      %v1520 = vmul.f32 %v1250, 0.2
      %v1521 = vmul.f32 %v1255, 0.2
      %v1522 = vmul.f32 %v1258, 0.2
      %v1523 = vmul.f32 %v1263, 0.2
      %v1524 = vmul.f32 %v1266, 0.2
      %v1525 = vsel %vm1269, %v759, %v1397
      %v1526 = vsel %vm1270, %v762, %v1398
      %v1527 = vsel %vm1271, %v767, %v1399
      %v1528 = vsel %vm1272, %v770, %v1400
      %v1529 = vsel %vm1273, %v775, %v1401
      %v1530 = vsel %vm1274, %v778, %v1402
      %v1531 = vsel %vm1275, %v783, %v1403
      %v1532 = vsel %vm1276, %v786, %v1404
      %v1533 = vsel %vm1277, %v791, %v1405
      %v1534 = vsel %vm1278, %v794, %v1406
      %v1535 = vsel %vm1279, %v799, %v1407
      %v1536 = vsel %vm1280, %v802, %v1408
      %v1537 = vsel %vm1281, %v807, %v1409
      %v1538 = vsel %vm1282, %v810, %v1410
      %v1539 = vsel %vm1283, %v815, %v1411
      %v1540 = vsel %vm1284, %v818, %v1412
      %v1541 = vsel %vm1285, %v823, %v1413
      %v1542 = vsel %vm1286, %v826, %v1414
      %v1543 = vsel %vm1287, %v831, %v1415
      %v1544 = vsel %vm1288, %v834, %v1416
      %v1545 = vsel %vm1289, %v839, %v1417
      %v1546 = vsel %vm1290, %v842, %v1418
      %v1547 = vsel %vm1291, %v847, %v1419
      %v1548 = vsel %vm1292, %v850, %v1420
      %v1549 = vsel %vm1293, %v855, %v1421
      %v1550 = vsel %vm1294, %v858, %v1422
      %v1551 = vsel %vm1295, %v863, %v1423
      %v1552 = vsel %vm1296, %v866, %v1424
      %v1553 = vsel %vm1297, %v871, %v1425
      %v1554 = vsel %vm1298, %v874, %v1426
      %v1555 = vsel %vm1299, %v879, %v1427
      %v1556 = vsel %vm1300, %v882, %v1428
      %v1557 = vsel %vm1301, %v887, %v1429
      %v1558 = vsel %vm1302, %v890, %v1430
      %v1559 = vsel %vm1303, %v895, %v1431
      %v1560 = vsel %vm1304, %v898, %v1432
      %v1561 = vsel %vm1305, %v903, %v1433
      %v1562 = vsel %vm1306, %v906, %v1434
      %v1563 = vsel %vm1307, %v911, %v1435
      %v1564 = vsel %vm1308, %v914, %v1436
      %v1565 = vsel %vm1309, %v919, %v1437
      %v1566 = vsel %vm1310, %v922, %v1438
      %v1567 = vsel %vm1311, %v927, %v1439
      %v1568 = vsel %vm1312, %v930, %v1440
      %v1569 = vsel %vm1313, %v935, %v1441
      %v1570 = vsel %vm1314, %v938, %v1442
      %v1571 = vsel %vm1315, %v943, %v1443
      %v1572 = vsel %vm1316, %v946, %v1444
      %v1573 = vsel %vm1317, %v951, %v1445
      %v1574 = vsel %vm1318, %v954, %v1446
      %v1575 = vsel %vm1319, %v959, %v1447
      %v1576 = vsel %vm1320, %v962, %v1448
      %v1577 = vsel %vm1321, %v967, %v1449
      %v1578 = vsel %vm1322, %v970, %v1450
      %v1579 = vsel %vm1323, %v975, %v1451
      %v1580 = vsel %vm1324, %v978, %v1452
      %v1581 = vsel %vm1325, %v983, %v1453
      %v1582 = vsel %vm1326, %v986, %v1454
      %v1583 = vsel %vm1327, %v991, %v1455
      %v1584 = vsel %vm1328, %v994, %v1456
      %v1585 = vsel %vm1329, %v999, %v1457
      %v1586 = vsel %vm1330, %v1002, %v1458
      %v1587 = vsel %vm1331, %v1007, %v1459
      %v1588 = vsel %vm1332, %v1010, %v1460
      %v1589 = vsel %vm1333, %v1015, %v1461
      %v1590 = vsel %vm1334, %v1018, %v1462
      %v1591 = vsel %vm1335, %v1023, %v1463
      %v1592 = vsel %vm1336, %v1026, %v1464
      %v1593 = vsel %vm1337, %v1031, %v1465
      %v1594 = vsel %vm1338, %v1034, %v1466
      %v1595 = vsel %vm1339, %v1039, %v1467
      %v1596 = vsel %vm1340, %v1042, %v1468
      %v1597 = vsel %vm1341, %v1047, %v1469
      %v1598 = vsel %vm1342, %v1050, %v1470
      %v1599 = vsel %vm1343, %v1055, %v1471
      %v1600 = vsel %vm1344, %v1058, %v1472
      %v1601 = vsel %vm1345, %v1063, %v1473
      %v1602 = vsel %vm1346, %v1066, %v1474
      %v1603 = vsel %vm1347, %v1071, %v1475
      %v1604 = vsel %vm1348, %v1074, %v1476
      %v1605 = vsel %vm1349, %v1079, %v1477
      %v1606 = vsel %vm1350, %v1082, %v1478
      %v1607 = vsel %vm1351, %v1087, %v1479
      %v1608 = vsel %vm1352, %v1090, %v1480
      %v1609 = vsel %vm1353, %v1095, %v1481
      %v1610 = vsel %vm1354, %v1098, %v1482
      %v1611 = vsel %vm1355, %v1103, %v1483
      %v1612 = vsel %vm1356, %v1106, %v1484
      %v1613 = vsel %vm1357, %v1111, %v1485
      %v1614 = vsel %vm1358, %v1114, %v1486
      %v1615 = vsel %vm1359, %v1119, %v1487
      %v1616 = vsel %vm1360, %v1122, %v1488
      %v1617 = vsel %vm1361, %v1127, %v1489
      %v1618 = vsel %vm1362, %v1130, %v1490
      %v1619 = vsel %vm1363, %v1135, %v1491
      %v1620 = vsel %vm1364, %v1138, %v1492
      %v1621 = vsel %vm1365, %v1143, %v1493
      %v1622 = vsel %vm1366, %v1146, %v1494
      %v1623 = vsel %vm1367, %v1151, %v1495
      %v1624 = vsel %vm1368, %v1154, %v1496
      %v1625 = vsel %vm1369, %v1159, %v1497
      %v1626 = vsel %vm1370, %v1162, %v1498
      %v1627 = vsel %vm1371, %v1167, %v1499
      %v1628 = vsel %vm1372, %v1170, %v1500
      %v1629 = vsel %vm1373, %v1175, %v1501
      %v1630 = vsel %vm1374, %v1178, %v1502
      %v1631 = vsel %vm1375, %v1183, %v1503
      %v1632 = vsel %vm1376, %v1186, %v1504
      %v1633 = vsel %vm1377, %v1191, %v1505
      %v1634 = vsel %vm1378, %v1194, %v1506
      %v1635 = vsel %vm1379, %v1199, %v1507
      %v1636 = vsel %vm1380, %v1202, %v1508
      %v1637 = vsel %vm1381, %v1207, %v1509
      %v1638 = vsel %vm1382, %v1210, %v1510
      %v1639 = vsel %vm1383, %v1215, %v1511
      %v1640 = vsel %vm1384, %v1218, %v1512
      %v1641 = vsel %vm1385, %v1223, %v1513
      %v1642 = vsel %vm1386, %v1226, %v1514
      %v1643 = vsel %vm1387, %v1231, %v1515
      %v1644 = vsel %vm1388, %v1234, %v1516
      %v1645 = vsel %vm1389, %v1239, %v1517
      %v1646 = vsel %vm1390, %v1242, %v1518
      %v1647 = vsel %vm1391, %v1247, %v1519
      %v1648 = vsel %vm1392, %v1250, %v1520
      %v1649 = vsel %vm1393, %v1255, %v1521
      %v1650 = vsel %vm1394, %v1258, %v1522
      %v1651 = vsel %vm1395, %v1263, %v1523
      %v1652 = vsel %vm1396, %v1266, %v1524
      %v1653 = vpack.c.bf16 %v1526, %v1525
      %v1654 = vpack.c.bf16 %v1528, %v1527
      %v1655 = vpack.c.bf16 %v1530, %v1529
      %v1656 = vpack.c.bf16 %v1532, %v1531
      %v1657 = vpack.c.bf16 %v1534, %v1533
      %v1658 = vpack.c.bf16 %v1536, %v1535
      %v1659 = vpack.c.bf16 %v1538, %v1537
      %v1660 = vpack.c.bf16 %v1540, %v1539
      %v1661 = vpack.c.bf16 %v1542, %v1541
      %v1662 = vpack.c.bf16 %v1544, %v1543
      %v1663 = vpack.c.bf16 %v1546, %v1545
      %v1664 = vpack.c.bf16 %v1548, %v1547
      %v1665 = vpack.c.bf16 %v1550, %v1549
      %v1666 = vpack.c.bf16 %v1552, %v1551
      %v1667 = vpack.c.bf16 %v1554, %v1553
      %v1668 = vpack.c.bf16 %v1556, %v1555
      %v1669 = vpack.c.bf16 %v1558, %v1557
      %v1670 = vpack.c.bf16 %v1560, %v1559
      %v1671 = vpack.c.bf16 %v1562, %v1561
      %v1672 = vpack.c.bf16 %v1564, %v1563
      %v1673 = vpack.c.bf16 %v1566, %v1565
      %v1674 = vpack.c.bf16 %v1568, %v1567
      %v1675 = vpack.c.bf16 %v1570, %v1569
      %v1676 = vpack.c.bf16 %v1572, %v1571
      %v1677 = vpack.c.bf16 %v1574, %v1573
      %v1678 = vpack.c.bf16 %v1576, %v1575
      %v1679 = vpack.c.bf16 %v1578, %v1577
      %v1680 = vpack.c.bf16 %v1580, %v1579
      %v1681 = vpack.c.bf16 %v1582, %v1581
      %v1682 = vpack.c.bf16 %v1584, %v1583
      %v1683 = vpack.c.bf16 %v1586, %v1585
      %v1684 = vpack.c.bf16 %v1588, %v1587
      %v1685 = vpack.c.bf16 %v1590, %v1589
      %v1686 = vpack.c.bf16 %v1592, %v1591
      %v1687 = vpack.c.bf16 %v1594, %v1593
      %v1688 = vpack.c.bf16 %v1596, %v1595
      %v1689 = vpack.c.bf16 %v1598, %v1597
      %v1690 = vpack.c.bf16 %v1600, %v1599
      %v1691 = vpack.c.bf16 %v1602, %v1601
      %v1692 = vpack.c.bf16 %v1604, %v1603
      %v1693 = vpack.c.bf16 %v1606, %v1605
      %v1694 = vpack.c.bf16 %v1608, %v1607
      %v1695 = vpack.c.bf16 %v1610, %v1609
      %v1696 = vpack.c.bf16 %v1612, %v1611
      %v1697 = vpack.c.bf16 %v1614, %v1613
      %v1698 = vpack.c.bf16 %v1616, %v1615
      %v1699 = vpack.c.bf16 %v1618, %v1617
      %v1700 = vpack.c.bf16 %v1620, %v1619
      %v1701 = vpack.c.bf16 %v1622, %v1621
      %v1702 = vpack.c.bf16 %v1624, %v1623
      %v1703 = vpack.c.bf16 %v1626, %v1625
      %v1704 = vpack.c.bf16 %v1628, %v1627
      %v1705 = vpack.c.bf16 %v1630, %v1629
      %v1706 = vpack.c.bf16 %v1632, %v1631
      %v1707 = vpack.c.bf16 %v1634, %v1633
      %v1708 = vpack.c.bf16 %v1636, %v1635
      %v1709 = vpack.c.bf16 %v1638, %v1637
      %v1710 = vpack.c.bf16 %v1640, %v1639
      %v1711 = vpack.c.bf16 %v1642, %v1641
      %v1712 = vpack.c.bf16 %v1644, %v1643
      %v1713 = vpack.c.bf16 %v1646, %v1645
      %v1714 = vpack.c.bf16 %v1648, %v1647
      %v1715 = vpack.c.bf16 %v1650, %v1649
      %v1716 = vpack.c.bf16 %v1652, %v1651
      %v1781 = vunpack.c.l.b16 %v1653
      %v1782 = vunpack.c.h.b16 %v1653
      %v1783 = vunpack.c.l.b16 %v1654
      %v1784 = vunpack.c.h.b16 %v1654
      %v1785 = vunpack.c.l.b16 %v1655
      %v1786 = vunpack.c.h.b16 %v1655
      %v1787 = vunpack.c.l.b16 %v1656
      %v1788 = vunpack.c.h.b16 %v1656
      %v1789 = vunpack.c.l.b16 %v1657
      %v1790 = vunpack.c.h.b16 %v1657
      %v1791 = vunpack.c.l.b16 %v1658
      %v1792 = vunpack.c.h.b16 %v1658
      %v1793 = vunpack.c.l.b16 %v1659
      %v1794 = vunpack.c.h.b16 %v1659
      %v1795 = vunpack.c.l.b16 %v1660
      %v1796 = vunpack.c.h.b16 %v1660
      %v1797 = vunpack.c.l.b16 %v1661
      %v1798 = vunpack.c.h.b16 %v1661
      %v1799 = vunpack.c.l.b16 %v1662
      %v1800 = vunpack.c.h.b16 %v1662
      %v1801 = vunpack.c.l.b16 %v1663
      %v1802 = vunpack.c.h.b16 %v1663
      %v1803 = vunpack.c.l.b16 %v1664
      %v1804 = vunpack.c.h.b16 %v1664
      %v1805 = vunpack.c.l.b16 %v1665
      %v1806 = vunpack.c.h.b16 %v1665
      %v1807 = vunpack.c.l.b16 %v1666
      %v1808 = vunpack.c.h.b16 %v1666
      %v1809 = vunpack.c.l.b16 %v1667
      %v1810 = vunpack.c.h.b16 %v1667
      %v1811 = vunpack.c.l.b16 %v1668
      %v1812 = vunpack.c.h.b16 %v1668
      %v1813 = vunpack.c.l.b16 %v1669
      %v1814 = vunpack.c.h.b16 %v1669
      %v1815 = vunpack.c.l.b16 %v1670
      %v1816 = vunpack.c.h.b16 %v1670
      %v1817 = vunpack.c.l.b16 %v1671
      %v1818 = vunpack.c.h.b16 %v1671
      %v1819 = vunpack.c.l.b16 %v1672
      %v1820 = vunpack.c.h.b16 %v1672
      %v1821 = vunpack.c.l.b16 %v1673
      %v1822 = vunpack.c.h.b16 %v1673
      %v1823 = vunpack.c.l.b16 %v1674
      %v1824 = vunpack.c.h.b16 %v1674
      %v1825 = vunpack.c.l.b16 %v1675
      %v1826 = vunpack.c.h.b16 %v1675
      %v1827 = vunpack.c.l.b16 %v1676
      %v1828 = vunpack.c.h.b16 %v1676
      %v1829 = vunpack.c.l.b16 %v1677
      %v1830 = vunpack.c.h.b16 %v1677
      %v1831 = vunpack.c.l.b16 %v1678
      %v1832 = vunpack.c.h.b16 %v1678
      %v1833 = vunpack.c.l.b16 %v1679
      %v1834 = vunpack.c.h.b16 %v1679
      %v1835 = vunpack.c.l.b16 %v1680
      %v1836 = vunpack.c.h.b16 %v1680
      %v1837 = vunpack.c.l.b16 %v1681
      %v1838 = vunpack.c.h.b16 %v1681
      %v1839 = vunpack.c.l.b16 %v1682
      %v1840 = vunpack.c.h.b16 %v1682
      %v1841 = vunpack.c.l.b16 %v1683
      %v1842 = vunpack.c.h.b16 %v1683
      %v1843 = vunpack.c.l.b16 %v1684
      %v1844 = vunpack.c.h.b16 %v1684
      %v1845 = vunpack.c.l.b16 %v1685
      %v1846 = vunpack.c.h.b16 %v1685
      %v1847 = vunpack.c.l.b16 %v1686
      %v1848 = vunpack.c.h.b16 %v1686
      %v1849 = vunpack.c.l.b16 %v1687
      %v1850 = vunpack.c.h.b16 %v1687
      %v1851 = vunpack.c.l.b16 %v1688
      %v1852 = vunpack.c.h.b16 %v1688
      %v1853 = vunpack.c.l.b16 %v1689
      %v1854 = vunpack.c.h.b16 %v1689
      %v1855 = vunpack.c.l.b16 %v1690
      %v1856 = vunpack.c.h.b16 %v1690
      %v1857 = vunpack.c.l.b16 %v1691
      %v1858 = vunpack.c.h.b16 %v1691
      %v1859 = vunpack.c.l.b16 %v1692
      %v1860 = vunpack.c.h.b16 %v1692
      %v1861 = vunpack.c.l.b16 %v1693
      %v1862 = vunpack.c.h.b16 %v1693
      %v1863 = vunpack.c.l.b16 %v1694
      %v1864 = vunpack.c.h.b16 %v1694
      %v1865 = vunpack.c.l.b16 %v1695
      %v1866 = vunpack.c.h.b16 %v1695
      %v1867 = vunpack.c.l.b16 %v1696
      %v1868 = vunpack.c.h.b16 %v1696
      %v1869 = vunpack.c.l.b16 %v1697
      %v1870 = vunpack.c.h.b16 %v1697
      %v1871 = vunpack.c.l.b16 %v1698
      %v1872 = vunpack.c.h.b16 %v1698
      %v1873 = vunpack.c.l.b16 %v1699
      %v1874 = vunpack.c.h.b16 %v1699
      %v1875 = vunpack.c.l.b16 %v1700
      %v1876 = vunpack.c.h.b16 %v1700
      %v1877 = vunpack.c.l.b16 %v1701
      %v1878 = vunpack.c.h.b16 %v1701
      %v1879 = vunpack.c.l.b16 %v1702
      %v1880 = vunpack.c.h.b16 %v1702
      %v1881 = vunpack.c.l.b16 %v1703
      %v1882 = vunpack.c.h.b16 %v1703
      %v1883 = vunpack.c.l.b16 %v1704
      %v1884 = vunpack.c.h.b16 %v1704
      %v1885 = vunpack.c.l.b16 %v1705
      %v1886 = vunpack.c.h.b16 %v1705
      %v1887 = vunpack.c.l.b16 %v1706
      %v1888 = vunpack.c.h.b16 %v1706
      %v1889 = vunpack.c.l.b16 %v1707
      %v1890 = vunpack.c.h.b16 %v1707
      %v1891 = vunpack.c.l.b16 %v1708
      %v1892 = vunpack.c.h.b16 %v1708
      %v1893 = vunpack.c.l.b16 %v1709
      %v1894 = vunpack.c.h.b16 %v1709
      %v1895 = vunpack.c.l.b16 %v1710
      %v1896 = vunpack.c.h.b16 %v1710
      %v1897 = vunpack.c.l.b16 %v1711
      %v1898 = vunpack.c.h.b16 %v1711
      %v1899 = vunpack.c.l.b16 %v1712
      %v1900 = vunpack.c.h.b16 %v1712
      %v1901 = vunpack.c.l.b16 %v1713
      %v1902 = vunpack.c.h.b16 %v1713
      %v1903 = vunpack.c.l.b16 %v1714
      %v1904 = vunpack.c.h.b16 %v1714
      %v1905 = vunpack.c.l.b16 %v1715
      %v1906 = vunpack.c.h.b16 %v1715
      %v1907 = vunpack.c.l.b16 %v1716
      %v1908 = vunpack.c.h.b16 %v1716
      %v1909 = vpack.c.b16 %v1781, %v1781
      %v1910 = vpack.c.b16 %v1782, %v1782
      %v1911 = vpack.c.b16 %v1783, %v1783
      %v1912 = vpack.c.b16 %v1784, %v1784
      %v1913 = vpack.c.b16 %v1785, %v1785
      %v1914 = vpack.c.b16 %v1786, %v1786
      %v1915 = vpack.c.b16 %v1787, %v1787
      %v1916 = vpack.c.b16 %v1788, %v1788
      %v1917 = vpack.c.b16 %v1789, %v1789
      %v1918 = vpack.c.b16 %v1790, %v1790
      %v1919 = vpack.c.b16 %v1791, %v1791
      %v1920 = vpack.c.b16 %v1792, %v1792
      %v1921 = vpack.c.b16 %v1793, %v1793
      %v1922 = vpack.c.b16 %v1794, %v1794
      %v1923 = vpack.c.b16 %v1795, %v1795
      %v1924 = vpack.c.b16 %v1796, %v1796
      %v1925 = vpack.c.b16 %v1797, %v1797
      %v1926 = vpack.c.b16 %v1798, %v1798
      %v1927 = vpack.c.b16 %v1799, %v1799
      %v1928 = vpack.c.b16 %v1800, %v1800
      %v1929 = vpack.c.b16 %v1801, %v1801
      %v1930 = vpack.c.b16 %v1802, %v1802
      %v1931 = vpack.c.b16 %v1803, %v1803
      %v1932 = vpack.c.b16 %v1804, %v1804
      %v1933 = vpack.c.b16 %v1805, %v1805
      %v1934 = vpack.c.b16 %v1806, %v1806
      %v1935 = vpack.c.b16 %v1807, %v1807
      %v1936 = vpack.c.b16 %v1808, %v1808
      %v1937 = vpack.c.b16 %v1809, %v1809
      %v1938 = vpack.c.b16 %v1810, %v1810
      %v1939 = vpack.c.b16 %v1811, %v1811
      %v1940 = vpack.c.b16 %v1812, %v1812
      %v1941 = vpack.c.b16 %v1813, %v1813
      %v1942 = vpack.c.b16 %v1814, %v1814
      %v1943 = vpack.c.b16 %v1815, %v1815
      %v1944 = vpack.c.b16 %v1816, %v1816
      %v1945 = vpack.c.b16 %v1817, %v1817
      %v1946 = vpack.c.b16 %v1818, %v1818
      %v1947 = vpack.c.b16 %v1819, %v1819
      %v1948 = vpack.c.b16 %v1820, %v1820
      %v1949 = vpack.c.b16 %v1821, %v1821
      %v1950 = vpack.c.b16 %v1822, %v1822
      %v1951 = vpack.c.b16 %v1823, %v1823
      %v1952 = vpack.c.b16 %v1824, %v1824
      %v1953 = vpack.c.b16 %v1825, %v1825
      %v1954 = vpack.c.b16 %v1826, %v1826
      %v1955 = vpack.c.b16 %v1827, %v1827
      %v1956 = vpack.c.b16 %v1828, %v1828
      %v1957 = vpack.c.b16 %v1829, %v1829
      %v1958 = vpack.c.b16 %v1830, %v1830
      %v1959 = vpack.c.b16 %v1831, %v1831
      %v1960 = vpack.c.b16 %v1832, %v1832
      %v1961 = vpack.c.b16 %v1833, %v1833
      %v1962 = vpack.c.b16 %v1834, %v1834
      %v1963 = vpack.c.b16 %v1835, %v1835
      %v1964 = vpack.c.b16 %v1836, %v1836
      %v1965 = vpack.c.b16 %v1837, %v1837
      %v1966 = vpack.c.b16 %v1838, %v1838
      %v1967 = vpack.c.b16 %v1839, %v1839
      %v1968 = vpack.c.b16 %v1840, %v1840
      %v1969 = vpack.c.b16 %v1841, %v1841
      %v1970 = vpack.c.b16 %v1842, %v1842
      %v1971 = vpack.c.b16 %v1843, %v1843
      %v1972 = vpack.c.b16 %v1844, %v1844
      %v1973 = vpack.c.b16 %v1845, %v1845
      %v1974 = vpack.c.b16 %v1846, %v1846
      %v1975 = vpack.c.b16 %v1847, %v1847
      %v1976 = vpack.c.b16 %v1848, %v1848
      %v1977 = vpack.c.b16 %v1849, %v1849
      %v1978 = vpack.c.b16 %v1850, %v1850
      %v1979 = vpack.c.b16 %v1851, %v1851
      %v1980 = vpack.c.b16 %v1852, %v1852
      %v1981 = vpack.c.b16 %v1853, %v1853
      %v1982 = vpack.c.b16 %v1854, %v1854
      %v1983 = vpack.c.b16 %v1855, %v1855
      %v1984 = vpack.c.b16 %v1856, %v1856
      %v1985 = vpack.c.b16 %v1857, %v1857
      %v1986 = vpack.c.b16 %v1858, %v1858
      %v1987 = vpack.c.b16 %v1859, %v1859
      %v1988 = vpack.c.b16 %v1860, %v1860
      %v1989 = vpack.c.b16 %v1861, %v1861
      %v1990 = vpack.c.b16 %v1862, %v1862
      %v1991 = vpack.c.b16 %v1863, %v1863
      %v1992 = vpack.c.b16 %v1864, %v1864
      %v1993 = vpack.c.b16 %v1865, %v1865
      %v1994 = vpack.c.b16 %v1866, %v1866
      %v1995 = vpack.c.b16 %v1867, %v1867
      %v1996 = vpack.c.b16 %v1868, %v1868
      %v1997 = vpack.c.b16 %v1869, %v1869
      %v1998 = vpack.c.b16 %v1870, %v1870
      %v1999 = vpack.c.b16 %v1871, %v1871
      %v2000 = vpack.c.b16 %v1872, %v1872
      %v2001 = vpack.c.b16 %v1873, %v1873
      %v2002 = vpack.c.b16 %v1874, %v1874
      %v2003 = vpack.c.b16 %v1875, %v1875
      %v2004 = vpack.c.b16 %v1876, %v1876
      %v2005 = vpack.c.b16 %v1877, %v1877
      %v2006 = vpack.c.b16 %v1878, %v1878
      %v2007 = vpack.c.b16 %v1879, %v1879
      %v2008 = vpack.c.b16 %v1880, %v1880
      %v2009 = vpack.c.b16 %v1881, %v1881
      %v2010 = vpack.c.b16 %v1882, %v1882
      %v2011 = vpack.c.b16 %v1883, %v1883
      %v2012 = vpack.c.b16 %v1884, %v1884
      %v2013 = vpack.c.b16 %v1885, %v1885
      %v2014 = vpack.c.b16 %v1886, %v1886
      %v2015 = vpack.c.b16 %v1887, %v1887
      %v2016 = vpack.c.b16 %v1888, %v1888
      %v2017 = vpack.c.b16 %v1889, %v1889
      %v2018 = vpack.c.b16 %v1890, %v1890
      %v2019 = vpack.c.b16 %v1891, %v1891
      %v2020 = vpack.c.b16 %v1892, %v1892
      %v2021 = vpack.c.b16 %v1893, %v1893
      %v2022 = vpack.c.b16 %v1894, %v1894
      %v2023 = vpack.c.b16 %v1895, %v1895
      %v2024 = vpack.c.b16 %v1896, %v1896
      %v2025 = vpack.c.b16 %v1897, %v1897
      %v2026 = vpack.c.b16 %v1898, %v1898
      %v2027 = vpack.c.b16 %v1899, %v1899
      %v2028 = vpack.c.b16 %v1900, %v1900
      %v2029 = vpack.c.b16 %v1901, %v1901
      %v2030 = vpack.c.b16 %v1902, %v1902
      %v2031 = vpack.c.b16 %v1903, %v1903
      %v2032 = vpack.c.b16 %v1904, %v1904
      %v2033 = vpack.c.b16 %v1905, %v1905
      %v2034 = vpack.c.b16 %v1906, %v1906
      %v2035 = vpack.c.b16 %v1907, %v1907
      %v2036 = vpack.c.b16 %v1908, %v1908
      %2165 = vst [vmem:[%s145] sm:$0xf] %v1909
      %2166 = vst [vmem:[%s145 + $0x4] sm:$0xf] %v1910
      %2167 = vst [vmem:[%s145 + $0x8] sm:$0xf] %v1911
      %2168 = vst [vmem:[%s145 + $0xc] sm:$0xf] %v1912
      %2169 = vst [vmem:[%s145 + $0x10] sm:$0xf] %v1913
      %2170 = vst [vmem:[%s145 + $0x14] sm:$0xf] %v1914
      %2171 = vst [vmem:[%s145 + $0x18] sm:$0xf] %v1915
      %2172 = vst [vmem:[%s145 + $0x1c] sm:$0xf] %v1916
      %2173 = vst [vmem:[%s145 + $0x20] sm:$0xf] %v1917
      %2174 = vst [vmem:[%s145 + $0x24] sm:$0xf] %v1918
      %2175 = vst [vmem:[%s145 + $0x28] sm:$0xf] %v1919
      %2176 = vst [vmem:[%s145 + $0x2c] sm:$0xf] %v1920
      %2177 = vst [vmem:[%s145 + $0x30] sm:$0xf] %v1921
      %2178 = vst [vmem:[%s145 + $0x34] sm:$0xf] %v1922
      %2179 = vst [vmem:[%s145 + $0x38] sm:$0xf] %v1923
      %2180 = vst [vmem:[%s145 + $0x3c] sm:$0xf] %v1924
      %2181 = vst [vmem:[%s145 + $0x40] sm:$0xf] %v1925
      %2182 = vst [vmem:[%s145 + $0x44] sm:$0xf] %v1926
      %2183 = vst [vmem:[%s145 + $0x48] sm:$0xf] %v1927
      %2184 = vst [vmem:[%s145 + $0x4c] sm:$0xf] %v1928
      %2185 = vst [vmem:[%s145 + $0x50] sm:$0xf] %v1929
      %2186 = vst [vmem:[%s145 + $0x54] sm:$0xf] %v1930
      %2187 = vst [vmem:[%s145 + $0x58] sm:$0xf] %v1931
      %2188 = vst [vmem:[%s145 + $0x5c] sm:$0xf] %v1932
      %2189 = vst [vmem:[%s145 + $0x60] sm:$0xf] %v1933
      %2190 = vst [vmem:[%s145 + $0x64] sm:$0xf] %v1934
      %2191 = vst [vmem:[%s145 + $0x68] sm:$0xf] %v1935
      %2192 = vst [vmem:[%s145 + $0x6c] sm:$0xf] %v1936
      %2193 = vst [vmem:[%s145 + $0x70] sm:$0xf] %v1937
      %2194 = vst [vmem:[%s145 + $0x74] sm:$0xf] %v1938
      %2195 = vst [vmem:[%s145 + $0x78] sm:$0xf] %v1939
      %2196 = vst [vmem:[%s145 + $0x7c] sm:$0xf] %v1940
      %2197 = vst [vmem:[%s145 + $0x80] sm:$0xf] %v1941
      %2198 = vst [vmem:[%s145 + $0x84] sm:$0xf] %v1942
      %2199 = vst [vmem:[%s145 + $0x88] sm:$0xf] %v1943
      %2200 = vst [vmem:[%s145 + $0x8c] sm:$0xf] %v1944
      %2201 = vst [vmem:[%s145 + $0x90] sm:$0xf] %v1945
      %2202 = vst [vmem:[%s145 + $0x94] sm:$0xf] %v1946
      %2203 = vst [vmem:[%s145 + $0x98] sm:$0xf] %v1947
      %2204 = vst [vmem:[%s145 + $0x9c] sm:$0xf] %v1948
      %2205 = vst [vmem:[%s145 + $0xa0] sm:$0xf] %v1949
      %2206 = vst [vmem:[%s145 + $0xa4] sm:$0xf] %v1950
      %2207 = vst [vmem:[%s145 + $0xa8] sm:$0xf] %v1951
      %2208 = vst [vmem:[%s145 + $0xac] sm:$0xf] %v1952
      %2209 = vst [vmem:[%s145 + $0xb0] sm:$0xf] %v1953
      %2210 = vst [vmem:[%s145 + $0xb4] sm:$0xf] %v1954
      %2211 = vst [vmem:[%s145 + $0xb8] sm:$0xf] %v1955
      %2212 = vst [vmem:[%s145 + $0xbc] sm:$0xf] %v1956
      %2213 = vst [vmem:[%s145 + $0xc0] sm:$0xf] %v1957
      %2214 = vst [vmem:[%s145 + $0xc4] sm:$0xf] %v1958
      %2215 = vst [vmem:[%s145 + $0xc8] sm:$0xf] %v1959
      %2216 = vst [vmem:[%s145 + $0xcc] sm:$0xf] %v1960
      %2217 = vst [vmem:[%s145 + $0xd0] sm:$0xf] %v1961
      %2218 = vst [vmem:[%s145 + $0xd4] sm:$0xf] %v1962
      %2219 = vst [vmem:[%s145 + $0xd8] sm:$0xf] %v1963
      %2220 = vst [vmem:[%s145 + $0xdc] sm:$0xf] %v1964
      %2221 = vst [vmem:[%s145 + $0xe0] sm:$0xf] %v1965
      %2222 = vst [vmem:[%s145 + $0xe4] sm:$0xf] %v1966
      %2223 = vst [vmem:[%s145 + $0xe8] sm:$0xf] %v1967
      %2224 = vst [vmem:[%s145 + $0xec] sm:$0xf] %v1968
      %2225 = vst [vmem:[%s145 + $0xf0] sm:$0xf] %v1969
      %2226 = vst [vmem:[%s145 + $0xf4] sm:$0xf] %v1970
      %2227 = vst [vmem:[%s145 + $0xf8] sm:$0xf] %v1971
      %2228 = vst [vmem:[%s145 + $0xfc] sm:$0xf] %v1972
      %2229 = vst [vmem:[%s145 + $0x100] sm:$0xf] %v1973
      %2230 = vst [vmem:[%s145 + $0x104] sm:$0xf] %v1974
      %2231 = vst [vmem:[%s145 + $0x108] sm:$0xf] %v1975
      %2232 = vst [vmem:[%s145 + $0x10c] sm:$0xf] %v1976
      %2233 = vst [vmem:[%s145 + $0x110] sm:$0xf] %v1977
      %2234 = vst [vmem:[%s145 + $0x114] sm:$0xf] %v1978
      %2235 = vst [vmem:[%s145 + $0x118] sm:$0xf] %v1979
      %2236 = vst [vmem:[%s145 + $0x11c] sm:$0xf] %v1980
      %2237 = vst [vmem:[%s145 + $0x120] sm:$0xf] %v1981
      %2238 = vst [vmem:[%s145 + $0x124] sm:$0xf] %v1982
      %2239 = vst [vmem:[%s145 + $0x128] sm:$0xf] %v1983
      %2240 = vst [vmem:[%s145 + $0x12c] sm:$0xf] %v1984
      %2241 = vst [vmem:[%s145 + $0x130] sm:$0xf] %v1985
      %2242 = vst [vmem:[%s145 + $0x134] sm:$0xf] %v1986
      %2243 = vst [vmem:[%s145 + $0x138] sm:$0xf] %v1987
      %2244 = vst [vmem:[%s145 + $0x13c] sm:$0xf] %v1988
      %2245 = vst [vmem:[%s145 + $0x140] sm:$0xf] %v1989
      %2246 = vst [vmem:[%s145 + $0x144] sm:$0xf] %v1990
      %2247 = vst [vmem:[%s145 + $0x148] sm:$0xf] %v1991
      %2248 = vst [vmem:[%s145 + $0x14c] sm:$0xf] %v1992
      %2249 = vst [vmem:[%s145 + $0x150] sm:$0xf] %v1993
      %2250 = vst [vmem:[%s145 + $0x154] sm:$0xf] %v1994
      %2251 = vst [vmem:[%s145 + $0x158] sm:$0xf] %v1995
      %2252 = vst [vmem:[%s145 + $0x15c] sm:$0xf] %v1996
      %2253 = vst [vmem:[%s145 + $0x160] sm:$0xf] %v1997
      %2254 = vst [vmem:[%s145 + $0x164] sm:$0xf] %v1998
      %2255 = vst [vmem:[%s145 + $0x168] sm:$0xf] %v1999
      %2256 = vst [vmem:[%s145 + $0x16c] sm:$0xf] %v2000
      %2257 = vst [vmem:[%s145 + $0x170] sm:$0xf] %v2001
      %2258 = vst [vmem:[%s145 + $0x174] sm:$0xf] %v2002
      %2259 = vst [vmem:[%s145 + $0x178] sm:$0xf] %v2003
      %2260 = vst [vmem:[%s145 + $0x17c] sm:$0xf] %v2004
      %2261 = vst [vmem:[%s145 + $0x180] sm:$0xf] %v2005
      %2262 = vst [vmem:[%s145 + $0x184] sm:$0xf] %v2006
      %2263 = vst [vmem:[%s145 + $0x188] sm:$0xf] %v2007
      %2264 = vst [vmem:[%s145 + $0x18c] sm:$0xf] %v2008
      %2265 = vst [vmem:[%s145 + $0x190] sm:$0xf] %v2009
      %2266 = vst [vmem:[%s145 + $0x194] sm:$0xf] %v2010
      %2267 = vst [vmem:[%s145 + $0x198] sm:$0xf] %v2011
      %2268 = vst [vmem:[%s145 + $0x19c] sm:$0xf] %v2012
      %2269 = vst [vmem:[%s145 + $0x1a0] sm:$0xf] %v2013
      %2270 = vst [vmem:[%s145 + $0x1a4] sm:$0xf] %v2014
      %2271 = vst [vmem:[%s145 + $0x1a8] sm:$0xf] %v2015
      %2272 = vst [vmem:[%s145 + $0x1ac] sm:$0xf] %v2016
      %2273 = vst [vmem:[%s145 + $0x1b0] sm:$0xf] %v2017
      %2274 = vst [vmem:[%s145 + $0x1b4] sm:$0xf] %v2018
      %2275 = vst [vmem:[%s145 + $0x1b8] sm:$0xf] %v2019
      %2276 = vst [vmem:[%s145 + $0x1bc] sm:$0xf] %v2020
      %2277 = vst [vmem:[%s145 + $0x1c0] sm:$0xf] %v2021
      %2278 = vst [vmem:[%s145 + $0x1c4] sm:$0xf] %v2022
      %2279 = vst [vmem:[%s145 + $0x1c8] sm:$0xf] %v2023
      %2280 = vst [vmem:[%s145 + $0x1cc] sm:$0xf] %v2024
      %2281 = vst [vmem:[%s145 + $0x1d0] sm:$0xf] %v2025
      %2282 = vst [vmem:[%s145 + $0x1d4] sm:$0xf] %v2026
      %2283 = vst [vmem:[%s145 + $0x1d8] sm:$0xf] %v2027
      %2284 = vst [vmem:[%s145 + $0x1dc] sm:$0xf] %v2028
      %2285 = vst [vmem:[%s145 + $0x1e0] sm:$0xf] %v2029
      %2286 = vst [vmem:[%s145 + $0x1e4] sm:$0xf] %v2030
      %2287 = vst [vmem:[%s145 + $0x1e8] sm:$0xf] %v2031
      %2288 = vst [vmem:[%s145 + $0x1ec] sm:$0xf] %v2032
      %2289 = vst [vmem:[%s145 + $0x1f0] sm:$0xf] %v2033
      %2290 = vst [vmem:[%s145 + $0x1f4] sm:$0xf] %v2034
      %2291 = vst [vmem:[%s145 + $0x1f8] sm:$0xf] %v2035
      %2292 = vst [vmem:[%s145 + $0x1fc] sm:$0xf] %v2036
      %s2293 = smul.u32 128, %s13
      %p2294 = scmp.lt.s32.totalorder %s2293, 255
      %s2295 = scalar_select %p2294, %s2293, 255
      %s2296 = smul.addr %s2295, 4
      %s2297 = scalar_lea.vmem %s2, %s2296
      // Predicated region
      $region29: #{discriminator_forward.7} parent=27 // pred_check
        %p2298 = pneg %p78
      $region30: #{discriminator_forward.7} parent=27 // pred_check_branch
        %2300 = sbr.rel (%p2298) target = $region32
      $region31: #{discriminator_forward.7} parent=27 // pred_region
        %s2301 = smul.u32 128, %s13
      $region32: #{discriminator_forward.7} parent=27 // pred_fallthru
        _
    $region28: #{discriminator_forward.7} parent=5 // pred_fallthru
      _
    %p2302 = scmp.le.s32.totalorder 2, %s8
    // Predicated region
    $region33: #{discriminator_forward.7} parent=5 // pred_check
      %p2303 = pneg %p2302
    $region34: #{discriminator_forward.7} parent=5 // pred_check_branch
      %2305 = sbr.rel (%p2303) target = $region36
    $region35: #{discriminator_forward.7} parent=5 // pred_region
      %s2306 = ssub.s32 %s8, 2
      // Predicated region
      $region37: #{discriminator_forward.7} parent=35 // pred_check
        %p2307 = pneg %p84
      $region38: #{discriminator_forward.7} parent=35 // pred_check_branch
        %2309 = sbr.rel (%p2307) target = $region40
      $region39: #{discriminator_forward.7} parent=35 // pred_region
        %s2310 = smul.u32 128, %s14
        %p2311 = scmp.lt.s32.totalorder %s2310, 255
        %s2312 = scalar_select %p2311, %s2310, 255
        %s2313 = smul.addr %s2312, 4
        %s2314 = scalar_lea.vmem %s2, %s2313
      $region40: #{discriminator_forward.7} parent=35 // pred_fallthru
        _
    $region36: #{discriminator_forward.7} parent=5 // pred_fallthru
      _
  $region6: #{discriminator_forward.7} parent=0 // loop_footer
    %s12 = sadd.s32 1, %s8
  $region7: #{discriminator_forward.7} parent=0 // loop_footer_branch
    %7 = sbr.rel target = $region3
  $region8: #{discriminator_forward.7} parent=0 // loop_exit
    _

// kernel: discriminator_forward.8
$region0: #{discriminator_forward.8}
  #allocation0 [shape = 'u32[]', space=smem, size = 0x4, offset = 0x4, fixed_abs, tag = 'smem constant byte address 0x4 - core index']
  #allocation1 [shape = 'u32[144,128]{1,0:T(1,128)}', space=vmem, size = 0x12000, scoped, tag = 'internal scratch']
  %s0 = inlined_call_operand.vmem [shape: bf16[512,128], index: 0, kind: input, shape index: {}]
  %s1 = inlined_call_operand.vmem [shape: bf16[128,128], index: 1, kind: input, shape index: {}]
  %s2 = inlined_call_operand.vmem [shape: f32[2,2,128], index: 2, kind: output, shape index: {}]
  %s3 = sld [smem:[#allocation0]]
  $region41: #{discriminator_forward.8} parent=0
    _
  %s5 = ssub.s32 1, %s3
  %s6 = scalar_select 0, %s5, %s3
  loop: start=0, step=1, limit=4
  $region2: #{discriminator_forward.8} parent=0 // loop_pre_header
    _
  $region3: #{discriminator_forward.8} parent=0 // loop_header
    %s8 = sphi 0, %s12
    %p9 = scmp.ge.s32.totalorder %s8, 4
    %s18 = sphi 0, %s20
    %s21 = sphi 0, %s18
    %s22 = sphi 0, %s21
    %s38 = sphi 0, %s22
    %s42 = sphi 0, %s42
    %s44 = sphi 0, %s42
    %s45 = sphi 0, %s44
    %s59 = sphi 0, %s45
    %s65 = sphi 0, %s67
    %s68 = sphi 0, %s65
    %s69 = sphi 0, %s68
    %s85 = sphi 0, %s69
  $region4: #{discriminator_forward.8} parent=0 // loop_header_branch
    %11 = sbr.rel (%p9) target = $region8
  $region5: #{discriminator_forward.8} parent=0 // loop_body
    %s13 = ssub.s32 %s8, 1
    %s14 = ssub.s32 %s8, 2
    %s15 = sadd.s32 %s8, 1
    %s16 = ssub.s32 %s8, %s15
    %p17 = scmp.eq.s32.totalorder %s16, 0
    %s19 = sadd.s32 %s18, 1
    %s20 = scalar_select %p17, %s18, %s19
    %p23 = pneg %p17
    %p24 = scmp.eq.s32.totalorder %s8, 1
    %p25 = por %p23, %p24
    %p26 = scmp.ne.s32.totalorder %s18, %s21
    %p27 = scmp.eq.s32.totalorder %s8, 0
    %p28 = por %p26, %p27
    %p29 = scmp.ne.s32.totalorder %s18, %s21
    %p30 = scmp.eq.s32.totalorder %s13, 1
    %p31 = por %p29, %p30
    %p32 = scmp.ne.s32.totalorder %s21, %s22
    %p33 = scmp.eq.s32.totalorder %s13, 0
    %p34 = por %p32, %p33
    %p35 = scmp.ne.s32.totalorder %s21, %s22
    %p36 = scmp.eq.s32.totalorder %s14, 1
    %p37 = por %p35, %p36
    %p39 = scmp.ne.s32.totalorder %s22, %s38
    %p40 = scmp.eq.s32.totalorder %s14, 0
    %p41 = por %p39, %p40
    %s43 = sadd.s32 %s42, 1
    %p46 = scmp.eq.s32.totalorder %s8, 1
    %p47 = scmp.ne.s32.totalorder %s42, %s44
    %p48 = scmp.eq.s32.totalorder %s8, 0
    %p49 = por %p47, %p48
    %p50 = scmp.ne.s32.totalorder %s42, %s44
    %p51 = scmp.eq.s32.totalorder %s13, 1
    %p52 = por %p50, %p51
    %p53 = scmp.ne.s32.totalorder %s44, %s45
    %p54 = scmp.eq.s32.totalorder %s13, 0
    %p55 = por %p53, %p54
    %p56 = scmp.ne.s32.totalorder %s44, %s45
    %p57 = scmp.eq.s32.totalorder %s14, 1
    %p58 = por %p56, %p57
    %p60 = scmp.ne.s32.totalorder %s45, %s59
    %p61 = scmp.eq.s32.totalorder %s14, 0
    %p62 = por %p60, %p61
    %s63 = ssub.s32 %s8, %s15
    %p64 = scmp.eq.s32.totalorder %s63, 0
    %s66 = sadd.s32 %s65, 1
    %s67 = scalar_select %p64, %s65, %s66
    %p70 = pneg %p64
    %p71 = scmp.eq.s32.totalorder %s8, 1
    %p72 = por %p70, %p71
    %p73 = scmp.ne.s32.totalorder %s65, %s68
    %p74 = scmp.eq.s32.totalorder %s8, 0
    %p75 = por %p73, %p74
    %p76 = scmp.ne.s32.totalorder %s65, %s68
    %p77 = scmp.eq.s32.totalorder %s13, 1
    %p78 = por %p76, %p77
    %p79 = scmp.ne.s32.totalorder %s68, %s69
    %p80 = scmp.eq.s32.totalorder %s13, 0
    %p81 = por %p79, %p80
    %p82 = scmp.ne.s32.totalorder %s68, %s69
    %p83 = scmp.eq.s32.totalorder %s14, 1
    %p84 = por %p82, %p83
    %p86 = scmp.ne.s32.totalorder %s69, %s85
    %p87 = scmp.eq.s32.totalorder %s14, 0
    %p88 = por %p86, %p87
    %p89 = scmp.le.s32.totalorder 1, %s8
    %p90 = scmp.lt.s32.totalorder %s8, 3
    %p91 = pnand %p89, %p90
    %p92 = pneg %p91
    // Predicated region
    $region9: #{discriminator_forward.8} parent=5 // pred_check
      _
    $region10: #{discriminator_forward.8} parent=5 // pred_check_branch
      %94 = sbr.rel (%p91) target = $region12
    $region11: #{discriminator_forward.8} parent=5 // pred_region
      %s95 = ssub.s32 %s8, 1
      // Predicated region
      $region13: #{discriminator_forward.8} parent=11 // pred_check
        %p96 = pneg %p55
      $region14: #{discriminator_forward.8} parent=11 // pred_check_branch
        %98 = sbr.rel (%p96) target = $region16
      $region15: #{discriminator_forward.8} parent=11 // pred_region
        _
      $region16: #{discriminator_forward.8} parent=11 // pred_fallthru
        _
    $region12: #{discriminator_forward.8} parent=5 // pred_fallthru
      _
    %p99 = scmp.lt.s32.totalorder %s8, 2
    // Predicated region
    $region17: #{discriminator_forward.8} parent=5 // pred_check
      %p100 = pneg %p99
    $region18: #{discriminator_forward.8} parent=5 // pred_check_branch
      %102 = sbr.rel (%p100) target = $region20
    $region19: #{discriminator_forward.8} parent=5 // pred_region
      // Predicated region
      $region21: #{discriminator_forward.8} parent=19 // pred_check
        %p103 = pneg %p28
      $region22: #{discriminator_forward.8} parent=19 // pred_check_branch
        %105 = sbr.rel (%p103) target = $region24
      $region23: #{discriminator_forward.8} parent=19 // pred_region
        %s106 = smul.u32 32, %s8
        %p107 = scmp.lt.s32.totalorder %s106, 63
        %s108 = scalar_select %p107, %s106, 63
        %s109 = smul.addr %s108, 4
        %s110 = scalar_lea.vmem %s0, %s109
        %s111 = smul.u32 32, %s8
      $region24: #{discriminator_forward.8} parent=19 // pred_fallthru
        _
    $region20: #{discriminator_forward.8} parent=5 // pred_fallthru
      _
    %p112 = scmp.le.s32.totalorder 1, %s8
    %p113 = scmp.lt.s32.totalorder %s8, 3
    %p114 = pnand %p112, %p113
    %p115 = pneg %p114
    // Predicated region
    $region25: #{discriminator_forward.8} parent=5 // pred_check
      _
    $region26: #{discriminator_forward.8} parent=5 // pred_check_branch
      %117 = sbr.rel (%p114) target = $region28
    $region27: #{discriminator_forward.8} parent=5 // pred_region
      %s118 = ssub.s32 %s8, 1
      %s119 = smul.u32 32, %s13
      %p120 = scmp.lt.s32.totalorder %s119, 63
      %s121 = scalar_select %p120, %s119, 63
      %s122 = smul.addr %s121, 4
      %s123 = scalar_lea.vmem %s0, %s122
      %p124 = pneg %p34
      %p125 = pneg %p31
      %p126 = pneg %p55
      %p127 = pneg %p52
      %p128 = pneg %p81
      %p129 = pneg %p78
      %p130 = scmp.lt.s32.totalorder %s13, 1
      %s131 = scalar_select %p130, %s13, 1
      %s132 = smul.addr %s131, 2
      %s133 = scalar_lea.vmem %s2, %s132
      %s134 = smul.u32 32, %s13
      %p135 = scmp.lt.s32.totalorder %s134, 63
      %s136 = scalar_select %p135, %s134, 63
      %s137 = smul.addr %s136, 4
      %s138 = scalar_lea.vmem %s0, %s137
      %s139 = smul.u32 32, %s13
      %p140 = scmp.lt.s32.totalorder %s13, 1
      %s141 = scalar_select %p140, %s13, 1
      %s142 = smul.addr %s141, 2
      %s143 = scalar_lea.vmem %s2, %s142
      %v145 = vld [vmem:[%s138] sm:$0xf]
      %v146 = vld [vmem:[%s138 + $0x4] sm:$0xf]
      %v147 = vld [vmem:[%s138 + $0x8] sm:$0xf]
      %v148 = vld [vmem:[%s138 + $0xc] sm:$0xf]
      %v149 = vld [vmem:[%s138 + $0x10] sm:$0xf]
      %v150 = vld [vmem:[%s138 + $0x14] sm:$0xf]
      %v151 = vld [vmem:[%s138 + $0x18] sm:$0xf]
      %v152 = vld [vmem:[%s138 + $0x1c] sm:$0xf]
      %v153 = vld [vmem:[%s138 + $0x20] sm:$0xf]
      %v154 = vld [vmem:[%s138 + $0x24] sm:$0xf]
      %v155 = vld [vmem:[%s138 + $0x28] sm:$0xf]
      %v156 = vld [vmem:[%s138 + $0x2c] sm:$0xf]
      %v157 = vld [vmem:[%s138 + $0x30] sm:$0xf]
      %v158 = vld [vmem:[%s138 + $0x34] sm:$0xf]
      %v159 = vld [vmem:[%s138 + $0x38] sm:$0xf]
      %v160 = vld [vmem:[%s138 + $0x3c] sm:$0xf]
      %v161 = vld [vmem:[%s138 + $0x40] sm:$0xf]
      %v162 = vld [vmem:[%s138 + $0x44] sm:$0xf]
      %v163 = vld [vmem:[%s138 + $0x48] sm:$0xf]
      %v164 = vld [vmem:[%s138 + $0x4c] sm:$0xf]
      %v165 = vld [vmem:[%s138 + $0x50] sm:$0xf]
      %v166 = vld [vmem:[%s138 + $0x54] sm:$0xf]
      %v167 = vld [vmem:[%s138 + $0x58] sm:$0xf]
      %v168 = vld [vmem:[%s138 + $0x5c] sm:$0xf]
      %v169 = vld [vmem:[%s138 + $0x60] sm:$0xf]
      %v170 = vld [vmem:[%s138 + $0x64] sm:$0xf]
      %v171 = vld [vmem:[%s138 + $0x68] sm:$0xf]
      %v172 = vld [vmem:[%s138 + $0x6c] sm:$0xf]
      %v173 = vld [vmem:[%s138 + $0x70] sm:$0xf]
      %v174 = vld [vmem:[%s138 + $0x74] sm:$0xf]
      %v175 = vld [vmem:[%s138 + $0x78] sm:$0xf]
      %v176 = vld [vmem:[%s138 + $0x7c] sm:$0xf]
      %v177 = vld [vmem:[%s1] sm:$0xf]
      %v178 = vld [vmem:[%s1 + $0x4] sm:$0xf]
      %v179 = vld [vmem:[%s1 + $0x8] sm:$0xf]
      %v180 = vld [vmem:[%s1 + $0xc] sm:$0xf]
      %v181 = vld [vmem:[%s1 + $0x10] sm:$0xf]
      %v182 = vld [vmem:[%s1 + $0x14] sm:$0xf]
      %v183 = vld [vmem:[%s1 + $0x18] sm:$0xf]
      %v184 = vld [vmem:[%s1 + $0x1c] sm:$0xf]
      %v185 = vld [vmem:[%s1 + $0x20] sm:$0xf]
      %v186 = vld [vmem:[%s1 + $0x24] sm:$0xf]
      %v187 = vld [vmem:[%s1 + $0x28] sm:$0xf]
      %v188 = vld [vmem:[%s1 + $0x2c] sm:$0xf]
      %v189 = vld [vmem:[%s1 + $0x30] sm:$0xf]
      %v190 = vld [vmem:[%s1 + $0x34] sm:$0xf]
      %v191 = vld [vmem:[%s1 + $0x38] sm:$0xf]
      %v192 = vld [vmem:[%s1 + $0x3c] sm:$0xf]
      %v225 = vunpack.c.l.b16 %v145
      %v226 = vunpack.c.l.b16 %v146
      %v227 = vunpack.c.l.b16 %v147
      %v228 = vunpack.c.l.b16 %v148
      %v229 = vunpack.c.l.b16 %v149
      %v230 = vunpack.c.l.b16 %v150
      %v231 = vunpack.c.l.b16 %v151
      %v232 = vunpack.c.l.b16 %v152
      %v233 = vunpack.c.l.b16 %v153
      %v234 = vunpack.c.l.b16 %v154
      %v235 = vunpack.c.l.b16 %v155
      %v236 = vunpack.c.l.b16 %v156
      %v237 = vunpack.c.l.b16 %v157
      %v238 = vunpack.c.l.b16 %v158
      %v239 = vunpack.c.l.b16 %v159
      %v240 = vunpack.c.l.b16 %v160
      %v241 = vunpack.c.l.b16 %v161
      %v242 = vunpack.c.l.b16 %v162
      %v243 = vunpack.c.l.b16 %v163
      %v244 = vunpack.c.l.b16 %v164
      %v245 = vunpack.c.l.b16 %v165
      %v246 = vunpack.c.l.b16 %v166
      %v247 = vunpack.c.l.b16 %v167
      %v248 = vunpack.c.l.b16 %v168
      %v249 = vunpack.c.l.b16 %v169
      %v250 = vunpack.c.l.b16 %v170
      %v251 = vunpack.c.l.b16 %v171
      %v252 = vunpack.c.l.b16 %v172
      %v253 = vunpack.c.l.b16 %v173
      %v254 = vunpack.c.l.b16 %v174
      %v255 = vunpack.c.l.b16 %v175
      %v256 = vunpack.c.l.b16 %v176
      %v257 = vpack.c.b16 %v226, %v225
      %v258 = vpack.c.b16 %v228, %v227
      %v259 = vpack.c.b16 %v230, %v229
      %v260 = vpack.c.b16 %v232, %v231
      %v261 = vpack.c.b16 %v234, %v233
      %v262 = vpack.c.b16 %v236, %v235
      %v263 = vpack.c.b16 %v238, %v237
      %v264 = vpack.c.b16 %v240, %v239
      %v265 = vpack.c.b16 %v242, %v241
      %v266 = vpack.c.b16 %v244, %v243
      %v267 = vpack.c.b16 %v246, %v245
      %v268 = vpack.c.b16 %v248, %v247
      %v269 = vpack.c.b16 %v250, %v249
      %v270 = vpack.c.b16 %v252, %v251
      %v271 = vpack.c.b16 %v254, %v253
      %v272 = vpack.c.b16 %v256, %v255
      %v305 = vunpack.c.l.b16 %v177
      %v306 = vunpack.c.l.b16 %v178
      %v307 = vunpack.c.l.b16 %v179
      %v308 = vunpack.c.l.b16 %v180
      %v309 = vunpack.c.l.b16 %v181
      %v310 = vunpack.c.l.b16 %v182
      %v311 = vunpack.c.l.b16 %v183
      %v312 = vunpack.c.l.b16 %v184
      %v313 = vunpack.c.l.b16 %v185
      %v314 = vunpack.c.l.b16 %v186
      %v315 = vunpack.c.l.b16 %v187
      %v316 = vunpack.c.l.b16 %v188
      %v317 = vunpack.c.l.b16 %v189
      %v318 = vunpack.c.l.b16 %v190
      %v319 = vunpack.c.l.b16 %v191
      %v320 = vunpack.c.l.b16 %v192
      %v321 = vpack.c.b16 %v306, %v305
      %v322 = vpack.c.b16 %v308, %v307
      %v323 = vpack.c.b16 %v310, %v309
      %v324 = vpack.c.b16 %v312, %v311
      %v325 = vpack.c.b16 %v314, %v313
      %v326 = vpack.c.b16 %v316, %v315
      %v327 = vpack.c.b16 %v318, %v317
      %v328 = vpack.c.b16 %v320, %v319
      %337 = vmatprep.subr.bf16.mxu0 0
      %338 = vmatpush1.bf16.msra.mxu0 %v321
      %339 = vmatprep.subr.bf16.mxu0 0
      %340 = vmatpush1.bf16.msra.mxu0 %v322
      %341 = vmatprep.subr.bf16.mxu0 0
      %342 = vmatpush1.bf16.msra.mxu0 %v323
      %343 = vmatprep.subr.bf16.mxu0 0
      %344 = vmatpush1.bf16.msra.mxu0 %v324
      %345 = vmatprep.subr.bf16.mxu0 0
      %346 = vmatpush1.bf16.msra.mxu0 %v325
      %347 = vmatprep.subr.bf16.mxu0 0
      %348 = vmatpush1.bf16.msra.mxu0 %v326
      %349 = vmatprep.subr.bf16.mxu0 0
      %350 = vmatpush1.bf16.msra.mxu0 %v327
      %351 = vmatprep.subr.bf16.mxu0 0
      %352 = vmatpush1.bf16.msra.mxu0 %v328
      %353 = vmatprep.subr.bf16.mxu0 0
      %354 = vmatpush1.bf16.msra.mxu0 0
      %355 = vmatprep.subr.bf16.mxu0 0
      %356 = vmatpush1.bf16.msra.mxu0 0
      %357 = vmatprep.subr.bf16.mxu0 0
      %358 = vmatpush1.bf16.msra.mxu0 0
      %359 = vmatprep.subr.bf16.mxu0 0
      %360 = vmatpush1.bf16.msra.mxu0 0
      %361 = vmatprep.subr.bf16.mxu0 0
      %362 = vmatpush1.bf16.msra.mxu0 0
      %363 = vmatprep.subr.bf16.mxu0 0
      %364 = vmatpush1.bf16.msra.mxu0 0
      %365 = vmatprep.subr.bf16.mxu0 0
      %366 = vmatpush1.bf16.msra.mxu0 0
      %367 = vmatprep.subr.bf16.mxu0 0
      %368 = vmatpush1.bf16.msra.mxu0 0
      %369 = vmatprep.mubr.bf16.mxu0 0
      %370 = vmatmul.mubr.bf16.gmra.mrb[0].mxu0 %v257
      %v371 = vpop.f32.mrb[0].mxu0
      %v372 = vadd.f32 0.0, %v371
      %v373 = vpop.f32.mrb[0].mxu0
      %v374 = vpop.f32.mrb[0].mxu0
      %v375 = vadd.f32 0.0, %v374
      %v376 = vpop.f32.mrb[0].mxu0
      %377 = vmatprep.mubr.bf16.mxu0 0
      %378 = vmatmul.mubr.bf16.gmra.mrb[0].mxu0 %v258
      %v379 = vpop.f32.mrb[0].mxu0
      %v380 = vadd.f32 0.0, %v379
      %v381 = vpop.f32.mrb[0].mxu0
      %v382 = vpop.f32.mrb[0].mxu0
      %v383 = vadd.f32 0.0, %v382
      %v384 = vpop.f32.mrb[0].mxu0
      %385 = vmatprep.mubr.bf16.mxu0 0
      %386 = vmatmul.mubr.bf16.gmra.mrb[0].mxu0 %v259
      %v387 = vpop.f32.mrb[0].mxu0
      %v388 = vadd.f32 0.0, %v387
      %v389 = vpop.f32.mrb[0].mxu0
      %v390 = vpop.f32.mrb[0].mxu0
      %v391 = vadd.f32 0.0, %v390
      %v392 = vpop.f32.mrb[0].mxu0
      %393 = vmatprep.mubr.bf16.mxu0 0
      %394 = vmatmul.mubr.bf16.gmra.mrb[0].mxu0 %v260
      %v395 = vpop.f32.mrb[0].mxu0
      %v396 = vadd.f32 0.0, %v395
      %v397 = vpop.f32.mrb[0].mxu0
      %v398 = vpop.f32.mrb[0].mxu0
      %v399 = vadd.f32 0.0, %v398
      %v400 = vpop.f32.mrb[0].mxu0
      %401 = vmatprep.mubr.bf16.mxu0 0
      %402 = vmatmul.mubr.bf16.gmra.mrb[0].mxu0 %v261
      %v403 = vpop.f32.mrb[0].mxu0
      %v404 = vadd.f32 0.0, %v403
      %v405 = vpop.f32.mrb[0].mxu0
      %v406 = vpop.f32.mrb[0].mxu0
      %v407 = vadd.f32 0.0, %v406
      %v408 = vpop.f32.mrb[0].mxu0
      %409 = vmatprep.mubr.bf16.mxu0 0
      %410 = vmatmul.mubr.bf16.gmra.mrb[0].mxu0 %v262
      %v411 = vpop.f32.mrb[0].mxu0
      %v412 = vadd.f32 0.0, %v411
      %v413 = vpop.f32.mrb[0].mxu0
      %v414 = vpop.f32.mrb[0].mxu0
      %v415 = vadd.f32 0.0, %v414
      %v416 = vpop.f32.mrb[0].mxu0
      %417 = vmatprep.mubr.bf16.mxu0 0
      %418 = vmatmul.mubr.bf16.gmra.mrb[0].mxu0 %v263
      %v419 = vpop.f32.mrb[0].mxu0
      %v420 = vadd.f32 0.0, %v419
      %v421 = vpop.f32.mrb[0].mxu0
      %v422 = vpop.f32.mrb[0].mxu0
      %v423 = vadd.f32 0.0, %v422
      %v424 = vpop.f32.mrb[0].mxu0
      %425 = vmatprep.mubr.bf16.mxu0 0
      %426 = vmatmul.mubr.bf16.gmra.mrb[0].mxu0 %v264
      %v427 = vpop.f32.mrb[0].mxu0
      %v428 = vadd.f32 0.0, %v427
      %v429 = vpop.f32.mrb[0].mxu0
      %v430 = vpop.f32.mrb[0].mxu0
      %v431 = vadd.f32 0.0, %v430
      %v432 = vpop.f32.mrb[0].mxu0
      %433 = vmatprep.mubr.bf16.mxu0 0
      %434 = vmatmul.mubr.bf16.gmra.mrb[0].mxu0 %v265
      %v435 = vpop.f32.mrb[0].mxu0
      %v436 = vadd.f32 0.0, %v435
      %v437 = vpop.f32.mrb[0].mxu0
      %v438 = vpop.f32.mrb[0].mxu0
      %v439 = vadd.f32 0.0, %v438
      %v440 = vpop.f32.mrb[0].mxu0
      %441 = vmatprep.mubr.bf16.mxu0 0
      %442 = vmatmul.mubr.bf16.gmra.mrb[0].mxu0 %v266
      %v443 = vpop.f32.mrb[0].mxu0
      %v444 = vadd.f32 0.0, %v443
      %v445 = vpop.f32.mrb[0].mxu0
      %v446 = vpop.f32.mrb[0].mxu0
      %v447 = vadd.f32 0.0, %v446
      %v448 = vpop.f32.mrb[0].mxu0
      %449 = vmatprep.mubr.bf16.mxu0 0
      %450 = vmatmul.mubr.bf16.gmra.mrb[0].mxu0 %v267
      %v451 = vpop.f32.mrb[0].mxu0
      %v452 = vadd.f32 0.0, %v451
      %v453 = vpop.f32.mrb[0].mxu0
      %v454 = vpop.f32.mrb[0].mxu0
      %v455 = vadd.f32 0.0, %v454
      %v456 = vpop.f32.mrb[0].mxu0
      %457 = vmatprep.mubr.bf16.mxu0 0
      %458 = vmatmul.mubr.bf16.gmra.mrb[0].mxu0 %v268
      %v459 = vpop.f32.mrb[0].mxu0
      %v460 = vadd.f32 0.0, %v459
      %v461 = vpop.f32.mrb[0].mxu0
      %v462 = vpop.f32.mrb[0].mxu0
      %v463 = vadd.f32 0.0, %v462
      %v464 = vpop.f32.mrb[0].mxu0
      %465 = vmatprep.mubr.bf16.mxu0 0
      %466 = vmatmul.mubr.bf16.gmra.mrb[0].mxu0 %v269
      %v467 = vpop.f32.mrb[0].mxu0
      %v468 = vadd.f32 0.0, %v467
      %v469 = vpop.f32.mrb[0].mxu0
      %v470 = vpop.f32.mrb[0].mxu0
      %v471 = vadd.f32 0.0, %v470
      %v472 = vpop.f32.mrb[0].mxu0
      %473 = vmatprep.mubr.bf16.mxu0 0
      %474 = vmatmul.mubr.bf16.gmra.mrb[0].mxu0 %v270
      %v475 = vpop.f32.mrb[0].mxu0
      %v476 = vadd.f32 0.0, %v475
      %v477 = vpop.f32.mrb[0].mxu0
      %v478 = vpop.f32.mrb[0].mxu0
      %v479 = vadd.f32 0.0, %v478
      %v480 = vpop.f32.mrb[0].mxu0
      %481 = vmatprep.mubr.bf16.mxu0 0
      %482 = vmatmul.mubr.bf16.gmra.mrb[0].mxu0 %v271
      %v483 = vpop.f32.mrb[0].mxu0
      %v484 = vadd.f32 0.0, %v483
      %v485 = vpop.f32.mrb[0].mxu0
      %v486 = vpop.f32.mrb[0].mxu0
      %v487 = vadd.f32 0.0, %v486
      %v488 = vpop.f32.mrb[0].mxu0
      %489 = vmatprep.mubr.bf16.mxu0 0
      %490 = vmatmul.mubr.bf16.gmra.mrb[0].mxu0 %v272
      %v491 = vpop.f32.mrb[0].mxu0
      %v492 = vadd.f32 0.0, %v491
      %v493 = vpop.f32.mrb[0].mxu0
      %v494 = vpop.f32.mrb[0].mxu0
      %v495 = vadd.f32 0.0, %v494
      %v496 = vpop.f32.mrb[0].mxu0
      %497 = vdwg.mxu0
      %v498 = vadd.f32 %v372, %v375
      %v499 = vadd.f32 %v498, %v380
      %v500 = vadd.f32 %v499, %v383
      %v501 = vadd.f32 %v500, %v388
      %v502 = vadd.f32 %v501, %v391
      %v503 = vadd.f32 %v502, %v396
      %v504 = vadd.f32 %v503, %v399
      %v505 = vadd.f32 %v504, %v404
      %v506 = vadd.f32 %v505, %v407
      %v507 = vadd.f32 %v506, %v412
      %v508 = vadd.f32 %v507, %v415
      %v509 = vadd.f32 %v508, %v420
      %v510 = vadd.f32 %v509, %v423
      %v511 = vadd.f32 %v510, %v428
      %v512 = vadd.f32 %v511, %v431
      %v513 = vadd.f32 %v512, %v436
      %v514 = vadd.f32 %v513, %v439
      %v515 = vadd.f32 %v514, %v444
      %v516 = vadd.f32 %v515, %v447
      %v517 = vadd.f32 %v516, %v452
      %v518 = vadd.f32 %v517, %v455
      %v519 = vadd.f32 %v518, %v460
      %v520 = vadd.f32 %v519, %v463
      %v521 = vadd.f32 %v520, %v468
      %v522 = vadd.f32 %v521, %v471
      %v523 = vadd.f32 %v522, %v476
      %v524 = vadd.f32 %v523, %v479
      %v525 = vadd.f32 %v524, %v484
      %v526 = vadd.f32 %v525, %v487
      %v527 = vadd.f32 %v526, %v492
      %v528 = vadd.f32 %v527, %v495
      %v529 = vrot.slane %v528, 4
      %v530 = vadd.f32 %v528, %v529
      %v531 = vrot.slane %v530, 2
      %v532 = vadd.f32 %v530, %v531
      %v533 = vrot.slane %v532, 1
      %v534 = vadd.f32 %v532, %v533
      %v535 = vmul.f32 %v372, %v372
      %v536 = vmul.f32 %v375, %v375
      %v537 = vmul.f32 %v380, %v380
      %v538 = vmul.f32 %v383, %v383
      %v539 = vmul.f32 %v388, %v388
      %v540 = vmul.f32 %v391, %v391
      %v541 = vmul.f32 %v396, %v396
      %v542 = vmul.f32 %v399, %v399
      %v543 = vmul.f32 %v404, %v404
      %v544 = vmul.f32 %v407, %v407
      %v545 = vmul.f32 %v412, %v412
      %v546 = vmul.f32 %v415, %v415
      %v547 = vmul.f32 %v420, %v420
      %v548 = vmul.f32 %v423, %v423
      %v549 = vmul.f32 %v428, %v428
      %v550 = vmul.f32 %v431, %v431
      %v551 = vmul.f32 %v436, %v436
      %v552 = vmul.f32 %v439, %v439
      %v553 = vmul.f32 %v444, %v444
      %v554 = vmul.f32 %v447, %v447
      %v555 = vmul.f32 %v452, %v452
      %v556 = vmul.f32 %v455, %v455
      %v557 = vmul.f32 %v460, %v460
      %v558 = vmul.f32 %v463, %v463
      %v559 = vmul.f32 %v468, %v468
      %v560 = vmul.f32 %v471, %v471
      %v561 = vmul.f32 %v476, %v476
      %v562 = vmul.f32 %v479, %v479
      %v563 = vmul.f32 %v484, %v484
      %v564 = vmul.f32 %v487, %v487
      %v565 = vmul.f32 %v492, %v492
      %v566 = vmul.f32 %v495, %v495
      %v567 = vadd.f32 %v535, %v536
      %v568 = vadd.f32 %v567, %v537
      %v569 = vadd.f32 %v568, %v538
      %v570 = vadd.f32 %v569, %v539
      %v571 = vadd.f32 %v570, %v540
      %v572 = vadd.f32 %v571, %v541
      %v573 = vadd.f32 %v572, %v542
      %v574 = vadd.f32 %v573, %v543
      %v575 = vadd.f32 %v574, %v544
      %v576 = vadd.f32 %v575, %v545
      %v577 = vadd.f32 %v576, %v546
      %v578 = vadd.f32 %v577, %v547
      %v579 = vadd.f32 %v578, %v548
      %v580 = vadd.f32 %v579, %v549
      %v581 = vadd.f32 %v580, %v550
      %v582 = vadd.f32 %v581, %v551
      %v583 = vadd.f32 %v582, %v552
      %v584 = vadd.f32 %v583, %v553
      %v585 = vadd.f32 %v584, %v554
      %v586 = vadd.f32 %v585, %v555
      %v587 = vadd.f32 %v586, %v556
      %v588 = vadd.f32 %v587, %v557
      %v589 = vadd.f32 %v588, %v558
      %v590 = vadd.f32 %v589, %v559
      %v591 = vadd.f32 %v590, %v560
      %v592 = vadd.f32 %v591, %v561
      %v593 = vadd.f32 %v592, %v562
      %v594 = vadd.f32 %v593, %v563
      %v595 = vadd.f32 %v594, %v564
      %v596 = vadd.f32 %v595, %v565
      %v597 = vadd.f32 %v596, %v566
      %v598 = vrot.slane %v597, 4
      %v599 = vadd.f32 %v597, %v598
      %v600 = vrot.slane %v599, 2
      %v601 = vadd.f32 %v599, %v600
      %v602 = vrot.slane %v601, 1
      %v603 = vadd.f32 %v601, %v602
      %vm604 = vcmask 1040384
      %v605 = vsel %vm604, %v534, %v603
      %606 = vst [vmem:[%s143] sm:$0x3] %v605
      %p607 = scmp.lt.s32.totalorder %s13, 1
      %s608 = scalar_select %p607, %s13, 1
      %s609 = smul.addr %s608, 2
      %s610 = scalar_lea.vmem %s2, %s609
      // Predicated region
      $region29: #{discriminator_forward.8} parent=27 // pred_check
        %p611 = pneg %p78
      $region30: #{discriminator_forward.8} parent=27 // pred_check_branch
        %613 = sbr.rel (%p611) target = $region32
      $region31: #{discriminator_forward.8} parent=27 // pred_region
        _
      $region32: #{discriminator_forward.8} parent=27 // pred_fallthru
        _
    $region28: #{discriminator_forward.8} parent=5 // pred_fallthru
      _
    %p614 = scmp.le.s32.totalorder 2, %s8
    // Predicated region
    $region33: #{discriminator_forward.8} parent=5 // pred_check
      %p615 = pneg %p614
    $region34: #{discriminator_forward.8} parent=5 // pred_check_branch
      %617 = sbr.rel (%p615) target = $region36
    $region35: #{discriminator_forward.8} parent=5 // pred_region
      %s618 = ssub.s32 %s8, 2
      // Predicated region
      $region37: #{discriminator_forward.8} parent=35 // pred_check
        %p619 = pneg %p84
      $region38: #{discriminator_forward.8} parent=35 // pred_check_branch
        %621 = sbr.rel (%p619) target = $region40
      $region39: #{discriminator_forward.8} parent=35 // pred_region
        %p622 = scmp.lt.s32.totalorder %s14, 1
        %s623 = scalar_select %p622, %s14, 1
        %s624 = smul.addr %s623, 2
        %s625 = scalar_lea.vmem %s2, %s624
      $region40: #{discriminator_forward.8} parent=35 // pred_fallthru
        _
    $region36: #{discriminator_forward.8} parent=5 // pred_fallthru
      _
  $region6: #{discriminator_forward.8} parent=0 // loop_footer
    %s12 = sadd.s32 1, %s8
  $region7: #{discriminator_forward.8} parent=0 // loop_footer_branch
    %7 = sbr.rel target = $region3
  $region8: #{discriminator_forward.8} parent=0 // loop_exit
    _

// kernel: discriminator_forward.9
$region0: #{discriminator_forward.9}
  #allocation0 [shape = 'u32[]', space=smem, size = 0x4, offset = 0x4, fixed_abs, tag = 'smem constant byte address 0x4 - core index']
  #allocation1 [shape = 'u32[144,128]{1,0:T(1,128)}', space=vmem, size = 0x12000, scoped, tag = 'internal scratch']
  %s0 = inlined_call_operand.vmem [shape: bf16[512,128], index: 0, kind: input, shape index: {}]
  %s1 = inlined_call_operand.vmem [shape: bf16[128,128], index: 1, kind: input, shape index: {}]
  %s2 = inlined_call_operand.vmem [shape: f32[1,128], index: 2, kind: input, shape index: {}]
  %s3 = inlined_call_operand.vmem [shape: f32[1,128], index: 3, kind: input, shape index: {}]
  %s4 = inlined_call_operand.vmem [shape: bf16[512,128], index: 4, kind: output, shape index: {}]
  %s5 = sld [smem:[#allocation0]]
  $region49: #{discriminator_forward.9} parent=0
    _
  %s7 = ssub.s32 1, %s5
  %s8 = scalar_select 0, %s7, %s5
  loop: start=0, step=1, limit=4
  $region2: #{discriminator_forward.9} parent=0 // loop_pre_header
    _
  $region3: #{discriminator_forward.9} parent=0 // loop_header
    %s10 = sphi 0, %s14
    %p11 = scmp.ge.s32.totalorder %s10, 4
    %s20 = sphi 0, %s22
    %s23 = sphi 0, %s20
    %s24 = sphi 0, %s23
    %s40 = sphi 0, %s24
    %s44 = sphi 0, %s44
    %s46 = sphi 0, %s44
    %s47 = sphi 0, %s46
    %s61 = sphi 0, %s47
    %s65 = sphi 0, %s65
    %s67 = sphi 0, %s65
    %s68 = sphi 0, %s67
    %s82 = sphi 0, %s68
    %s86 = sphi 0, %s86
    %s88 = sphi 0, %s86
    %s89 = sphi 0, %s88
    %s103 = sphi 0, %s89
    %s109 = sphi 0, %s111
    %s112 = sphi 0, %s109
    %s113 = sphi 0, %s112
    %s129 = sphi 0, %s113
  $region4: #{discriminator_forward.9} parent=0 // loop_header_branch
    %13 = sbr.rel (%p11) target = $region8
  $region5: #{discriminator_forward.9} parent=0 // loop_body
    %s15 = ssub.s32 %s10, 1
    %s16 = ssub.s32 %s10, 2
    %s17 = sadd.s32 %s10, 1
    %s18 = ssub.s32 %s10, %s17
    %p19 = scmp.eq.s32.totalorder %s18, 0
    %s21 = sadd.s32 %s20, 1
    %s22 = scalar_select %p19, %s20, %s21
    %p25 = pneg %p19
    %p26 = scmp.eq.s32.totalorder %s10, 1
    %p27 = por %p25, %p26
    %p28 = scmp.ne.s32.totalorder %s20, %s23
    %p29 = scmp.eq.s32.totalorder %s10, 0
    %p30 = por %p28, %p29
    %p31 = scmp.ne.s32.totalorder %s20, %s23
    %p32 = scmp.eq.s32.totalorder %s15, 1
    %p33 = por %p31, %p32
    %p34 = scmp.ne.s32.totalorder %s23, %s24
    %p35 = scmp.eq.s32.totalorder %s15, 0
    %p36 = por %p34, %p35
    %p37 = scmp.ne.s32.totalorder %s23, %s24
    %p38 = scmp.eq.s32.totalorder %s16, 1
    %p39 = por %p37, %p38
    %p41 = scmp.ne.s32.totalorder %s24, %s40
    %p42 = scmp.eq.s32.totalorder %s16, 0
    %p43 = por %p41, %p42
    %s45 = sadd.s32 %s44, 1
    %p48 = scmp.eq.s32.totalorder %s10, 1
    %p49 = scmp.ne.s32.totalorder %s44, %s46
    %p50 = scmp.eq.s32.totalorder %s10, 0
    %p51 = por %p49, %p50
    %p52 = scmp.ne.s32.totalorder %s44, %s46
    %p53 = scmp.eq.s32.totalorder %s15, 1
    %p54 = por %p52, %p53
    %p55 = scmp.ne.s32.totalorder %s46, %s47
    %p56 = scmp.eq.s32.totalorder %s15, 0
    %p57 = por %p55, %p56
    %p58 = scmp.ne.s32.totalorder %s46, %s47
    %p59 = scmp.eq.s32.totalorder %s16, 1
    %p60 = por %p58, %p59
    %p62 = scmp.ne.s32.totalorder %s47, %s61
    %p63 = scmp.eq.s32.totalorder %s16, 0
    %p64 = por %p62, %p63
    %s66 = sadd.s32 %s65, 1
    %p69 = scmp.eq.s32.totalorder %s10, 1
    %p70 = scmp.ne.s32.totalorder %s65, %s67
    %p71 = scmp.eq.s32.totalorder %s10, 0
    %p72 = por %p70, %p71
    %p73 = scmp.ne.s32.totalorder %s65, %s67
    %p74 = scmp.eq.s32.totalorder %s15, 1
    %p75 = por %p73, %p74
    %p76 = scmp.ne.s32.totalorder %s67, %s68
    %p77 = scmp.eq.s32.totalorder %s15, 0
    %p78 = por %p76, %p77
    %p79 = scmp.ne.s32.totalorder %s67, %s68
    %p80 = scmp.eq.s32.totalorder %s16, 1
    %p81 = por %p79, %p80
    %p83 = scmp.ne.s32.totalorder %s68, %s82
    %p84 = scmp.eq.s32.totalorder %s16, 0
    %p85 = por %p83, %p84
    %s87 = sadd.s32 %s86, 1
    %p90 = scmp.eq.s32.totalorder %s10, 1
    %p91 = scmp.ne.s32.totalorder %s86, %s88
    %p92 = scmp.eq.s32.totalorder %s10, 0
    %p93 = por %p91, %p92
    %p94 = scmp.ne.s32.totalorder %s86, %s88
    %p95 = scmp.eq.s32.totalorder %s15, 1
    %p96 = por %p94, %p95
    %p97 = scmp.ne.s32.totalorder %s88, %s89
    %p98 = scmp.eq.s32.totalorder %s15, 0
    %p99 = por %p97, %p98
    %p100 = scmp.ne.s32.totalorder %s88, %s89
    %p101 = scmp.eq.s32.totalorder %s16, 1
    %p102 = por %p100, %p101
    %p104 = scmp.ne.s32.totalorder %s89, %s103
    %p105 = scmp.eq.s32.totalorder %s16, 0
    %p106 = por %p104, %p105
    %s107 = ssub.s32 %s10, %s17
    %p108 = scmp.eq.s32.totalorder %s107, 0
    %s110 = sadd.s32 %s109, 1
    %s111 = scalar_select %p108, %s109, %s110
    %p114 = pneg %p108
    %p115 = scmp.eq.s32.totalorder %s10, 1
    %p116 = por %p114, %p115
    %p117 = scmp.ne.s32.totalorder %s109, %s112
    %p118 = scmp.eq.s32.totalorder %s10, 0
    %p119 = por %p117, %p118
    %p120 = scmp.ne.s32.totalorder %s109, %s112
    %p121 = scmp.eq.s32.totalorder %s15, 1
    %p122 = por %p120, %p121
    %p123 = scmp.ne.s32.totalorder %s112, %s113
    %p124 = scmp.eq.s32.totalorder %s15, 0
    %p125 = por %p123, %p124
    %p126 = scmp.ne.s32.totalorder %s112, %s113
    %p127 = scmp.eq.s32.totalorder %s16, 1
    %p128 = por %p126, %p127
    %p130 = scmp.ne.s32.totalorder %s113, %s129
    %p131 = scmp.eq.s32.totalorder %s16, 0
    %p132 = por %p130, %p131
    %p133 = scmp.le.s32.totalorder 1, %s10
    %p134 = scmp.lt.s32.totalorder %s10, 3
    %p135 = pnand %p133, %p134
    %p136 = pneg %p135
    // Predicated region
    $region9: #{discriminator_forward.9} parent=5 // pred_check
      _
    $region10: #{discriminator_forward.9} parent=5 // pred_check_branch
      %138 = sbr.rel (%p135) target = $region12
    $region11: #{discriminator_forward.9} parent=5 // pred_region
      %s139 = ssub.s32 %s10, 1
      // Predicated region
      $region13: #{discriminator_forward.9} parent=11 // pred_check
        %p140 = pneg %p57
      $region14: #{discriminator_forward.9} parent=11 // pred_check_branch
        %142 = sbr.rel (%p140) target = $region16
      $region15: #{discriminator_forward.9} parent=11 // pred_region
        _
      $region16: #{discriminator_forward.9} parent=11 // pred_fallthru
        _
      // Predicated region
      $region17: #{discriminator_forward.9} parent=11 // pred_check
        %p143 = pneg %p78
      $region18: #{discriminator_forward.9} parent=11 // pred_check_branch
        %145 = sbr.rel (%p143) target = $region20
      $region19: #{discriminator_forward.9} parent=11 // pred_region
        _
      $region20: #{discriminator_forward.9} parent=11 // pred_fallthru
        _
      // Predicated region
      $region21: #{discriminator_forward.9} parent=11 // pred_check
        %p146 = pneg %p99
      $region22: #{discriminator_forward.9} parent=11 // pred_check_branch
        %148 = sbr.rel (%p146) target = $region24
      $region23: #{discriminator_forward.9} parent=11 // pred_region
        _
      $region24: #{discriminator_forward.9} parent=11 // pred_fallthru
        _
    $region12: #{discriminator_forward.9} parent=5 // pred_fallthru
      _
    %p149 = scmp.lt.s32.totalorder %s10, 2
    // Predicated region
    $region25: #{discriminator_forward.9} parent=5 // pred_check
      %p150 = pneg %p149
    $region26: #{discriminator_forward.9} parent=5 // pred_check_branch
      %152 = sbr.rel (%p150) target = $region28
    $region27: #{discriminator_forward.9} parent=5 // pred_region
      // Predicated region
      $region29: #{discriminator_forward.9} parent=27 // pred_check
        %p153 = pneg %p30
      $region30: #{discriminator_forward.9} parent=27 // pred_check_branch
        %155 = sbr.rel (%p153) target = $region32
      $region31: #{discriminator_forward.9} parent=27 // pred_region
        %s156 = smul.u32 32, %s10
        %p157 = scmp.lt.s32.totalorder %s156, 63
        %s158 = scalar_select %p157, %s156, 63
        %s159 = smul.addr %s158, 4
        %s160 = scalar_lea.vmem %s0, %s159
        %s161 = smul.u32 32, %s10
      $region32: #{discriminator_forward.9} parent=27 // pred_fallthru
        _
    $region28: #{discriminator_forward.9} parent=5 // pred_fallthru
      _
    %p162 = scmp.le.s32.totalorder 1, %s10
    %p163 = scmp.lt.s32.totalorder %s10, 3
    %p164 = pnand %p162, %p163
    %p165 = pneg %p164
    // Predicated region
    $region33: #{discriminator_forward.9} parent=5 // pred_check
      _
    $region34: #{discriminator_forward.9} parent=5 // pred_check_branch
      %167 = sbr.rel (%p164) target = $region36
    $region35: #{discriminator_forward.9} parent=5 // pred_region
      %s168 = ssub.s32 %s10, 1
      %s169 = smul.u32 32, %s15
      %p170 = scmp.lt.s32.totalorder %s169, 63
      %s171 = scalar_select %p170, %s169, 63
      %s172 = smul.addr %s171, 4
      %s173 = scalar_lea.vmem %s0, %s172
      %p174 = pneg %p36
      %p175 = pneg %p33
      %p176 = pneg %p57
      %p177 = pneg %p54
      %p178 = pneg %p78
      %p179 = pneg %p75
      %p180 = pneg %p99
      %p181 = pneg %p96
      %p182 = pneg %p125
      %p183 = pneg %p122
      %s184 = smul.u32 32, %s15
      %p185 = scmp.lt.s32.totalorder %s184, 63
      %s186 = scalar_select %p185, %s184, 63
      %s187 = smul.addr %s186, 4
      %s188 = scalar_lea.vmem %s4, %s187
      %s189 = smul.u32 32, %s15
      %p190 = scmp.lt.s32.totalorder %s189, 63
      %s191 = scalar_select %p190, %s189, 63
      %s192 = smul.addr %s191, 4
      %s193 = scalar_lea.vmem %s0, %s192
      %s194 = smul.u32 32, %s15
      %s195 = smul.u32 32, %s15
      %p196 = scmp.lt.s32.totalorder %s195, 63
      %s197 = scalar_select %p196, %s195, 63
      %s198 = smul.addr %s197, 4
      %s199 = scalar_lea.vmem %s4, %s198
      %s200 = smul.u32 32, %s15
      %v202 = vld [vmem:[%s193] sm:$0xf]
      %v203 = vld [vmem:[%s193 + $0x4] sm:$0xf]
      %v204 = vld [vmem:[%s193 + $0x8] sm:$0xf]
      %v205 = vld [vmem:[%s193 + $0xc] sm:$0xf]
      %v206 = vld [vmem:[%s193 + $0x10] sm:$0xf]
      %v207 = vld [vmem:[%s193 + $0x14] sm:$0xf]
      %v208 = vld [vmem:[%s193 + $0x18] sm:$0xf]
      %v209 = vld [vmem:[%s193 + $0x1c] sm:$0xf]
      %v210 = vld [vmem:[%s193 + $0x20] sm:$0xf]
      %v211 = vld [vmem:[%s193 + $0x24] sm:$0xf]
      %v212 = vld [vmem:[%s193 + $0x28] sm:$0xf]
      %v213 = vld [vmem:[%s193 + $0x2c] sm:$0xf]
      %v214 = vld [vmem:[%s193 + $0x30] sm:$0xf]
      %v215 = vld [vmem:[%s193 + $0x34] sm:$0xf]
      %v216 = vld [vmem:[%s193 + $0x38] sm:$0xf]
      %v217 = vld [vmem:[%s193 + $0x3c] sm:$0xf]
      %v218 = vld [vmem:[%s193 + $0x40] sm:$0xf]
      %v219 = vld [vmem:[%s193 + $0x44] sm:$0xf]
      %v220 = vld [vmem:[%s193 + $0x48] sm:$0xf]
      %v221 = vld [vmem:[%s193 + $0x4c] sm:$0xf]
      %v222 = vld [vmem:[%s193 + $0x50] sm:$0xf]
      %v223 = vld [vmem:[%s193 + $0x54] sm:$0xf]
      %v224 = vld [vmem:[%s193 + $0x58] sm:$0xf]
      %v225 = vld [vmem:[%s193 + $0x5c] sm:$0xf]
      %v226 = vld [vmem:[%s193 + $0x60] sm:$0xf]
      %v227 = vld [vmem:[%s193 + $0x64] sm:$0xf]
      %v228 = vld [vmem:[%s193 + $0x68] sm:$0xf]
      %v229 = vld [vmem:[%s193 + $0x6c] sm:$0xf]
      %v230 = vld [vmem:[%s193 + $0x70] sm:$0xf]
      %v231 = vld [vmem:[%s193 + $0x74] sm:$0xf]
      %v232 = vld [vmem:[%s193 + $0x78] sm:$0xf]
      %v233 = vld [vmem:[%s193 + $0x7c] sm:$0xf]
      %v234 = vld [vmem:[%s1] sm:$0xf]
      %v235 = vld [vmem:[%s1 + $0x4] sm:$0xf]
      %v236 = vld [vmem:[%s1 + $0x8] sm:$0xf]
      %v237 = vld [vmem:[%s1 + $0xc] sm:$0xf]
      %v238 = vld [vmem:[%s1 + $0x10] sm:$0xf]
      %v239 = vld [vmem:[%s1 + $0x14] sm:$0xf]
      %v240 = vld [vmem:[%s1 + $0x18] sm:$0xf]
      %v241 = vld [vmem:[%s1 + $0x1c] sm:$0xf]
      %v242 = vld [vmem:[%s1 + $0x20] sm:$0xf]
      %v243 = vld [vmem:[%s1 + $0x24] sm:$0xf]
      %v244 = vld [vmem:[%s1 + $0x28] sm:$0xf]
      %v245 = vld [vmem:[%s1 + $0x2c] sm:$0xf]
      %v246 = vld [vmem:[%s1 + $0x30] sm:$0xf]
      %v247 = vld [vmem:[%s1 + $0x34] sm:$0xf]
      %v248 = vld [vmem:[%s1 + $0x38] sm:$0xf]
      %v249 = vld [vmem:[%s1 + $0x3c] sm:$0xf]
      %v282 = vunpack.c.l.b16 %v202
      %v283 = vunpack.c.l.b16 %v203
      %v284 = vunpack.c.l.b16 %v204
      %v285 = vunpack.c.l.b16 %v205
      %v286 = vunpack.c.l.b16 %v206
      %v287 = vunpack.c.l.b16 %v207
      %v288 = vunpack.c.l.b16 %v208
      %v289 = vunpack.c.l.b16 %v209
      %v290 = vunpack.c.l.b16 %v210
      %v291 = vunpack.c.l.b16 %v211
      %v292 = vunpack.c.l.b16 %v212
      %v293 = vunpack.c.l.b16 %v213
      %v294 = vunpack.c.l.b16 %v214
      %v295 = vunpack.c.l.b16 %v215
      %v296 = vunpack.c.l.b16 %v216
      %v297 = vunpack.c.l.b16 %v217
      %v298 = vunpack.c.l.b16 %v218
      %v299 = vunpack.c.l.b16 %v219
      %v300 = vunpack.c.l.b16 %v220
      %v301 = vunpack.c.l.b16 %v221
      %v302 = vunpack.c.l.b16 %v222
      %v303 = vunpack.c.l.b16 %v223
      %v304 = vunpack.c.l.b16 %v224
      %v305 = vunpack.c.l.b16 %v225
      %v306 = vunpack.c.l.b16 %v226
      %v307 = vunpack.c.l.b16 %v227
      %v308 = vunpack.c.l.b16 %v228
      %v309 = vunpack.c.l.b16 %v229
      %v310 = vunpack.c.l.b16 %v230
      %v311 = vunpack.c.l.b16 %v231
      %v312 = vunpack.c.l.b16 %v232
      %v313 = vunpack.c.l.b16 %v233
      %v314 = vpack.c.b16 %v283, %v282
      %v315 = vpack.c.b16 %v285, %v284
      %v316 = vpack.c.b16 %v287, %v286
      %v317 = vpack.c.b16 %v289, %v288
      %v318 = vpack.c.b16 %v291, %v290
      %v319 = vpack.c.b16 %v293, %v292
      %v320 = vpack.c.b16 %v295, %v294
      %v321 = vpack.c.b16 %v297, %v296
      %v322 = vpack.c.b16 %v299, %v298
      %v323 = vpack.c.b16 %v301, %v300
      %v324 = vpack.c.b16 %v303, %v302
      %v325 = vpack.c.b16 %v305, %v304
      %v326 = vpack.c.b16 %v307, %v306
      %v327 = vpack.c.b16 %v309, %v308
      %v328 = vpack.c.b16 %v311, %v310
      %v329 = vpack.c.b16 %v313, %v312
      %v362 = vunpack.c.l.b16 %v234
      %v363 = vunpack.c.l.b16 %v235
      %v364 = vunpack.c.l.b16 %v236
      %v365 = vunpack.c.l.b16 %v237
      %v366 = vunpack.c.l.b16 %v238
      %v367 = vunpack.c.l.b16 %v239
      %v368 = vunpack.c.l.b16 %v240
      %v369 = vunpack.c.l.b16 %v241
      %v370 = vunpack.c.l.b16 %v242
      %v371 = vunpack.c.l.b16 %v243
      %v372 = vunpack.c.l.b16 %v244
      %v373 = vunpack.c.l.b16 %v245
      %v374 = vunpack.c.l.b16 %v246
      %v375 = vunpack.c.l.b16 %v247
      %v376 = vunpack.c.l.b16 %v248
      %v377 = vunpack.c.l.b16 %v249
      %v378 = vpack.c.b16 %v363, %v362
      %v379 = vpack.c.b16 %v365, %v364
      %v380 = vpack.c.b16 %v367, %v366
      %v381 = vpack.c.b16 %v369, %v368
      %v382 = vpack.c.b16 %v371, %v370
      %v383 = vpack.c.b16 %v373, %v372
      %v384 = vpack.c.b16 %v375, %v374
      %v385 = vpack.c.b16 %v377, %v376
      %394 = vmatprep.subr.bf16.mxu0 0
      %395 = vmatpush1.bf16.msra.mxu0 %v378
      %396 = vmatprep.subr.bf16.mxu0 0
      %397 = vmatpush1.bf16.msra.mxu0 %v379
      %398 = vmatprep.subr.bf16.mxu0 0
      %399 = vmatpush1.bf16.msra.mxu0 %v380
      %400 = vmatprep.subr.bf16.mxu0 0
      %401 = vmatpush1.bf16.msra.mxu0 %v381
      %402 = vmatprep.subr.bf16.mxu0 0
      %403 = vmatpush1.bf16.msra.mxu0 %v382
      %404 = vmatprep.subr.bf16.mxu0 0
      %405 = vmatpush1.bf16.msra.mxu0 %v383
      %406 = vmatprep.subr.bf16.mxu0 0
      %407 = vmatpush1.bf16.msra.mxu0 %v384
      %408 = vmatprep.subr.bf16.mxu0 0
      %409 = vmatpush1.bf16.msra.mxu0 %v385
      %410 = vmatprep.subr.bf16.mxu0 0
      %411 = vmatpush1.bf16.msra.mxu0 0
      %412 = vmatprep.subr.bf16.mxu0 0
      %413 = vmatpush1.bf16.msra.mxu0 0
      %414 = vmatprep.subr.bf16.mxu0 0
      %415 = vmatpush1.bf16.msra.mxu0 0
      %416 = vmatprep.subr.bf16.mxu0 0
      %417 = vmatpush1.bf16.msra.mxu0 0
      %418 = vmatprep.subr.bf16.mxu0 0
      %419 = vmatpush1.bf16.msra.mxu0 0
      %420 = vmatprep.subr.bf16.mxu0 0
      %421 = vmatpush1.bf16.msra.mxu0 0
      %422 = vmatprep.subr.bf16.mxu0 0
      %423 = vmatpush1.bf16.msra.mxu0 0
      %424 = vmatprep.subr.bf16.mxu0 0
      %425 = vmatpush1.bf16.msra.mxu0 0
      %426 = vmatprep.mubr.bf16.mxu0 0
      %427 = vmatmul.mubr.bf16.gmra.mrb[0].mxu0 %v314
      %v428 = vpop.f32.mrb[0].mxu0
      %v429 = vadd.f32 0.0, %v428
      %v430 = vpop.f32.mrb[0].mxu0
      %v431 = vpop.f32.mrb[0].mxu0
      %v432 = vadd.f32 0.0, %v431
      %v433 = vpop.f32.mrb[0].mxu0
      %434 = vmatprep.mubr.bf16.mxu0 0
      %435 = vmatmul.mubr.bf16.gmra.mrb[0].mxu0 %v315
      %v436 = vpop.f32.mrb[0].mxu0
      %v437 = vadd.f32 0.0, %v436
      %v438 = vpop.f32.mrb[0].mxu0
      %v439 = vpop.f32.mrb[0].mxu0
      %v440 = vadd.f32 0.0, %v439
      %v441 = vpop.f32.mrb[0].mxu0
      %442 = vmatprep.mubr.bf16.mxu0 0
      %443 = vmatmul.mubr.bf16.gmra.mrb[0].mxu0 %v316
      %v444 = vpop.f32.mrb[0].mxu0
      %v445 = vadd.f32 0.0, %v444
      %v446 = vpop.f32.mrb[0].mxu0
      %v447 = vpop.f32.mrb[0].mxu0
      %v448 = vadd.f32 0.0, %v447
      %v449 = vpop.f32.mrb[0].mxu0
      %450 = vmatprep.mubr.bf16.mxu0 0
      %451 = vmatmul.mubr.bf16.gmra.mrb[0].mxu0 %v317
      %v452 = vpop.f32.mrb[0].mxu0
      %v453 = vadd.f32 0.0, %v452
      %v454 = vpop.f32.mrb[0].mxu0
      %v455 = vpop.f32.mrb[0].mxu0
      %v456 = vadd.f32 0.0, %v455
      %v457 = vpop.f32.mrb[0].mxu0
      %458 = vmatprep.mubr.bf16.mxu0 0
      %459 = vmatmul.mubr.bf16.gmra.mrb[0].mxu0 %v318
      %v460 = vpop.f32.mrb[0].mxu0
      %v461 = vadd.f32 0.0, %v460
      %v462 = vpop.f32.mrb[0].mxu0
      %v463 = vpop.f32.mrb[0].mxu0
      %v464 = vadd.f32 0.0, %v463
      %v465 = vpop.f32.mrb[0].mxu0
      %466 = vmatprep.mubr.bf16.mxu0 0
      %467 = vmatmul.mubr.bf16.gmra.mrb[0].mxu0 %v319
      %v468 = vpop.f32.mrb[0].mxu0
      %v469 = vadd.f32 0.0, %v468
      %v470 = vpop.f32.mrb[0].mxu0
      %v471 = vpop.f32.mrb[0].mxu0
      %v472 = vadd.f32 0.0, %v471
      %v473 = vpop.f32.mrb[0].mxu0
      %474 = vmatprep.mubr.bf16.mxu0 0
      %475 = vmatmul.mubr.bf16.gmra.mrb[0].mxu0 %v320
      %v476 = vpop.f32.mrb[0].mxu0
      %v477 = vadd.f32 0.0, %v476
      %v478 = vpop.f32.mrb[0].mxu0
      %v479 = vpop.f32.mrb[0].mxu0
      %v480 = vadd.f32 0.0, %v479
      %v481 = vpop.f32.mrb[0].mxu0
      %482 = vmatprep.mubr.bf16.mxu0 0
      %483 = vmatmul.mubr.bf16.gmra.mrb[0].mxu0 %v321
      %v484 = vpop.f32.mrb[0].mxu0
      %v485 = vadd.f32 0.0, %v484
      %v486 = vpop.f32.mrb[0].mxu0
      %v487 = vpop.f32.mrb[0].mxu0
      %v488 = vadd.f32 0.0, %v487
      %v489 = vpop.f32.mrb[0].mxu0
      %490 = vmatprep.mubr.bf16.mxu0 0
      %491 = vmatmul.mubr.bf16.gmra.mrb[0].mxu0 %v322
      %v492 = vpop.f32.mrb[0].mxu0
      %v493 = vadd.f32 0.0, %v492
      %v494 = vpop.f32.mrb[0].mxu0
      %v495 = vpop.f32.mrb[0].mxu0
      %v496 = vadd.f32 0.0, %v495
      %v497 = vpop.f32.mrb[0].mxu0
      %498 = vmatprep.mubr.bf16.mxu0 0
      %499 = vmatmul.mubr.bf16.gmra.mrb[0].mxu0 %v323
      %v500 = vpop.f32.mrb[0].mxu0
      %v501 = vadd.f32 0.0, %v500
      %v502 = vpop.f32.mrb[0].mxu0
      %v503 = vpop.f32.mrb[0].mxu0
      %v504 = vadd.f32 0.0, %v503
      %v505 = vpop.f32.mrb[0].mxu0
      %506 = vmatprep.mubr.bf16.mxu0 0
      %507 = vmatmul.mubr.bf16.gmra.mrb[0].mxu0 %v324
      %v508 = vpop.f32.mrb[0].mxu0
      %v509 = vadd.f32 0.0, %v508
      %v510 = vpop.f32.mrb[0].mxu0
      %v511 = vpop.f32.mrb[0].mxu0
      %v512 = vadd.f32 0.0, %v511
      %v513 = vpop.f32.mrb[0].mxu0
      %514 = vmatprep.mubr.bf16.mxu0 0
      %515 = vmatmul.mubr.bf16.gmra.mrb[0].mxu0 %v325
      %v516 = vpop.f32.mrb[0].mxu0
      %v517 = vadd.f32 0.0, %v516
      %v518 = vpop.f32.mrb[0].mxu0
      %v519 = vpop.f32.mrb[0].mxu0
      %v520 = vadd.f32 0.0, %v519
      %v521 = vpop.f32.mrb[0].mxu0
      %522 = vmatprep.mubr.bf16.mxu0 0
      %523 = vmatmul.mubr.bf16.gmra.mrb[0].mxu0 %v326
      %v524 = vpop.f32.mrb[0].mxu0
      %v525 = vadd.f32 0.0, %v524
      %v526 = vpop.f32.mrb[0].mxu0
      %v527 = vpop.f32.mrb[0].mxu0
      %v528 = vadd.f32 0.0, %v527
      %v529 = vpop.f32.mrb[0].mxu0
      %530 = vmatprep.mubr.bf16.mxu0 0
      %531 = vmatmul.mubr.bf16.gmra.mrb[0].mxu0 %v327
      %v532 = vpop.f32.mrb[0].mxu0
      %v533 = vadd.f32 0.0, %v532
      %v534 = vpop.f32.mrb[0].mxu0
      %v535 = vpop.f32.mrb[0].mxu0
      %v536 = vadd.f32 0.0, %v535
      %v537 = vpop.f32.mrb[0].mxu0
      %538 = vmatprep.mubr.bf16.mxu0 0
      %539 = vmatmul.mubr.bf16.gmra.mrb[0].mxu0 %v328
      %v540 = vpop.f32.mrb[0].mxu0
      %v541 = vadd.f32 0.0, %v540
      %v542 = vpop.f32.mrb[0].mxu0
      %v543 = vpop.f32.mrb[0].mxu0
      %v544 = vadd.f32 0.0, %v543
      %v545 = vpop.f32.mrb[0].mxu0
      %546 = vmatprep.mubr.bf16.mxu0 0
      %547 = vmatmul.mubr.bf16.gmra.mrb[0].mxu0 %v329
      %v548 = vpop.f32.mrb[0].mxu0
      %v549 = vadd.f32 0.0, %v548
      %v550 = vpop.f32.mrb[0].mxu0
      %v551 = vpop.f32.mrb[0].mxu0
      %v552 = vadd.f32 0.0, %v551
      %v553 = vpop.f32.mrb[0].mxu0
      %554 = vdwg.mxu0
      %v555 = vld [vmem:[%s2] sm:$0x1]
      %v557 = vlaneseq
      %v558 = vshrl.u32 %v557, 7
      %v559 = vsub.s32 0, %v558
      %v560 = vrot.slane %v555, %v559
      %v562 = vmul.f32 %v429, %v560
      %v563 = vmul.f32 %v432, %v560
      %v564 = vmul.f32 %v437, %v560
      %v565 = vmul.f32 %v440, %v560
      %v566 = vmul.f32 %v445, %v560
      %v567 = vmul.f32 %v448, %v560
      %v568 = vmul.f32 %v453, %v560
      %v569 = vmul.f32 %v456, %v560
      %v570 = vmul.f32 %v461, %v560
      %v571 = vmul.f32 %v464, %v560
      %v572 = vmul.f32 %v469, %v560
      %v573 = vmul.f32 %v472, %v560
      %v574 = vmul.f32 %v477, %v560
      %v575 = vmul.f32 %v480, %v560
      %v576 = vmul.f32 %v485, %v560
      %v577 = vmul.f32 %v488, %v560
      %v578 = vmul.f32 %v493, %v560
      %v579 = vmul.f32 %v496, %v560
      %v580 = vmul.f32 %v501, %v560
      %v581 = vmul.f32 %v504, %v560
      %v582 = vmul.f32 %v509, %v560
      %v583 = vmul.f32 %v512, %v560
      %v584 = vmul.f32 %v517, %v560
      %v585 = vmul.f32 %v520, %v560
      %v586 = vmul.f32 %v525, %v560
      %v587 = vmul.f32 %v528, %v560
      %v588 = vmul.f32 %v533, %v560
      %v589 = vmul.f32 %v536, %v560
      %v590 = vmul.f32 %v541, %v560
      %v591 = vmul.f32 %v544, %v560
      %v592 = vmul.f32 %v549, %v560
      %v593 = vmul.f32 %v552, %v560
      %v594 = vld [vmem:[%s3] sm:$0x1]
      %v596 = vlaneseq
      %v597 = vshrl.u32 %v596, 7
      %v598 = vsub.s32 0, %v597
      %v599 = vrot.slane %v594, %v598
      %v601 = vadd.f32 %v562, %v599
      %v602 = vadd.f32 %v563, %v599
      %v603 = vadd.f32 %v564, %v599
      %v604 = vadd.f32 %v565, %v599
      %v605 = vadd.f32 %v566, %v599
      %v606 = vadd.f32 %v567, %v599
      %v607 = vadd.f32 %v568, %v599
      %v608 = vadd.f32 %v569, %v599
      %v609 = vadd.f32 %v570, %v599
      %v610 = vadd.f32 %v571, %v599
      %v611 = vadd.f32 %v572, %v599
      %v612 = vadd.f32 %v573, %v599
      %v613 = vadd.f32 %v574, %v599
      %v614 = vadd.f32 %v575, %v599
      %v615 = vadd.f32 %v576, %v599
      %v616 = vadd.f32 %v577, %v599
      %v617 = vadd.f32 %v578, %v599
      %v618 = vadd.f32 %v579, %v599
      %v619 = vadd.f32 %v580, %v599
      %v620 = vadd.f32 %v581, %v599
      %v621 = vadd.f32 %v582, %v599
      %v622 = vadd.f32 %v583, %v599
      %v623 = vadd.f32 %v584, %v599
      %v624 = vadd.f32 %v585, %v599
      %v625 = vadd.f32 %v586, %v599
      %v626 = vadd.f32 %v587, %v599
      %v627 = vadd.f32 %v588, %v599
      %v628 = vadd.f32 %v589, %v599
      %v629 = vadd.f32 %v590, %v599
      %v630 = vadd.f32 %v591, %v599
      %v631 = vadd.f32 %v592, %v599
      %v632 = vadd.f32 %v593, %v599
      %vm633 = vcmp.gt.f32.partialorder %v601, 0.0
      %vm634 = vcmp.gt.f32.partialorder %v602, 0.0
      %vm635 = vcmp.gt.f32.partialorder %v603, 0.0
      %vm636 = vcmp.gt.f32.partialorder %v604, 0.0
      %vm637 = vcmp.gt.f32.partialorder %v605, 0.0
      %vm638 = vcmp.gt.f32.partialorder %v606, 0.0
      %vm639 = vcmp.gt.f32.partialorder %v607, 0.0
      %vm640 = vcmp.gt.f32.partialorder %v608, 0.0
      %vm641 = vcmp.gt.f32.partialorder %v609, 0.0
      %vm642 = vcmp.gt.f32.partialorder %v610, 0.0
      %vm643 = vcmp.gt.f32.partialorder %v611, 0.0
      %vm644 = vcmp.gt.f32.partialorder %v612, 0.0
      %vm645 = vcmp.gt.f32.partialorder %v613, 0.0
      %vm646 = vcmp.gt.f32.partialorder %v614, 0.0
      %vm647 = vcmp.gt.f32.partialorder %v615, 0.0
      %vm648 = vcmp.gt.f32.partialorder %v616, 0.0
      %vm649 = vcmp.gt.f32.partialorder %v617, 0.0
      %vm650 = vcmp.gt.f32.partialorder %v618, 0.0
      %vm651 = vcmp.gt.f32.partialorder %v619, 0.0
      %vm652 = vcmp.gt.f32.partialorder %v620, 0.0
      %vm653 = vcmp.gt.f32.partialorder %v621, 0.0
      %vm654 = vcmp.gt.f32.partialorder %v622, 0.0
      %vm655 = vcmp.gt.f32.partialorder %v623, 0.0
      %vm656 = vcmp.gt.f32.partialorder %v624, 0.0
      %vm657 = vcmp.gt.f32.partialorder %v625, 0.0
      %vm658 = vcmp.gt.f32.partialorder %v626, 0.0
      %vm659 = vcmp.gt.f32.partialorder %v627, 0.0
      %vm660 = vcmp.gt.f32.partialorder %v628, 0.0
      %vm661 = vcmp.gt.f32.partialorder %v629, 0.0
      %vm662 = vcmp.gt.f32.partialorder %v630, 0.0
      %vm663 = vcmp.gt.f32.partialorder %v631, 0.0
      %vm664 = vcmp.gt.f32.partialorder %v632, 0.0
      %v665 = vmul.f32 %v601, 0.2
      %v666 = vmul.f32 %v602, 0.2
      %v667 = vmul.f32 %v603, 0.2
      %v668 = vmul.f32 %v604, 0.2
      %v669 = vmul.f32 %v605, 0.2
      %v670 = vmul.f32 %v606, 0.2
      %v671 = vmul.f32 %v607, 0.2
      %v672 = vmul.f32 %v608, 0.2
      %v673 = vmul.f32 %v609, 0.2
      %v674 = vmul.f32 %v610, 0.2
      %v675 = vmul.f32 %v611, 0.2
      %v676 = vmul.f32 %v612, 0.2
      %v677 = vmul.f32 %v613, 0.2
      %v678 = vmul.f32 %v614, 0.2
      %v679 = vmul.f32 %v615, 0.2
      %v680 = vmul.f32 %v616, 0.2
      %v681 = vmul.f32 %v617, 0.2
      %v682 = vmul.f32 %v618, 0.2
      %v683 = vmul.f32 %v619, 0.2
      %v684 = vmul.f32 %v620, 0.2
      %v685 = vmul.f32 %v621, 0.2
      %v686 = vmul.f32 %v622, 0.2
      %v687 = vmul.f32 %v623, 0.2
      %v688 = vmul.f32 %v624, 0.2
      %v689 = vmul.f32 %v625, 0.2
      %v690 = vmul.f32 %v626, 0.2
      %v691 = vmul.f32 %v627, 0.2
      %v692 = vmul.f32 %v628, 0.2
      %v693 = vmul.f32 %v629, 0.2
      %v694 = vmul.f32 %v630, 0.2
      %v695 = vmul.f32 %v631, 0.2
      %v696 = vmul.f32 %v632, 0.2
      %v697 = vsel %vm633, %v601, %v665
      %v698 = vsel %vm634, %v602, %v666
      %v699 = vsel %vm635, %v603, %v667
      %v700 = vsel %vm636, %v604, %v668
      %v701 = vsel %vm637, %v605, %v669
      %v702 = vsel %vm638, %v606, %v670
      %v703 = vsel %vm639, %v607, %v671
      %v704 = vsel %vm640, %v608, %v672
      %v705 = vsel %vm641, %v609, %v673
      %v706 = vsel %vm642, %v610, %v674
      %v707 = vsel %vm643, %v611, %v675
      %v708 = vsel %vm644, %v612, %v676
      %v709 = vsel %vm645, %v613, %v677
      %v710 = vsel %vm646, %v614, %v678
      %v711 = vsel %vm647, %v615, %v679
      %v712 = vsel %vm648, %v616, %v680
      %v713 = vsel %vm649, %v617, %v681
      %v714 = vsel %vm650, %v618, %v682
      %v715 = vsel %vm651, %v619, %v683
      %v716 = vsel %vm652, %v620, %v684
      %v717 = vsel %vm653, %v621, %v685
      %v718 = vsel %vm654, %v622, %v686
      %v719 = vsel %vm655, %v623, %v687
      %v720 = vsel %vm656, %v624, %v688
      %v721 = vsel %vm657, %v625, %v689
      %v722 = vsel %vm658, %v626, %v690
      %v723 = vsel %vm659, %v627, %v691
      %v724 = vsel %vm660, %v628, %v692
      %v725 = vsel %vm661, %v629, %v693
      %v726 = vsel %vm662, %v630, %v694
      %v727 = vsel %vm663, %v631, %v695
      %v728 = vsel %vm664, %v632, %v696
      %v729 = vpack.c.bf16 %v698, %v697
      %v730 = vpack.c.bf16 %v700, %v699
      %v731 = vpack.c.bf16 %v702, %v701
      %v732 = vpack.c.bf16 %v704, %v703
      %v733 = vpack.c.bf16 %v706, %v705
      %v734 = vpack.c.bf16 %v708, %v707
      %v735 = vpack.c.bf16 %v710, %v709
      %v736 = vpack.c.bf16 %v712, %v711
      %v737 = vpack.c.bf16 %v714, %v713
      %v738 = vpack.c.bf16 %v716, %v715
      %v739 = vpack.c.bf16 %v718, %v717
      %v740 = vpack.c.bf16 %v720, %v719
      %v741 = vpack.c.bf16 %v722, %v721
      %v742 = vpack.c.bf16 %v724, %v723
      %v743 = vpack.c.bf16 %v726, %v725
      %v744 = vpack.c.bf16 %v728, %v727
      %v761 = vunpack.c.l.b16 %v729
      %v762 = vunpack.c.h.b16 %v729
      %v763 = vunpack.c.l.b16 %v730
      %v764 = vunpack.c.h.b16 %v730
      %v765 = vunpack.c.l.b16 %v731
      %v766 = vunpack.c.h.b16 %v731
      %v767 = vunpack.c.l.b16 %v732
      %v768 = vunpack.c.h.b16 %v732
      %v769 = vunpack.c.l.b16 %v733
      %v770 = vunpack.c.h.b16 %v733
      %v771 = vunpack.c.l.b16 %v734
      %v772 = vunpack.c.h.b16 %v734
      %v773 = vunpack.c.l.b16 %v735
      %v774 = vunpack.c.h.b16 %v735
      %v775 = vunpack.c.l.b16 %v736
      %v776 = vunpack.c.h.b16 %v736
      %v777 = vunpack.c.l.b16 %v737
      %v778 = vunpack.c.h.b16 %v737
      %v779 = vunpack.c.l.b16 %v738
      %v780 = vunpack.c.h.b16 %v738
      %v781 = vunpack.c.l.b16 %v739
      %v782 = vunpack.c.h.b16 %v739
      %v783 = vunpack.c.l.b16 %v740
      %v784 = vunpack.c.h.b16 %v740
      %v785 = vunpack.c.l.b16 %v741
      %v786 = vunpack.c.h.b16 %v741
      %v787 = vunpack.c.l.b16 %v742
      %v788 = vunpack.c.h.b16 %v742
      %v789 = vunpack.c.l.b16 %v743
      %v790 = vunpack.c.h.b16 %v743
      %v791 = vunpack.c.l.b16 %v744
      %v792 = vunpack.c.h.b16 %v744
      %v793 = vpack.c.b16 %v761, %v761
      %v794 = vpack.c.b16 %v762, %v762
      %v795 = vpack.c.b16 %v763, %v763
      %v796 = vpack.c.b16 %v764, %v764
      %v797 = vpack.c.b16 %v765, %v765
      %v798 = vpack.c.b16 %v766, %v766
      %v799 = vpack.c.b16 %v767, %v767
      %v800 = vpack.c.b16 %v768, %v768
      %v801 = vpack.c.b16 %v769, %v769
      %v802 = vpack.c.b16 %v770, %v770
      %v803 = vpack.c.b16 %v771, %v771
      %v804 = vpack.c.b16 %v772, %v772
      %v805 = vpack.c.b16 %v773, %v773
      %v806 = vpack.c.b16 %v774, %v774
      %v807 = vpack.c.b16 %v775, %v775
      %v808 = vpack.c.b16 %v776, %v776
      %v809 = vpack.c.b16 %v777, %v777
      %v810 = vpack.c.b16 %v778, %v778
      %v811 = vpack.c.b16 %v779, %v779
      %v812 = vpack.c.b16 %v780, %v780
      %v813 = vpack.c.b16 %v781, %v781
      %v814 = vpack.c.b16 %v782, %v782
      %v815 = vpack.c.b16 %v783, %v783
      %v816 = vpack.c.b16 %v784, %v784
      %v817 = vpack.c.b16 %v785, %v785
      %v818 = vpack.c.b16 %v786, %v786
      %v819 = vpack.c.b16 %v787, %v787
      %v820 = vpack.c.b16 %v788, %v788
      %v821 = vpack.c.b16 %v789, %v789
      %v822 = vpack.c.b16 %v790, %v790
      %v823 = vpack.c.b16 %v791, %v791
      %v824 = vpack.c.b16 %v792, %v792
      %857 = vst [vmem:[%s199] sm:$0xf] %v793
      %858 = vst [vmem:[%s199 + $0x4] sm:$0xf] %v794
      %859 = vst [vmem:[%s199 + $0x8] sm:$0xf] %v795
      %860 = vst [vmem:[%s199 + $0xc] sm:$0xf] %v796
      %861 = vst [vmem:[%s199 + $0x10] sm:$0xf] %v797
      %862 = vst [vmem:[%s199 + $0x14] sm:$0xf] %v798
      %863 = vst [vmem:[%s199 + $0x18] sm:$0xf] %v799
      %864 = vst [vmem:[%s199 + $0x1c] sm:$0xf] %v800
      %865 = vst [vmem:[%s199 + $0x20] sm:$0xf] %v801
      %866 = vst [vmem:[%s199 + $0x24] sm:$0xf] %v802
      %867 = vst [vmem:[%s199 + $0x28] sm:$0xf] %v803
      %868 = vst [vmem:[%s199 + $0x2c] sm:$0xf] %v804
      %869 = vst [vmem:[%s199 + $0x30] sm:$0xf] %v805
      %870 = vst [vmem:[%s199 + $0x34] sm:$0xf] %v806
      %871 = vst [vmem:[%s199 + $0x38] sm:$0xf] %v807
      %872 = vst [vmem:[%s199 + $0x3c] sm:$0xf] %v808
      %873 = vst [vmem:[%s199 + $0x40] sm:$0xf] %v809
      %874 = vst [vmem:[%s199 + $0x44] sm:$0xf] %v810
      %875 = vst [vmem:[%s199 + $0x48] sm:$0xf] %v811
      %876 = vst [vmem:[%s199 + $0x4c] sm:$0xf] %v812
      %877 = vst [vmem:[%s199 + $0x50] sm:$0xf] %v813
      %878 = vst [vmem:[%s199 + $0x54] sm:$0xf] %v814
      %879 = vst [vmem:[%s199 + $0x58] sm:$0xf] %v815
      %880 = vst [vmem:[%s199 + $0x5c] sm:$0xf] %v816
      %881 = vst [vmem:[%s199 + $0x60] sm:$0xf] %v817
      %882 = vst [vmem:[%s199 + $0x64] sm:$0xf] %v818
      %883 = vst [vmem:[%s199 + $0x68] sm:$0xf] %v819
      %884 = vst [vmem:[%s199 + $0x6c] sm:$0xf] %v820
      %885 = vst [vmem:[%s199 + $0x70] sm:$0xf] %v821
      %886 = vst [vmem:[%s199 + $0x74] sm:$0xf] %v822
      %887 = vst [vmem:[%s199 + $0x78] sm:$0xf] %v823
      %888 = vst [vmem:[%s199 + $0x7c] sm:$0xf] %v824
      %s889 = smul.u32 32, %s15
      %p890 = scmp.lt.s32.totalorder %s889, 63
      %s891 = scalar_select %p890, %s889, 63
      %s892 = smul.addr %s891, 4
      %s893 = scalar_lea.vmem %s4, %s892
      // Predicated region
      $region37: #{discriminator_forward.9} parent=35 // pred_check
        %p894 = pneg %p122
      $region38: #{discriminator_forward.9} parent=35 // pred_check_branch
        %896 = sbr.rel (%p894) target = $region40
      $region39: #{discriminator_forward.9} parent=35 // pred_region
        %s897 = smul.u32 32, %s15
      $region40: #{discriminator_forward.9} parent=35 // pred_fallthru
        _
    $region36: #{discriminator_forward.9} parent=5 // pred_fallthru
      _
    %p898 = scmp.le.s32.totalorder 2, %s10
    // Predicated region
    $region41: #{discriminator_forward.9} parent=5 // pred_check
      %p899 = pneg %p898
    $region42: #{discriminator_forward.9} parent=5 // pred_check_branch
      %901 = sbr.rel (%p899) target = $region44
    $region43: #{discriminator_forward.9} parent=5 // pred_region
      %s902 = ssub.s32 %s10, 2
      // Predicated region
      $region45: #{discriminator_forward.9} parent=43 // pred_check
        %p903 = pneg %p128
      $region46: #{discriminator_forward.9} parent=43 // pred_check_branch
        %905 = sbr.rel (%p903) target = $region48
      $region47: #{discriminator_forward.9} parent=43 // pred_region
        %s906 = smul.u32 32, %s16
        %p907 = scmp.lt.s32.totalorder %s906, 63
        %s908 = scalar_select %p907, %s906, 63
        %s909 = smul.addr %s908, 4
        %s910 = scalar_lea.vmem %s4, %s909
      $region48: #{discriminator_forward.9} parent=43 // pred_fallthru
        _
    $region44: #{discriminator_forward.9} parent=5 // pred_fallthru
      _
  $region6: #{discriminator_forward.9} parent=0 // loop_footer
    %s14 = sadd.s32 1, %s10
  $region7: #{discriminator_forward.9} parent=0 // loop_footer_branch
    %9 = sbr.rel target = $region3
  $region8: #{discriminator_forward.9} parent=0 // loop_exit
    _

// kernel: discriminator_forward.10
$region0: #{discriminator_forward.10}
  #allocation0 [shape = 'u32[]', space=smem, size = 0x4, offset = 0x4, fixed_abs, tag = 'smem constant byte address 0x4 - core index']
  #allocation1 [shape = 'u32[144,128]{1,0:T(1,128)}', space=vmem, size = 0x12000, scoped, tag = 'internal scratch']
  %s0 = inlined_call_operand.vmem [shape: bf16[128,256], index: 0, kind: input, shape index: {}]
  %s1 = inlined_call_operand.vmem [shape: bf16[256,128], index: 1, kind: input, shape index: {}]
  %s2 = inlined_call_operand.vmem [shape: f32[2,2,128], index: 2, kind: output, shape index: {}]
  %s3 = sld [smem:[#allocation0]]
  $region41: #{discriminator_forward.10} parent=0
    _
  %s5 = ssub.s32 1, %s3
  %s6 = scalar_select 0, %s5, %s3
  loop: start=0, step=1, limit=4
  $region2: #{discriminator_forward.10} parent=0 // loop_pre_header
    _
  $region3: #{discriminator_forward.10} parent=0 // loop_header
    %s8 = sphi 0, %s12
    %p9 = scmp.ge.s32.totalorder %s8, 4
    %s18 = sphi 0, %s20
    %s21 = sphi 0, %s18
    %s22 = sphi 0, %s21
    %s38 = sphi 0, %s22
    %s42 = sphi 0, %s42
    %s44 = sphi 0, %s42
    %s45 = sphi 0, %s44
    %s59 = sphi 0, %s45
    %s65 = sphi 0, %s67
    %s68 = sphi 0, %s65
    %s69 = sphi 0, %s68
    %s85 = sphi 0, %s69
  $region4: #{discriminator_forward.10} parent=0 // loop_header_branch
    %11 = sbr.rel (%p9) target = $region8
  $region5: #{discriminator_forward.10} parent=0 // loop_body
    %s13 = ssub.s32 %s8, 1
    %s14 = ssub.s32 %s8, 2
    %s15 = sadd.s32 %s8, 1
    %s16 = ssub.s32 %s8, %s15
    %p17 = scmp.eq.s32.totalorder %s16, 0
    %s19 = sadd.s32 %s18, 1
    %s20 = scalar_select %p17, %s18, %s19
    %p23 = pneg %p17
    %p24 = scmp.eq.s32.totalorder %s8, 1
    %p25 = por %p23, %p24
    %p26 = scmp.ne.s32.totalorder %s18, %s21
    %p27 = scmp.eq.s32.totalorder %s8, 0
    %p28 = por %p26, %p27
    %p29 = scmp.ne.s32.totalorder %s18, %s21
    %p30 = scmp.eq.s32.totalorder %s13, 1
    %p31 = por %p29, %p30
    %p32 = scmp.ne.s32.totalorder %s21, %s22
    %p33 = scmp.eq.s32.totalorder %s13, 0
    %p34 = por %p32, %p33
    %p35 = scmp.ne.s32.totalorder %s21, %s22
    %p36 = scmp.eq.s32.totalorder %s14, 1
    %p37 = por %p35, %p36
    %p39 = scmp.ne.s32.totalorder %s22, %s38
    %p40 = scmp.eq.s32.totalorder %s14, 0
    %p41 = por %p39, %p40
    %s43 = sadd.s32 %s42, 1
    %p46 = scmp.eq.s32.totalorder %s8, 1
    %p47 = scmp.ne.s32.totalorder %s42, %s44
    %p48 = scmp.eq.s32.totalorder %s8, 0
    %p49 = por %p47, %p48
    %p50 = scmp.ne.s32.totalorder %s42, %s44
    %p51 = scmp.eq.s32.totalorder %s13, 1
    %p52 = por %p50, %p51
    %p53 = scmp.ne.s32.totalorder %s44, %s45
    %p54 = scmp.eq.s32.totalorder %s13, 0
    %p55 = por %p53, %p54
    %p56 = scmp.ne.s32.totalorder %s44, %s45
    %p57 = scmp.eq.s32.totalorder %s14, 1
    %p58 = por %p56, %p57
    %p60 = scmp.ne.s32.totalorder %s45, %s59
    %p61 = scmp.eq.s32.totalorder %s14, 0
    %p62 = por %p60, %p61
    %s63 = ssub.s32 %s8, %s15
    %p64 = scmp.eq.s32.totalorder %s63, 0
    %s66 = sadd.s32 %s65, 1
    %s67 = scalar_select %p64, %s65, %s66
    %p70 = pneg %p64
    %p71 = scmp.eq.s32.totalorder %s8, 1
    %p72 = por %p70, %p71
    %p73 = scmp.ne.s32.totalorder %s65, %s68
    %p74 = scmp.eq.s32.totalorder %s8, 0
    %p75 = por %p73, %p74
    %p76 = scmp.ne.s32.totalorder %s65, %s68
    %p77 = scmp.eq.s32.totalorder %s13, 1
    %p78 = por %p76, %p77
    %p79 = scmp.ne.s32.totalorder %s68, %s69
    %p80 = scmp.eq.s32.totalorder %s13, 0
    %p81 = por %p79, %p80
    %p82 = scmp.ne.s32.totalorder %s68, %s69
    %p83 = scmp.eq.s32.totalorder %s14, 1
    %p84 = por %p82, %p83
    %p86 = scmp.ne.s32.totalorder %s69, %s85
    %p87 = scmp.eq.s32.totalorder %s14, 0
    %p88 = por %p86, %p87
    %p89 = scmp.le.s32.totalorder 1, %s8
    %p90 = scmp.lt.s32.totalorder %s8, 3
    %p91 = pnand %p89, %p90
    %p92 = pneg %p91
    // Predicated region
    $region9: #{discriminator_forward.10} parent=5 // pred_check
      _
    $region10: #{discriminator_forward.10} parent=5 // pred_check_branch
      %94 = sbr.rel (%p91) target = $region12
    $region11: #{discriminator_forward.10} parent=5 // pred_region
      %s95 = ssub.s32 %s8, 1
      // Predicated region
      $region13: #{discriminator_forward.10} parent=11 // pred_check
        %p96 = pneg %p55
      $region14: #{discriminator_forward.10} parent=11 // pred_check_branch
        %98 = sbr.rel (%p96) target = $region16
      $region15: #{discriminator_forward.10} parent=11 // pred_region
        _
      $region16: #{discriminator_forward.10} parent=11 // pred_fallthru
        _
    $region12: #{discriminator_forward.10} parent=5 // pred_fallthru
      _
    %p99 = scmp.lt.s32.totalorder %s8, 2
    // Predicated region
    $region17: #{discriminator_forward.10} parent=5 // pred_check
      %p100 = pneg %p99
    $region18: #{discriminator_forward.10} parent=5 // pred_check_branch
      %102 = sbr.rel (%p100) target = $region20
    $region19: #{discriminator_forward.10} parent=5 // pred_region
      // Predicated region
      $region21: #{discriminator_forward.10} parent=19 // pred_check
        %p103 = pneg %p28
      $region22: #{discriminator_forward.10} parent=19 // pred_check_branch
        %105 = sbr.rel (%p103) target = $region24
      $region23: #{discriminator_forward.10} parent=19 // pred_region
        %s106 = smul.u32 8, %s8
        %p107 = scmp.lt.s32.totalorder %s106, 15
        %s108 = scalar_select %p107, %s106, 15
        %s109 = smul.addr %s108, 2
        %s110 = smul.addr %s109, 4
        %s111 = scalar_lea.vmem %s0, %s110
        %s112 = smul.u32 8, %s8
      $region24: #{discriminator_forward.10} parent=19 // pred_fallthru
        _
    $region20: #{discriminator_forward.10} parent=5 // pred_fallthru
      _
    %p113 = scmp.le.s32.totalorder 1, %s8
    %p114 = scmp.lt.s32.totalorder %s8, 3
    %p115 = pnand %p113, %p114
    %p116 = pneg %p115
    // Predicated region
    $region25: #{discriminator_forward.10} parent=5 // pred_check
      _
    $region26: #{discriminator_forward.10} parent=5 // pred_check_branch
      %118 = sbr.rel (%p115) target = $region28
    $region27: #{discriminator_forward.10} parent=5 // pred_region
      %s119 = ssub.s32 %s8, 1
      %s120 = smul.u32 8, %s13
      %p121 = scmp.lt.s32.totalorder %s120, 15
      %s122 = scalar_select %p121, %s120, 15
      %s123 = smul.addr %s122, 2
      %s124 = smul.addr %s123, 4
      %s125 = scalar_lea.vmem %s0, %s124
      %p126 = pneg %p34
      %p127 = pneg %p31
      %p128 = pneg %p55
      %p129 = pneg %p52
      %p130 = pneg %p81
      %p131 = pneg %p78
      %p132 = scmp.lt.s32.totalorder %s13, 1
      %s133 = scalar_select %p132, %s13, 1
      %s134 = smul.addr %s133, 2
      %s135 = scalar_lea.vmem %s2, %s134
      %s136 = smul.u32 8, %s13
      %p137 = scmp.lt.s32.totalorder %s136, 15
      %s138 = scalar_select %p137, %s136, 15
      %s139 = smul.addr %s138, 2
      %s140 = smul.addr %s139, 4
      %s141 = scalar_lea.vmem %s0, %s140
      %s142 = smul.u32 8, %s13
      %p143 = scmp.lt.s32.totalorder %s13, 1
      %s144 = scalar_select %p143, %s13, 1
      %s145 = smul.addr %s144, 2
      %s146 = scalar_lea.vmem %s2, %s145
      %v148 = vld [vmem:[%s141] sm:$0xff]
      %v149 = vld [vmem:[%s141 + $0x8] sm:$0xff]
      %v150 = vld [vmem:[%s141 + $0x10] sm:$0xff]
      %v151 = vld [vmem:[%s141 + $0x18] sm:$0xff]
      %v152 = vld [vmem:[%s141 + $0x20] sm:$0xff]
      %v153 = vld [vmem:[%s141 + $0x28] sm:$0xff]
      %v154 = vld [vmem:[%s141 + $0x30] sm:$0xff]
      %v155 = vld [vmem:[%s141 + $0x38] sm:$0xff]
      %v156 = vld [vmem:[%s1] sm:$0xf]
      %v157 = vld [vmem:[%s1 + $0x4] sm:$0xf]
      %v158 = vld [vmem:[%s1 + $0x8] sm:$0xf]
      %v159 = vld [vmem:[%s1 + $0xc] sm:$0xf]
      %v160 = vld [vmem:[%s1 + $0x10] sm:$0xf]
      %v161 = vld [vmem:[%s1 + $0x14] sm:$0xf]
      %v162 = vld [vmem:[%s1 + $0x18] sm:$0xf]
      %v163 = vld [vmem:[%s1 + $0x1c] sm:$0xf]
      %v164 = vld [vmem:[%s1 + $0x20] sm:$0xf]
      %v165 = vld [vmem:[%s1 + $0x24] sm:$0xf]
      %v166 = vld [vmem:[%s1 + $0x28] sm:$0xf]
      %v167 = vld [vmem:[%s1 + $0x2c] sm:$0xf]
      %v168 = vld [vmem:[%s1 + $0x30] sm:$0xf]
      %v169 = vld [vmem:[%s1 + $0x34] sm:$0xf]
      %v170 = vld [vmem:[%s1 + $0x38] sm:$0xf]
      %v171 = vld [vmem:[%s1 + $0x3c] sm:$0xf]
      %v172 = vld [vmem:[%s1 + $0x40] sm:$0xf]
      %v173 = vld [vmem:[%s1 + $0x44] sm:$0xf]
      %v174 = vld [vmem:[%s1 + $0x48] sm:$0xf]
      %v175 = vld [vmem:[%s1 + $0x4c] sm:$0xf]
      %v176 = vld [vmem:[%s1 + $0x50] sm:$0xf]
      %v177 = vld [vmem:[%s1 + $0x54] sm:$0xf]
      %v178 = vld [vmem:[%s1 + $0x58] sm:$0xf]
      %v179 = vld [vmem:[%s1 + $0x5c] sm:$0xf]
      %v180 = vld [vmem:[%s1 + $0x60] sm:$0xf]
      %v181 = vld [vmem:[%s1 + $0x64] sm:$0xf]
      %v182 = vld [vmem:[%s1 + $0x68] sm:$0xf]
      %v183 = vld [vmem:[%s1 + $0x6c] sm:$0xf]
      %v184 = vld [vmem:[%s1 + $0x70] sm:$0xf]
      %v185 = vld [vmem:[%s1 + $0x74] sm:$0xf]
      %v186 = vld [vmem:[%s1 + $0x78] sm:$0xf]
      %v187 = vld [vmem:[%s1 + $0x7c] sm:$0xf]
      %v196 = vunpack.c.l.b16 %v148
      %v197 = vunpack.c.h.b16 %v148
      %v198 = vunpack.c.l.b16 %v149
      %v199 = vunpack.c.h.b16 %v149
      %v200 = vunpack.c.l.b16 %v150
      %v201 = vunpack.c.h.b16 %v150
      %v202 = vunpack.c.l.b16 %v151
      %v203 = vunpack.c.h.b16 %v151
      %v204 = vunpack.c.l.b16 %v152
      %v205 = vunpack.c.h.b16 %v152
      %v206 = vunpack.c.l.b16 %v153
      %v207 = vunpack.c.h.b16 %v153
      %v208 = vunpack.c.l.b16 %v154
      %v209 = vunpack.c.h.b16 %v154
      %v210 = vunpack.c.l.b16 %v155
      %v211 = vunpack.c.h.b16 %v155
      %v212 = vpack.c.b16 %v198, %v196
      %v213 = vpack.c.b16 %v199, %v197
      %v214 = vpack.c.b16 %v202, %v200
      %v215 = vpack.c.b16 %v203, %v201
      %v216 = vpack.c.b16 %v206, %v204
      %v217 = vpack.c.b16 %v207, %v205
      %v218 = vpack.c.b16 %v210, %v208
      %v219 = vpack.c.b16 %v211, %v209
      %v260 = vunpack.c.l.b16 %v156
      %v261 = vunpack.c.l.b16 %v157
      %v262 = vunpack.c.l.b16 %v158
      %v263 = vunpack.c.l.b16 %v159
      %v264 = vunpack.c.l.b16 %v160
      %v265 = vunpack.c.l.b16 %v161
      %v266 = vunpack.c.l.b16 %v162
      %v267 = vunpack.c.l.b16 %v163
      %v268 = vunpack.c.l.b16 %v164
      %v269 = vunpack.c.l.b16 %v165
      %v270 = vunpack.c.l.b16 %v166
      %v271 = vunpack.c.l.b16 %v167
      %v272 = vunpack.c.l.b16 %v168
      %v273 = vunpack.c.l.b16 %v169
      %v274 = vunpack.c.l.b16 %v170
      %v275 = vunpack.c.l.b16 %v171
      %v276 = vunpack.c.l.b16 %v172
      %v277 = vunpack.c.l.b16 %v173
      %v278 = vunpack.c.l.b16 %v174
      %v279 = vunpack.c.l.b16 %v175
      %v280 = vunpack.c.l.b16 %v176
      %v281 = vunpack.c.l.b16 %v177
      %v282 = vunpack.c.l.b16 %v178
      %v283 = vunpack.c.l.b16 %v179
      %v284 = vunpack.c.l.b16 %v180
      %v285 = vunpack.c.l.b16 %v181
      %v286 = vunpack.c.l.b16 %v182
      %v287 = vunpack.c.l.b16 %v183
      %v288 = vunpack.c.l.b16 %v184
      %v289 = vunpack.c.l.b16 %v185
      %v290 = vunpack.c.l.b16 %v186
      %v291 = vunpack.c.l.b16 %v187
      %v292 = vpack.c.b16 %v261, %v260
      %v293 = vpack.c.b16 %v263, %v262
      %v294 = vpack.c.b16 %v265, %v264
      %v295 = vpack.c.b16 %v267, %v266
      %v296 = vpack.c.b16 %v269, %v268
      %v297 = vpack.c.b16 %v271, %v270
      %v298 = vpack.c.b16 %v273, %v272
      %v299 = vpack.c.b16 %v275, %v274
      %v300 = vpack.c.b16 %v277, %v276
      %v301 = vpack.c.b16 %v279, %v278
      %v302 = vpack.c.b16 %v281, %v280
      %v303 = vpack.c.b16 %v283, %v282
      %v304 = vpack.c.b16 %v285, %v284
      %v305 = vpack.c.b16 %v287, %v286
      %v306 = vpack.c.b16 %v289, %v288
      %v307 = vpack.c.b16 %v291, %v290
      %324 = vmatprep.subr.bf16.mxu0 0
      %325 = vmatpush1.bf16.msra.mxu0 %v292
      %326 = vmatprep.subr.bf16.mxu0 0
      %327 = vmatpush1.bf16.msra.mxu0 %v293
      %328 = vmatprep.subr.bf16.mxu0 0
      %329 = vmatpush1.bf16.msra.mxu0 %v294
      %330 = vmatprep.subr.bf16.mxu0 0
      %331 = vmatpush1.bf16.msra.mxu0 %v295
      %332 = vmatprep.subr.bf16.mxu0 0
      %333 = vmatpush1.bf16.msra.mxu0 %v296
      %334 = vmatprep.subr.bf16.mxu0 0
      %335 = vmatpush1.bf16.msra.mxu0 %v297
      %336 = vmatprep.subr.bf16.mxu0 0
      %337 = vmatpush1.bf16.msra.mxu0 %v298
      %338 = vmatprep.subr.bf16.mxu0 0
      %339 = vmatpush1.bf16.msra.mxu0 %v299
      %340 = vmatprep.subr.bf16.mxu0 0
      %341 = vmatpush1.bf16.msra.mxu0 %v300
      %342 = vmatprep.subr.bf16.mxu0 0
      %343 = vmatpush1.bf16.msra.mxu0 %v301
      %344 = vmatprep.subr.bf16.mxu0 0
      %345 = vmatpush1.bf16.msra.mxu0 %v302
      %346 = vmatprep.subr.bf16.mxu0 0
      %347 = vmatpush1.bf16.msra.mxu0 %v303
      %348 = vmatprep.subr.bf16.mxu0 0
      %349 = vmatpush1.bf16.msra.mxu0 %v304
      %350 = vmatprep.subr.bf16.mxu0 0
      %351 = vmatpush1.bf16.msra.mxu0 %v305
      %352 = vmatprep.subr.bf16.mxu0 0
      %353 = vmatpush1.bf16.msra.mxu0 %v306
      %354 = vmatprep.subr.bf16.mxu0 0
      %355 = vmatpush1.bf16.msra.mxu0 %v307
      %356 = vmatprep.mubr.bf16.mxu0 %v213
      %357 = vmatmul.mubr.bf16.gmra.mrb[0].mxu0 %v212
      %v358 = vpop.f32.mrb[0].mxu0
      %v359 = vadd.f32 0.0, %v358
      %v360 = vpop.f32.mrb[0].mxu0
      %v361 = vpop.f32.mrb[0].mxu0
      %v362 = vadd.f32 0.0, %v361
      %v363 = vpop.f32.mrb[0].mxu0
      %364 = vmatprep.mubr.bf16.mxu0 %v215
      %365 = vmatmul.mubr.bf16.gmra.mrb[0].mxu0 %v214
      %v366 = vpop.f32.mrb[0].mxu0
      %v367 = vadd.f32 0.0, %v366
      %v368 = vpop.f32.mrb[0].mxu0
      %v369 = vpop.f32.mrb[0].mxu0
      %v370 = vadd.f32 0.0, %v369
      %v371 = vpop.f32.mrb[0].mxu0
      %372 = vmatprep.mubr.bf16.mxu0 %v217
      %373 = vmatmul.mubr.bf16.gmra.mrb[0].mxu0 %v216
      %v374 = vpop.f32.mrb[0].mxu0
      %v375 = vadd.f32 0.0, %v374
      %v376 = vpop.f32.mrb[0].mxu0
      %v377 = vpop.f32.mrb[0].mxu0
      %v378 = vadd.f32 0.0, %v377
      %v379 = vpop.f32.mrb[0].mxu0
      %380 = vmatprep.mubr.bf16.mxu0 %v219
      %381 = vmatmul.mubr.bf16.gmra.mrb[0].mxu0 %v218
      %v382 = vpop.f32.mrb[0].mxu0
      %v383 = vadd.f32 0.0, %v382
      %v384 = vpop.f32.mrb[0].mxu0
      %v385 = vpop.f32.mrb[0].mxu0
      %v386 = vadd.f32 0.0, %v385
      %v387 = vpop.f32.mrb[0].mxu0
      %388 = vdwg.mxu0
      %v389 = vadd.f32 %v359, %v362
      %v390 = vadd.f32 %v389, %v367
      %v391 = vadd.f32 %v390, %v370
      %v392 = vadd.f32 %v391, %v375
      %v393 = vadd.f32 %v392, %v378
      %v394 = vadd.f32 %v393, %v383
      %v395 = vadd.f32 %v394, %v386
      %v396 = vrot.slane %v395, 4
      %v397 = vadd.f32 %v395, %v396
      %v398 = vrot.slane %v397, 2
      %v399 = vadd.f32 %v397, %v398
      %v400 = vrot.slane %v399, 1
      %v401 = vadd.f32 %v399, %v400
      %v402 = vmul.f32 %v359, %v359
      %v403 = vmul.f32 %v362, %v362
      %v404 = vmul.f32 %v367, %v367
      %v405 = vmul.f32 %v370, %v370
      %v406 = vmul.f32 %v375, %v375
      %v407 = vmul.f32 %v378, %v378
      %v408 = vmul.f32 %v383, %v383
      %v409 = vmul.f32 %v386, %v386
      %v410 = vadd.f32 %v402, %v403
      %v411 = vadd.f32 %v410, %v404
      %v412 = vadd.f32 %v411, %v405
      %v413 = vadd.f32 %v412, %v406
      %v414 = vadd.f32 %v413, %v407
      %v415 = vadd.f32 %v414, %v408
      %v416 = vadd.f32 %v415, %v409
      %v417 = vrot.slane %v416, 4
      %v418 = vadd.f32 %v416, %v417
      %v419 = vrot.slane %v418, 2
      %v420 = vadd.f32 %v418, %v419
      %v421 = vrot.slane %v420, 1
      %v422 = vadd.f32 %v420, %v421
      %vm423 = vcmask 1040384
      %v424 = vsel %vm423, %v401, %v422
      %425 = vst [vmem:[%s146] sm:$0x3] %v424
      %p426 = scmp.lt.s32.totalorder %s13, 1
      %s427 = scalar_select %p426, %s13, 1
      %s428 = smul.addr %s427, 2
      %s429 = scalar_lea.vmem %s2, %s428
      // Predicated region
      $region29: #{discriminator_forward.10} parent=27 // pred_check
        %p430 = pneg %p78
      $region30: #{discriminator_forward.10} parent=27 // pred_check_branch
        %432 = sbr.rel (%p430) target = $region32
      $region31: #{discriminator_forward.10} parent=27 // pred_region
        _
      $region32: #{discriminator_forward.10} parent=27 // pred_fallthru
        _
    $region28: #{discriminator_forward.10} parent=5 // pred_fallthru
      _
    %p433 = scmp.le.s32.totalorder 2, %s8
    // Predicated region
    $region33: #{discriminator_forward.10} parent=5 // pred_check
      %p434 = pneg %p433
    $region34: #{discriminator_forward.10} parent=5 // pred_check_branch
      %436 = sbr.rel (%p434) target = $region36
    $region35: #{discriminator_forward.10} parent=5 // pred_region
      %s437 = ssub.s32 %s8, 2
      // Predicated region
      $region37: #{discriminator_forward.10} parent=35 // pred_check
        %p438 = pneg %p84
      $region38: #{discriminator_forward.10} parent=35 // pred_check_branch
        %440 = sbr.rel (%p438) target = $region40
      $region39: #{discriminator_forward.10} parent=35 // pred_region
        %p441 = scmp.lt.s32.totalorder %s14, 1
        %s442 = scalar_select %p441, %s14, 1
        %s443 = smul.addr %s442, 2
        %s444 = scalar_lea.vmem %s2, %s443
      $region40: #{discriminator_forward.10} parent=35 // pred_fallthru
        _
    $region36: #{discriminator_forward.10} parent=5 // pred_fallthru
      _
  $region6: #{discriminator_forward.10} parent=0 // loop_footer
    %s12 = sadd.s32 1, %s8
  $region7: #{discriminator_forward.10} parent=0 // loop_footer_branch
    %7 = sbr.rel target = $region3
  $region8: #{discriminator_forward.10} parent=0 // loop_exit
    _

// kernel: discriminator_forward.11
$region0: #{discriminator_forward.11}
  #allocation0 [shape = 'u32[]', space=smem, size = 0x4, offset = 0x4, fixed_abs, tag = 'smem constant byte address 0x4 - core index']
  #allocation1 [shape = 'u32[144,128]{1,0:T(1,128)}', space=vmem, size = 0x12000, scoped, tag = 'internal scratch']
  %s0 = inlined_call_operand.vmem [shape: bf16[128,256], index: 0, kind: input, shape index: {}]
  %s1 = inlined_call_operand.vmem [shape: bf16[256,128], index: 1, kind: input, shape index: {}]
  %s2 = inlined_call_operand.vmem [shape: f32[1,128], index: 2, kind: input, shape index: {}]
  %s3 = inlined_call_operand.vmem [shape: f32[1,128], index: 3, kind: input, shape index: {}]
  %s4 = inlined_call_operand.vmem [shape: bf16[128,128], index: 4, kind: output, shape index: {}]
  %s5 = sld [smem:[#allocation0]]
  $region49: #{discriminator_forward.11} parent=0
    _
  %s7 = ssub.s32 1, %s5
  %s8 = scalar_select 0, %s7, %s5
  loop: start=0, step=1, limit=4
  $region2: #{discriminator_forward.11} parent=0 // loop_pre_header
    _
  $region3: #{discriminator_forward.11} parent=0 // loop_header
    %s10 = sphi 0, %s14
    %p11 = scmp.ge.s32.totalorder %s10, 4
    %s20 = sphi 0, %s22
    %s23 = sphi 0, %s20
    %s24 = sphi 0, %s23
    %s40 = sphi 0, %s24
    %s44 = sphi 0, %s44
    %s46 = sphi 0, %s44
    %s47 = sphi 0, %s46
    %s61 = sphi 0, %s47
    %s65 = sphi 0, %s65
    %s67 = sphi 0, %s65
    %s68 = sphi 0, %s67
    %s82 = sphi 0, %s68
    %s86 = sphi 0, %s86
    %s88 = sphi 0, %s86
    %s89 = sphi 0, %s88
    %s103 = sphi 0, %s89
    %s109 = sphi 0, %s111
    %s112 = sphi 0, %s109
    %s113 = sphi 0, %s112
    %s129 = sphi 0, %s113
  $region4: #{discriminator_forward.11} parent=0 // loop_header_branch
    %13 = sbr.rel (%p11) target = $region8
  $region5: #{discriminator_forward.11} parent=0 // loop_body
    %s15 = ssub.s32 %s10, 1
    %s16 = ssub.s32 %s10, 2
    %s17 = sadd.s32 %s10, 1
    %s18 = ssub.s32 %s10, %s17
    %p19 = scmp.eq.s32.totalorder %s18, 0
    %s21 = sadd.s32 %s20, 1
    %s22 = scalar_select %p19, %s20, %s21
    %p25 = pneg %p19
    %p26 = scmp.eq.s32.totalorder %s10, 1
    %p27 = por %p25, %p26
    %p28 = scmp.ne.s32.totalorder %s20, %s23
    %p29 = scmp.eq.s32.totalorder %s10, 0
    %p30 = por %p28, %p29
    %p31 = scmp.ne.s32.totalorder %s20, %s23
    %p32 = scmp.eq.s32.totalorder %s15, 1
    %p33 = por %p31, %p32
    %p34 = scmp.ne.s32.totalorder %s23, %s24
    %p35 = scmp.eq.s32.totalorder %s15, 0
    %p36 = por %p34, %p35
    %p37 = scmp.ne.s32.totalorder %s23, %s24
    %p38 = scmp.eq.s32.totalorder %s16, 1
    %p39 = por %p37, %p38
    %p41 = scmp.ne.s32.totalorder %s24, %s40
    %p42 = scmp.eq.s32.totalorder %s16, 0
    %p43 = por %p41, %p42
    %s45 = sadd.s32 %s44, 1
    %p48 = scmp.eq.s32.totalorder %s10, 1
    %p49 = scmp.ne.s32.totalorder %s44, %s46
    %p50 = scmp.eq.s32.totalorder %s10, 0
    %p51 = por %p49, %p50
    %p52 = scmp.ne.s32.totalorder %s44, %s46
    %p53 = scmp.eq.s32.totalorder %s15, 1
    %p54 = por %p52, %p53
    %p55 = scmp.ne.s32.totalorder %s46, %s47
    %p56 = scmp.eq.s32.totalorder %s15, 0
    %p57 = por %p55, %p56
    %p58 = scmp.ne.s32.totalorder %s46, %s47
    %p59 = scmp.eq.s32.totalorder %s16, 1
    %p60 = por %p58, %p59
    %p62 = scmp.ne.s32.totalorder %s47, %s61
    %p63 = scmp.eq.s32.totalorder %s16, 0
    %p64 = por %p62, %p63
    %s66 = sadd.s32 %s65, 1
    %p69 = scmp.eq.s32.totalorder %s10, 1
    %p70 = scmp.ne.s32.totalorder %s65, %s67
    %p71 = scmp.eq.s32.totalorder %s10, 0
    %p72 = por %p70, %p71
    %p73 = scmp.ne.s32.totalorder %s65, %s67
    %p74 = scmp.eq.s32.totalorder %s15, 1
    %p75 = por %p73, %p74
    %p76 = scmp.ne.s32.totalorder %s67, %s68
    %p77 = scmp.eq.s32.totalorder %s15, 0
    %p78 = por %p76, %p77
    %p79 = scmp.ne.s32.totalorder %s67, %s68
    %p80 = scmp.eq.s32.totalorder %s16, 1
    %p81 = por %p79, %p80
    %p83 = scmp.ne.s32.totalorder %s68, %s82
    %p84 = scmp.eq.s32.totalorder %s16, 0
    %p85 = por %p83, %p84
    %s87 = sadd.s32 %s86, 1
    %p90 = scmp.eq.s32.totalorder %s10, 1
    %p91 = scmp.ne.s32.totalorder %s86, %s88
    %p92 = scmp.eq.s32.totalorder %s10, 0
    %p93 = por %p91, %p92
    %p94 = scmp.ne.s32.totalorder %s86, %s88
    %p95 = scmp.eq.s32.totalorder %s15, 1
    %p96 = por %p94, %p95
    %p97 = scmp.ne.s32.totalorder %s88, %s89
    %p98 = scmp.eq.s32.totalorder %s15, 0
    %p99 = por %p97, %p98
    %p100 = scmp.ne.s32.totalorder %s88, %s89
    %p101 = scmp.eq.s32.totalorder %s16, 1
    %p102 = por %p100, %p101
    %p104 = scmp.ne.s32.totalorder %s89, %s103
    %p105 = scmp.eq.s32.totalorder %s16, 0
    %p106 = por %p104, %p105
    %s107 = ssub.s32 %s10, %s17
    %p108 = scmp.eq.s32.totalorder %s107, 0
    %s110 = sadd.s32 %s109, 1
    %s111 = scalar_select %p108, %s109, %s110
    %p114 = pneg %p108
    %p115 = scmp.eq.s32.totalorder %s10, 1
    %p116 = por %p114, %p115
    %p117 = scmp.ne.s32.totalorder %s109, %s112
    %p118 = scmp.eq.s32.totalorder %s10, 0
    %p119 = por %p117, %p118
    %p120 = scmp.ne.s32.totalorder %s109, %s112
    %p121 = scmp.eq.s32.totalorder %s15, 1
    %p122 = por %p120, %p121
    %p123 = scmp.ne.s32.totalorder %s112, %s113
    %p124 = scmp.eq.s32.totalorder %s15, 0
    %p125 = por %p123, %p124
    %p126 = scmp.ne.s32.totalorder %s112, %s113
    %p127 = scmp.eq.s32.totalorder %s16, 1
    %p128 = por %p126, %p127
    %p130 = scmp.ne.s32.totalorder %s113, %s129
    %p131 = scmp.eq.s32.totalorder %s16, 0
    %p132 = por %p130, %p131
    %p133 = scmp.le.s32.totalorder 1, %s10
    %p134 = scmp.lt.s32.totalorder %s10, 3
    %p135 = pnand %p133, %p134
    %p136 = pneg %p135
    // Predicated region
    $region9: #{discriminator_forward.11} parent=5 // pred_check
      _
    $region10: #{discriminator_forward.11} parent=5 // pred_check_branch
      %138 = sbr.rel (%p135) target = $region12
    $region11: #{discriminator_forward.11} parent=5 // pred_region
      %s139 = ssub.s32 %s10, 1
      // Predicated region
      $region13: #{discriminator_forward.11} parent=11 // pred_check
        %p140 = pneg %p57
      $region14: #{discriminator_forward.11} parent=11 // pred_check_branch
        %142 = sbr.rel (%p140) target = $region16
      $region15: #{discriminator_forward.11} parent=11 // pred_region
        _
      $region16: #{discriminator_forward.11} parent=11 // pred_fallthru
        _
      // Predicated region
      $region17: #{discriminator_forward.11} parent=11 // pred_check
        %p143 = pneg %p78
      $region18: #{discriminator_forward.11} parent=11 // pred_check_branch
        %145 = sbr.rel (%p143) target = $region20
      $region19: #{discriminator_forward.11} parent=11 // pred_region
        _
      $region20: #{discriminator_forward.11} parent=11 // pred_fallthru
        _
      // Predicated region
      $region21: #{discriminator_forward.11} parent=11 // pred_check
        %p146 = pneg %p99
      $region22: #{discriminator_forward.11} parent=11 // pred_check_branch
        %148 = sbr.rel (%p146) target = $region24
      $region23: #{discriminator_forward.11} parent=11 // pred_region
        _
      $region24: #{discriminator_forward.11} parent=11 // pred_fallthru
        _
    $region12: #{discriminator_forward.11} parent=5 // pred_fallthru
      _
    %p149 = scmp.lt.s32.totalorder %s10, 2
    // Predicated region
    $region25: #{discriminator_forward.11} parent=5 // pred_check
      %p150 = pneg %p149
    $region26: #{discriminator_forward.11} parent=5 // pred_check_branch
      %152 = sbr.rel (%p150) target = $region28
    $region27: #{discriminator_forward.11} parent=5 // pred_region
      // Predicated region
      $region29: #{discriminator_forward.11} parent=27 // pred_check
        %p153 = pneg %p30
      $region30: #{discriminator_forward.11} parent=27 // pred_check_branch
        %155 = sbr.rel (%p153) target = $region32
      $region31: #{discriminator_forward.11} parent=27 // pred_region
        %s156 = smul.u32 8, %s10
        %p157 = scmp.lt.s32.totalorder %s156, 15
        %s158 = scalar_select %p157, %s156, 15
        %s159 = smul.addr %s158, 2
        %s160 = smul.addr %s159, 4
        %s161 = scalar_lea.vmem %s0, %s160
        %s162 = smul.u32 8, %s10
      $region32: #{discriminator_forward.11} parent=27 // pred_fallthru
        _
    $region28: #{discriminator_forward.11} parent=5 // pred_fallthru
      _
    %p163 = scmp.le.s32.totalorder 1, %s10
    %p164 = scmp.lt.s32.totalorder %s10, 3
    %p165 = pnand %p163, %p164
    %p166 = pneg %p165
    // Predicated region
    $region33: #{discriminator_forward.11} parent=5 // pred_check
      _
    $region34: #{discriminator_forward.11} parent=5 // pred_check_branch
      %168 = sbr.rel (%p165) target = $region36
    $region35: #{discriminator_forward.11} parent=5 // pred_region
      %s169 = ssub.s32 %s10, 1
      %s170 = smul.u32 8, %s15
      %p171 = scmp.lt.s32.totalorder %s170, 15
      %s172 = scalar_select %p171, %s170, 15
      %s173 = smul.addr %s172, 2
      %s174 = smul.addr %s173, 4
      %s175 = scalar_lea.vmem %s0, %s174
      %p176 = pneg %p36
      %p177 = pneg %p33
      %p178 = pneg %p57
      %p179 = pneg %p54
      %p180 = pneg %p78
      %p181 = pneg %p75
      %p182 = pneg %p99
      %p183 = pneg %p96
      %p184 = pneg %p125
      %p185 = pneg %p122
      %s186 = smul.u32 8, %s15
      %p187 = scmp.lt.s32.totalorder %s186, 15
      %s188 = scalar_select %p187, %s186, 15
      %s189 = smul.addr %s188, 4
      %s190 = scalar_lea.vmem %s4, %s189
      %s191 = smul.u32 8, %s15
      %p192 = scmp.lt.s32.totalorder %s191, 15
      %s193 = scalar_select %p192, %s191, 15
      %s194 = smul.addr %s193, 2
      %s195 = smul.addr %s194, 4
      %s196 = scalar_lea.vmem %s0, %s195
      %s197 = smul.u32 8, %s15
      %s198 = smul.u32 8, %s15
      %p199 = scmp.lt.s32.totalorder %s198, 15
      %s200 = scalar_select %p199, %s198, 15
      %s201 = smul.addr %s200, 4
      %s202 = scalar_lea.vmem %s4, %s201
      %s203 = smul.u32 8, %s15
      %v205 = vld [vmem:[%s196] sm:$0xff]
      %v206 = vld [vmem:[%s196 + $0x8] sm:$0xff]
      %v207 = vld [vmem:[%s196 + $0x10] sm:$0xff]
      %v208 = vld [vmem:[%s196 + $0x18] sm:$0xff]
      %v209 = vld [vmem:[%s196 + $0x20] sm:$0xff]
      %v210 = vld [vmem:[%s196 + $0x28] sm:$0xff]
      %v211 = vld [vmem:[%s196 + $0x30] sm:$0xff]
      %v212 = vld [vmem:[%s196 + $0x38] sm:$0xff]
      %v213 = vld [vmem:[%s1] sm:$0xf]
      %v214 = vld [vmem:[%s1 + $0x4] sm:$0xf]
      %v215 = vld [vmem:[%s1 + $0x8] sm:$0xf]
      %v216 = vld [vmem:[%s1 + $0xc] sm:$0xf]
      %v217 = vld [vmem:[%s1 + $0x10] sm:$0xf]
      %v218 = vld [vmem:[%s1 + $0x14] sm:$0xf]
      %v219 = vld [vmem:[%s1 + $0x18] sm:$0xf]
      %v220 = vld [vmem:[%s1 + $0x1c] sm:$0xf]
      %v221 = vld [vmem:[%s1 + $0x20] sm:$0xf]
      %v222 = vld [vmem:[%s1 + $0x24] sm:$0xf]
      %v223 = vld [vmem:[%s1 + $0x28] sm:$0xf]
      %v224 = vld [vmem:[%s1 + $0x2c] sm:$0xf]
      %v225 = vld [vmem:[%s1 + $0x30] sm:$0xf]
      %v226 = vld [vmem:[%s1 + $0x34] sm:$0xf]
      %v227 = vld [vmem:[%s1 + $0x38] sm:$0xf]
      %v228 = vld [vmem:[%s1 + $0x3c] sm:$0xf]
      %v229 = vld [vmem:[%s1 + $0x40] sm:$0xf]
      %v230 = vld [vmem:[%s1 + $0x44] sm:$0xf]
      %v231 = vld [vmem:[%s1 + $0x48] sm:$0xf]
      %v232 = vld [vmem:[%s1 + $0x4c] sm:$0xf]
      %v233 = vld [vmem:[%s1 + $0x50] sm:$0xf]
      %v234 = vld [vmem:[%s1 + $0x54] sm:$0xf]
      %v235 = vld [vmem:[%s1 + $0x58] sm:$0xf]
      %v236 = vld [vmem:[%s1 + $0x5c] sm:$0xf]
      %v237 = vld [vmem:[%s1 + $0x60] sm:$0xf]
      %v238 = vld [vmem:[%s1 + $0x64] sm:$0xf]
      %v239 = vld [vmem:[%s1 + $0x68] sm:$0xf]
      %v240 = vld [vmem:[%s1 + $0x6c] sm:$0xf]
      %v241 = vld [vmem:[%s1 + $0x70] sm:$0xf]
      %v242 = vld [vmem:[%s1 + $0x74] sm:$0xf]
      %v243 = vld [vmem:[%s1 + $0x78] sm:$0xf]
      %v244 = vld [vmem:[%s1 + $0x7c] sm:$0xf]
      %v253 = vunpack.c.l.b16 %v205
      %v254 = vunpack.c.h.b16 %v205
      %v255 = vunpack.c.l.b16 %v206
      %v256 = vunpack.c.h.b16 %v206
      %v257 = vunpack.c.l.b16 %v207
      %v258 = vunpack.c.h.b16 %v207
      %v259 = vunpack.c.l.b16 %v208
      %v260 = vunpack.c.h.b16 %v208
      %v261 = vunpack.c.l.b16 %v209
      %v262 = vunpack.c.h.b16 %v209
      %v263 = vunpack.c.l.b16 %v210
      %v264 = vunpack.c.h.b16 %v210
      %v265 = vunpack.c.l.b16 %v211
      %v266 = vunpack.c.h.b16 %v211
      %v267 = vunpack.c.l.b16 %v212
      %v268 = vunpack.c.h.b16 %v212
      %v269 = vpack.c.b16 %v255, %v253
      %v270 = vpack.c.b16 %v256, %v254
      %v271 = vpack.c.b16 %v259, %v257
      %v272 = vpack.c.b16 %v260, %v258
      %v273 = vpack.c.b16 %v263, %v261
      %v274 = vpack.c.b16 %v264, %v262
      %v275 = vpack.c.b16 %v267, %v265
      %v276 = vpack.c.b16 %v268, %v266
      %v317 = vunpack.c.l.b16 %v213
      %v318 = vunpack.c.l.b16 %v214
      %v319 = vunpack.c.l.b16 %v215
      %v320 = vunpack.c.l.b16 %v216
      %v321 = vunpack.c.l.b16 %v217
      %v322 = vunpack.c.l.b16 %v218
      %v323 = vunpack.c.l.b16 %v219
      %v324 = vunpack.c.l.b16 %v220
      %v325 = vunpack.c.l.b16 %v221
      %v326 = vunpack.c.l.b16 %v222
      %v327 = vunpack.c.l.b16 %v223
      %v328 = vunpack.c.l.b16 %v224
      %v329 = vunpack.c.l.b16 %v225
      %v330 = vunpack.c.l.b16 %v226
      %v331 = vunpack.c.l.b16 %v227
      %v332 = vunpack.c.l.b16 %v228
      %v333 = vunpack.c.l.b16 %v229
      %v334 = vunpack.c.l.b16 %v230
      %v335 = vunpack.c.l.b16 %v231
      %v336 = vunpack.c.l.b16 %v232
      %v337 = vunpack.c.l.b16 %v233
      %v338 = vunpack.c.l.b16 %v234
      %v339 = vunpack.c.l.b16 %v235
      %v340 = vunpack.c.l.b16 %v236
      %v341 = vunpack.c.l.b16 %v237
      %v342 = vunpack.c.l.b16 %v238
      %v343 = vunpack.c.l.b16 %v239
      %v344 = vunpack.c.l.b16 %v240
      %v345 = vunpack.c.l.b16 %v241
      %v346 = vunpack.c.l.b16 %v242
      %v347 = vunpack.c.l.b16 %v243
      %v348 = vunpack.c.l.b16 %v244
      %v349 = vpack.c.b16 %v318, %v317
      %v350 = vpack.c.b16 %v320, %v319
      %v351 = vpack.c.b16 %v322, %v321
      %v352 = vpack.c.b16 %v324, %v323
      %v353 = vpack.c.b16 %v326, %v325
      %v354 = vpack.c.b16 %v328, %v327
      %v355 = vpack.c.b16 %v330, %v329
      %v356 = vpack.c.b16 %v332, %v331
      %v357 = vpack.c.b16 %v334, %v333
      %v358 = vpack.c.b16 %v336, %v335
      %v359 = vpack.c.b16 %v338, %v337
      %v360 = vpack.c.b16 %v340, %v339
      %v361 = vpack.c.b16 %v342, %v341
      %v362 = vpack.c.b16 %v344, %v343
      %v363 = vpack.c.b16 %v346, %v345
      %v364 = vpack.c.b16 %v348, %v347
      %381 = vmatprep.subr.bf16.mxu0 0
      %382 = vmatpush1.bf16.msra.mxu0 %v349
      %383 = vmatprep.subr.bf16.mxu0 0
      %384 = vmatpush1.bf16.msra.mxu0 %v350
      %385 = vmatprep.subr.bf16.mxu0 0
      %386 = vmatpush1.bf16.msra.mxu0 %v351
      %387 = vmatprep.subr.bf16.mxu0 0
      %388 = vmatpush1.bf16.msra.mxu0 %v352
      %389 = vmatprep.subr.bf16.mxu0 0
      %390 = vmatpush1.bf16.msra.mxu0 %v353
      %391 = vmatprep.subr.bf16.mxu0 0
      %392 = vmatpush1.bf16.msra.mxu0 %v354
      %393 = vmatprep.subr.bf16.mxu0 0
      %394 = vmatpush1.bf16.msra.mxu0 %v355
      %395 = vmatprep.subr.bf16.mxu0 0
      %396 = vmatpush1.bf16.msra.mxu0 %v356
      %397 = vmatprep.subr.bf16.mxu0 0
      %398 = vmatpush1.bf16.msra.mxu0 %v357
      %399 = vmatprep.subr.bf16.mxu0 0
      %400 = vmatpush1.bf16.msra.mxu0 %v358
      %401 = vmatprep.subr.bf16.mxu0 0
      %402 = vmatpush1.bf16.msra.mxu0 %v359
      %403 = vmatprep.subr.bf16.mxu0 0
      %404 = vmatpush1.bf16.msra.mxu0 %v360
      %405 = vmatprep.subr.bf16.mxu0 0
      %406 = vmatpush1.bf16.msra.mxu0 %v361
      %407 = vmatprep.subr.bf16.mxu0 0
      %408 = vmatpush1.bf16.msra.mxu0 %v362
      %409 = vmatprep.subr.bf16.mxu0 0
      %410 = vmatpush1.bf16.msra.mxu0 %v363
      %411 = vmatprep.subr.bf16.mxu0 0
      %412 = vmatpush1.bf16.msra.mxu0 %v364
      %413 = vmatprep.mubr.bf16.mxu0 %v270
      %414 = vmatmul.mubr.bf16.gmra.mrb[0].mxu0 %v269
      %v415 = vpop.f32.mrb[0].mxu0
      %v416 = vadd.f32 0.0, %v415
      %v417 = vpop.f32.mrb[0].mxu0
      %v418 = vpop.f32.mrb[0].mxu0
      %v419 = vadd.f32 0.0, %v418
      %v420 = vpop.f32.mrb[0].mxu0
      %421 = vmatprep.mubr.bf16.mxu0 %v272
      %422 = vmatmul.mubr.bf16.gmra.mrb[0].mxu0 %v271
      %v423 = vpop.f32.mrb[0].mxu0
      %v424 = vadd.f32 0.0, %v423
      %v425 = vpop.f32.mrb[0].mxu0
      %v426 = vpop.f32.mrb[0].mxu0
      %v427 = vadd.f32 0.0, %v426
      %v428 = vpop.f32.mrb[0].mxu0
      %429 = vmatprep.mubr.bf16.mxu0 %v274
      %430 = vmatmul.mubr.bf16.gmra.mrb[0].mxu0 %v273
      %v431 = vpop.f32.mrb[0].mxu0
      %v432 = vadd.f32 0.0, %v431
      %v433 = vpop.f32.mrb[0].mxu0
      %v434 = vpop.f32.mrb[0].mxu0
      %v435 = vadd.f32 0.0, %v434
      %v436 = vpop.f32.mrb[0].mxu0
      %437 = vmatprep.mubr.bf16.mxu0 %v276
      %438 = vmatmul.mubr.bf16.gmra.mrb[0].mxu0 %v275
      %v439 = vpop.f32.mrb[0].mxu0
      %v440 = vadd.f32 0.0, %v439
      %v441 = vpop.f32.mrb[0].mxu0
      %v442 = vpop.f32.mrb[0].mxu0
      %v443 = vadd.f32 0.0, %v442
      %v444 = vpop.f32.mrb[0].mxu0
      %445 = vdwg.mxu0
      %v446 = vld [vmem:[%s2] sm:$0x1]
      %v448 = vlaneseq
      %v449 = vshrl.u32 %v448, 7
      %v450 = vsub.s32 0, %v449
      %v451 = vrot.slane %v446, %v450
      %v453 = vmul.f32 %v416, %v451
      %v454 = vmul.f32 %v419, %v451
      %v455 = vmul.f32 %v424, %v451
      %v456 = vmul.f32 %v427, %v451
      %v457 = vmul.f32 %v432, %v451
      %v458 = vmul.f32 %v435, %v451
      %v459 = vmul.f32 %v440, %v451
      %v460 = vmul.f32 %v443, %v451
      %v461 = vld [vmem:[%s3] sm:$0x1]
      %v463 = vlaneseq
      %v464 = vshrl.u32 %v463, 7
      %v465 = vsub.s32 0, %v464
      %v466 = vrot.slane %v461, %v465
      %v468 = vadd.f32 %v453, %v466
      %v469 = vadd.f32 %v454, %v466
      %v470 = vadd.f32 %v455, %v466
      %v471 = vadd.f32 %v456, %v466
      %v472 = vadd.f32 %v457, %v466
      %v473 = vadd.f32 %v458, %v466
      %v474 = vadd.f32 %v459, %v466
      %v475 = vadd.f32 %v460, %v466
      %vm476 = vcmp.gt.f32.partialorder %v468, 0.0
      %vm477 = vcmp.gt.f32.partialorder %v469, 0.0
      %vm478 = vcmp.gt.f32.partialorder %v470, 0.0
      %vm479 = vcmp.gt.f32.partialorder %v471, 0.0
      %vm480 = vcmp.gt.f32.partialorder %v472, 0.0
      %vm481 = vcmp.gt.f32.partialorder %v473, 0.0
      %vm482 = vcmp.gt.f32.partialorder %v474, 0.0
      %vm483 = vcmp.gt.f32.partialorder %v475, 0.0
      %v484 = vmul.f32 %v468, 0.2
      %v485 = vmul.f32 %v469, 0.2
      %v486 = vmul.f32 %v470, 0.2
      %v487 = vmul.f32 %v471, 0.2
      %v488 = vmul.f32 %v472, 0.2
      %v489 = vmul.f32 %v473, 0.2
      %v490 = vmul.f32 %v474, 0.2
      %v491 = vmul.f32 %v475, 0.2
      %v492 = vsel %vm476, %v468, %v484
      %v493 = vsel %vm477, %v469, %v485
      %v494 = vsel %vm478, %v470, %v486
      %v495 = vsel %vm479, %v471, %v487
      %v496 = vsel %vm480, %v472, %v488
      %v497 = vsel %vm481, %v473, %v489
      %v498 = vsel %vm482, %v474, %v490
      %v499 = vsel %vm483, %v475, %v491
      %v500 = vpack.c.bf16 %v493, %v492
      %v501 = vpack.c.bf16 %v495, %v494
      %v502 = vpack.c.bf16 %v497, %v496
      %v503 = vpack.c.bf16 %v499, %v498
      %v508 = vunpack.c.l.b16 %v500
      %v509 = vunpack.c.h.b16 %v500
      %v510 = vunpack.c.l.b16 %v501
      %v511 = vunpack.c.h.b16 %v501
      %v512 = vunpack.c.l.b16 %v502
      %v513 = vunpack.c.h.b16 %v502
      %v514 = vunpack.c.l.b16 %v503
      %v515 = vunpack.c.h.b16 %v503
      %v516 = vpack.c.b16 %v508, %v508
      %v517 = vpack.c.b16 %v509, %v509
      %v518 = vpack.c.b16 %v510, %v510
      %v519 = vpack.c.b16 %v511, %v511
      %v520 = vpack.c.b16 %v512, %v512
      %v521 = vpack.c.b16 %v513, %v513
      %v522 = vpack.c.b16 %v514, %v514
      %v523 = vpack.c.b16 %v515, %v515
      %532 = vst [vmem:[%s202] sm:$0xf] %v516
      %533 = vst [vmem:[%s202 + $0x4] sm:$0xf] %v517
      %534 = vst [vmem:[%s202 + $0x8] sm:$0xf] %v518
      %535 = vst [vmem:[%s202 + $0xc] sm:$0xf] %v519
      %536 = vst [vmem:[%s202 + $0x10] sm:$0xf] %v520
      %537 = vst [vmem:[%s202 + $0x14] sm:$0xf] %v521
      %538 = vst [vmem:[%s202 + $0x18] sm:$0xf] %v522
      %539 = vst [vmem:[%s202 + $0x1c] sm:$0xf] %v523
      %s540 = smul.u32 8, %s15
      %p541 = scmp.lt.s32.totalorder %s540, 15
      %s542 = scalar_select %p541, %s540, 15
      %s543 = smul.addr %s542, 4
      %s544 = scalar_lea.vmem %s4, %s543
      // Predicated region
      $region37: #{discriminator_forward.11} parent=35 // pred_check
        %p545 = pneg %p122
      $region38: #{discriminator_forward.11} parent=35 // pred_check_branch
        %547 = sbr.rel (%p545) target = $region40
      $region39: #{discriminator_forward.11} parent=35 // pred_region
        %s548 = smul.u32 8, %s15
      $region40: #{discriminator_forward.11} parent=35 // pred_fallthru
        _
    $region36: #{discriminator_forward.11} parent=5 // pred_fallthru
      _
    %p549 = scmp.le.s32.totalorder 2, %s10
    // Predicated region
    $region41: #{discriminator_forward.11} parent=5 // pred_check
      %p550 = pneg %p549
    $region42: #{discriminator_forward.11} parent=5 // pred_check_branch
      %552 = sbr.rel (%p550) target = $region44
    $region43: #{discriminator_forward.11} parent=5 // pred_region
      %s553 = ssub.s32 %s10, 2
      // Predicated region
      $region45: #{discriminator_forward.11} parent=43 // pred_check
        %p554 = pneg %p128
      $region46: #{discriminator_forward.11} parent=43 // pred_check_branch
        %556 = sbr.rel (%p554) target = $region48
      $region47: #{discriminator_forward.11} parent=43 // pred_region
        %s557 = smul.u32 8, %s16
        %p558 = scmp.lt.s32.totalorder %s557, 15
        %s559 = scalar_select %p558, %s557, 15
        %s560 = smul.addr %s559, 4
        %s561 = scalar_lea.vmem %s4, %s560
      $region48: #{discriminator_forward.11} parent=43 // pred_fallthru
        _
    $region44: #{discriminator_forward.11} parent=5 // pred_fallthru
      _
  $region6: #{discriminator_forward.11} parent=0 // loop_footer
    %s14 = sadd.s32 1, %s10
  $region7: #{discriminator_forward.11} parent=0 // loop_footer_branch
    %9 = sbr.rel target = $region3
  $region8: #{discriminator_forward.11} parent=0 // loop_exit
    _

// kernel: discriminator_forward.12
$region0: #{discriminator_forward.12}
  #allocation0 [shape = 'u32[]', space=smem, size = 0x4, offset = 0x4, fixed_abs, tag = 'smem constant byte address 0x4 - core index']
  #allocation1 [shape = 'u32[144,128]{1,0:T(1,128)}', space=vmem, size = 0x12000, scoped, tag = 'internal scratch']
  %s0 = inlined_call_operand.vmem [shape: bf16[32,512], index: 0, kind: input, shape index: {}]
  %s1 = inlined_call_operand.vmem [shape: bf16[512,128], index: 1, kind: input, shape index: {}]
  %s2 = inlined_call_operand.vmem [shape: f32[2,2,128], index: 2, kind: output, shape index: {}]
  %s3 = sld [smem:[#allocation0]]
  $region41: #{discriminator_forward.12} parent=0
    _
  %s5 = ssub.s32 1, %s3
  %s6 = scalar_select 0, %s5, %s3
  loop: start=0, step=1, limit=4
  $region2: #{discriminator_forward.12} parent=0 // loop_pre_header
    _
  $region3: #{discriminator_forward.12} parent=0 // loop_header
    %s8 = sphi 0, %s12
    %p9 = scmp.ge.s32.totalorder %s8, 4
    %s18 = sphi 0, %s20
    %s21 = sphi 0, %s18
    %s22 = sphi 0, %s21
    %s38 = sphi 0, %s22
    %s42 = sphi 0, %s42
    %s44 = sphi 0, %s42
    %s45 = sphi 0, %s44
    %s59 = sphi 0, %s45
    %s65 = sphi 0, %s67
    %s68 = sphi 0, %s65
    %s69 = sphi 0, %s68
    %s85 = sphi 0, %s69
  $region4: #{discriminator_forward.12} parent=0 // loop_header_branch
    %11 = sbr.rel (%p9) target = $region8
  $region5: #{discriminator_forward.12} parent=0 // loop_body
    %s13 = ssub.s32 %s8, 1
    %s14 = ssub.s32 %s8, 2
    %s15 = sadd.s32 %s8, 1
    %s16 = ssub.s32 %s8, %s15
    %p17 = scmp.eq.s32.totalorder %s16, 0
    %s19 = sadd.s32 %s18, 1
    %s20 = scalar_select %p17, %s18, %s19
    %p23 = pneg %p17
    %p24 = scmp.eq.s32.totalorder %s8, 1
    %p25 = por %p23, %p24
    %p26 = scmp.ne.s32.totalorder %s18, %s21
    %p27 = scmp.eq.s32.totalorder %s8, 0
    %p28 = por %p26, %p27
    %p29 = scmp.ne.s32.totalorder %s18, %s21
    %p30 = scmp.eq.s32.totalorder %s13, 1
    %p31 = por %p29, %p30
    %p32 = scmp.ne.s32.totalorder %s21, %s22
    %p33 = scmp.eq.s32.totalorder %s13, 0
    %p34 = por %p32, %p33
    %p35 = scmp.ne.s32.totalorder %s21, %s22
    %p36 = scmp.eq.s32.totalorder %s14, 1
    %p37 = por %p35, %p36
    %p39 = scmp.ne.s32.totalorder %s22, %s38
    %p40 = scmp.eq.s32.totalorder %s14, 0
    %p41 = por %p39, %p40
    %s43 = sadd.s32 %s42, 1
    %p46 = scmp.eq.s32.totalorder %s8, 1
    %p47 = scmp.ne.s32.totalorder %s42, %s44
    %p48 = scmp.eq.s32.totalorder %s8, 0
    %p49 = por %p47, %p48
    %p50 = scmp.ne.s32.totalorder %s42, %s44
    %p51 = scmp.eq.s32.totalorder %s13, 1
    %p52 = por %p50, %p51
    %p53 = scmp.ne.s32.totalorder %s44, %s45
    %p54 = scmp.eq.s32.totalorder %s13, 0
    %p55 = por %p53, %p54
    %p56 = scmp.ne.s32.totalorder %s44, %s45
    %p57 = scmp.eq.s32.totalorder %s14, 1
    %p58 = por %p56, %p57
    %p60 = scmp.ne.s32.totalorder %s45, %s59
    %p61 = scmp.eq.s32.totalorder %s14, 0
    %p62 = por %p60, %p61
    %s63 = ssub.s32 %s8, %s15
    %p64 = scmp.eq.s32.totalorder %s63, 0
    %s66 = sadd.s32 %s65, 1
    %s67 = scalar_select %p64, %s65, %s66
    %p70 = pneg %p64
    %p71 = scmp.eq.s32.totalorder %s8, 1
    %p72 = por %p70, %p71
    %p73 = scmp.ne.s32.totalorder %s65, %s68
    %p74 = scmp.eq.s32.totalorder %s8, 0
    %p75 = por %p73, %p74
    %p76 = scmp.ne.s32.totalorder %s65, %s68
    %p77 = scmp.eq.s32.totalorder %s13, 1
    %p78 = por %p76, %p77
    %p79 = scmp.ne.s32.totalorder %s68, %s69
    %p80 = scmp.eq.s32.totalorder %s13, 0
    %p81 = por %p79, %p80
    %p82 = scmp.ne.s32.totalorder %s68, %s69
    %p83 = scmp.eq.s32.totalorder %s14, 1
    %p84 = por %p82, %p83
    %p86 = scmp.ne.s32.totalorder %s69, %s85
    %p87 = scmp.eq.s32.totalorder %s14, 0
    %p88 = por %p86, %p87
    %p89 = scmp.le.s32.totalorder 1, %s8
    %p90 = scmp.lt.s32.totalorder %s8, 3
    %p91 = pnand %p89, %p90
    %p92 = pneg %p91
    // Predicated region
    $region9: #{discriminator_forward.12} parent=5 // pred_check
      _
    $region10: #{discriminator_forward.12} parent=5 // pred_check_branch
      %94 = sbr.rel (%p91) target = $region12
    $region11: #{discriminator_forward.12} parent=5 // pred_region
      %s95 = ssub.s32 %s8, 1
      // Predicated region
      $region13: #{discriminator_forward.12} parent=11 // pred_check
        %p96 = pneg %p55
      $region14: #{discriminator_forward.12} parent=11 // pred_check_branch
        %98 = sbr.rel (%p96) target = $region16
      $region15: #{discriminator_forward.12} parent=11 // pred_region
        _
      $region16: #{discriminator_forward.12} parent=11 // pred_fallthru
        _
    $region12: #{discriminator_forward.12} parent=5 // pred_fallthru
      _
    %p99 = scmp.lt.s32.totalorder %s8, 2
    // Predicated region
    $region17: #{discriminator_forward.12} parent=5 // pred_check
      %p100 = pneg %p99
    $region18: #{discriminator_forward.12} parent=5 // pred_check_branch
      %102 = sbr.rel (%p100) target = $region20
    $region19: #{discriminator_forward.12} parent=5 // pred_region
      // Predicated region
      $region21: #{discriminator_forward.12} parent=19 // pred_check
        %p103 = pneg %p28
      $region22: #{discriminator_forward.12} parent=19 // pred_check_branch
        %105 = sbr.rel (%p103) target = $region24
      $region23: #{discriminator_forward.12} parent=19 // pred_region
        %s106 = smul.u32 2, %s8
        %p107 = scmp.lt.s32.totalorder %s106, 3
        %s108 = scalar_select %p107, %s106, 3
        %s109 = smul.addr %s108, 4
        %s110 = smul.addr %s109, 4
        %s111 = scalar_lea.vmem %s0, %s110
        %s112 = smul.u32 2, %s8
      $region24: #{discriminator_forward.12} parent=19 // pred_fallthru
        _
    $region20: #{discriminator_forward.12} parent=5 // pred_fallthru
      _
    %p113 = scmp.le.s32.totalorder 1, %s8
    %p114 = scmp.lt.s32.totalorder %s8, 3
    %p115 = pnand %p113, %p114
    %p116 = pneg %p115
    // Predicated region
    $region25: #{discriminator_forward.12} parent=5 // pred_check
      _
    $region26: #{discriminator_forward.12} parent=5 // pred_check_branch
      %118 = sbr.rel (%p115) target = $region28
    $region27: #{discriminator_forward.12} parent=5 // pred_region
      %s119 = ssub.s32 %s8, 1
      %s120 = smul.u32 2, %s13
      %p121 = scmp.lt.s32.totalorder %s120, 3
      %s122 = scalar_select %p121, %s120, 3
      %s123 = smul.addr %s122, 4
      %s124 = smul.addr %s123, 4
      %s125 = scalar_lea.vmem %s0, %s124
      %p126 = pneg %p34
      %p127 = pneg %p31
      %p128 = pneg %p55
      %p129 = pneg %p52
      %p130 = pneg %p81
      %p131 = pneg %p78
      %p132 = scmp.lt.s32.totalorder %s13, 1
      %s133 = scalar_select %p132, %s13, 1
      %s134 = smul.addr %s133, 2
      %s135 = scalar_lea.vmem %s2, %s134
      %s136 = smul.u32 2, %s13
      %p137 = scmp.lt.s32.totalorder %s136, 3
      %s138 = scalar_select %p137, %s136, 3
      %s139 = smul.addr %s138, 4
      %s140 = smul.addr %s139, 4
      %s141 = scalar_lea.vmem %s0, %s140
      %s142 = smul.u32 2, %s13
      %p143 = scmp.lt.s32.totalorder %s13, 1
      %s144 = scalar_select %p143, %s13, 1
      %s145 = smul.addr %s144, 2
      %s146 = scalar_lea.vmem %s2, %s145
      %v148 = vld [vmem:[%s141] sm:$0xff]
      %v149 = vld [vmem:[%s141 + $0x8] sm:$0xff]
      %v150 = vld [vmem:[%s141 + $0x10] sm:$0xff]
      %v151 = vld [vmem:[%s141 + $0x18] sm:$0xff]
      %v152 = vld [vmem:[%s1] sm:$0xf]
      %v153 = vld [vmem:[%s1 + $0x4] sm:$0xf]
      %v154 = vld [vmem:[%s1 + $0x8] sm:$0xf]
      %v155 = vld [vmem:[%s1 + $0xc] sm:$0xf]
      %v156 = vld [vmem:[%s1 + $0x10] sm:$0xf]
      %v157 = vld [vmem:[%s1 + $0x14] sm:$0xf]
      %v158 = vld [vmem:[%s1 + $0x18] sm:$0xf]
      %v159 = vld [vmem:[%s1 + $0x1c] sm:$0xf]
      %v160 = vld [vmem:[%s1 + $0x20] sm:$0xf]
      %v161 = vld [vmem:[%s1 + $0x24] sm:$0xf]
      %v162 = vld [vmem:[%s1 + $0x28] sm:$0xf]
      %v163 = vld [vmem:[%s1 + $0x2c] sm:$0xf]
      %v164 = vld [vmem:[%s1 + $0x30] sm:$0xf]
      %v165 = vld [vmem:[%s1 + $0x34] sm:$0xf]
      %v166 = vld [vmem:[%s1 + $0x38] sm:$0xf]
      %v167 = vld [vmem:[%s1 + $0x3c] sm:$0xf]
      %v168 = vld [vmem:[%s1 + $0x40] sm:$0xf]
      %v169 = vld [vmem:[%s1 + $0x44] sm:$0xf]
      %v170 = vld [vmem:[%s1 + $0x48] sm:$0xf]
      %v171 = vld [vmem:[%s1 + $0x4c] sm:$0xf]
      %v172 = vld [vmem:[%s1 + $0x50] sm:$0xf]
      %v173 = vld [vmem:[%s1 + $0x54] sm:$0xf]
      %v174 = vld [vmem:[%s1 + $0x58] sm:$0xf]
      %v175 = vld [vmem:[%s1 + $0x5c] sm:$0xf]
      %v176 = vld [vmem:[%s1 + $0x60] sm:$0xf]
      %v177 = vld [vmem:[%s1 + $0x64] sm:$0xf]
      %v178 = vld [vmem:[%s1 + $0x68] sm:$0xf]
      %v179 = vld [vmem:[%s1 + $0x6c] sm:$0xf]
      %v180 = vld [vmem:[%s1 + $0x70] sm:$0xf]
      %v181 = vld [vmem:[%s1 + $0x74] sm:$0xf]
      %v182 = vld [vmem:[%s1 + $0x78] sm:$0xf]
      %v183 = vld [vmem:[%s1 + $0x7c] sm:$0xf]
      %v184 = vld [vmem:[%s1 + $0x80] sm:$0xf]
      %v185 = vld [vmem:[%s1 + $0x84] sm:$0xf]
      %v186 = vld [vmem:[%s1 + $0x88] sm:$0xf]
      %v187 = vld [vmem:[%s1 + $0x8c] sm:$0xf]
      %v188 = vld [vmem:[%s1 + $0x90] sm:$0xf]
      %v189 = vld [vmem:[%s1 + $0x94] sm:$0xf]
      %v190 = vld [vmem:[%s1 + $0x98] sm:$0xf]
      %v191 = vld [vmem:[%s1 + $0x9c] sm:$0xf]
      %v192 = vld [vmem:[%s1 + $0xa0] sm:$0xf]
      %v193 = vld [vmem:[%s1 + $0xa4] sm:$0xf]
      %v194 = vld [vmem:[%s1 + $0xa8] sm:$0xf]
      %v195 = vld [vmem:[%s1 + $0xac] sm:$0xf]
      %v196 = vld [vmem:[%s1 + $0xb0] sm:$0xf]
      %v197 = vld [vmem:[%s1 + $0xb4] sm:$0xf]
      %v198 = vld [vmem:[%s1 + $0xb8] sm:$0xf]
      %v199 = vld [vmem:[%s1 + $0xbc] sm:$0xf]
      %v200 = vld [vmem:[%s1 + $0xc0] sm:$0xf]
      %v201 = vld [vmem:[%s1 + $0xc4] sm:$0xf]
      %v202 = vld [vmem:[%s1 + $0xc8] sm:$0xf]
      %v203 = vld [vmem:[%s1 + $0xcc] sm:$0xf]
      %v204 = vld [vmem:[%s1 + $0xd0] sm:$0xf]
      %v205 = vld [vmem:[%s1 + $0xd4] sm:$0xf]
      %v206 = vld [vmem:[%s1 + $0xd8] sm:$0xf]
      %v207 = vld [vmem:[%s1 + $0xdc] sm:$0xf]
      %v208 = vld [vmem:[%s1 + $0xe0] sm:$0xf]
      %v209 = vld [vmem:[%s1 + $0xe4] sm:$0xf]
      %v210 = vld [vmem:[%s1 + $0xe8] sm:$0xf]
      %v211 = vld [vmem:[%s1 + $0xec] sm:$0xf]
      %v212 = vld [vmem:[%s1 + $0xf0] sm:$0xf]
      %v213 = vld [vmem:[%s1 + $0xf4] sm:$0xf]
      %v214 = vld [vmem:[%s1 + $0xf8] sm:$0xf]
      %v215 = vld [vmem:[%s1 + $0xfc] sm:$0xf]
      %v220 = vunpack.c.l.b16 %v148
      %v221 = vunpack.c.h.b16 %v148
      %v222 = vunpack.c.l.b16 %v149
      %v223 = vunpack.c.h.b16 %v149
      %v224 = vunpack.c.l.b16 %v150
      %v225 = vunpack.c.h.b16 %v150
      %v226 = vunpack.c.l.b16 %v151
      %v227 = vunpack.c.h.b16 %v151
      %v228 = vpack.c.b16 %v224, %v220
      %v229 = vpack.c.b16 %v225, %v221
      %v230 = vpack.c.b16 %v226, %v222
      %v231 = vpack.c.b16 %v227, %v223
      %v300 = vunpack.c.l.b16 %v152
      %v301 = vunpack.c.l.b16 %v153
      %v302 = vunpack.c.l.b16 %v154
      %v303 = vunpack.c.l.b16 %v155
      %v304 = vunpack.c.l.b16 %v156
      %v305 = vunpack.c.l.b16 %v157
      %v306 = vunpack.c.l.b16 %v158
      %v307 = vunpack.c.l.b16 %v159
      %v308 = vunpack.c.l.b16 %v160
      %v309 = vunpack.c.l.b16 %v161
      %v310 = vunpack.c.l.b16 %v162
      %v311 = vunpack.c.l.b16 %v163
      %v312 = vunpack.c.l.b16 %v164
      %v313 = vunpack.c.l.b16 %v165
      %v314 = vunpack.c.l.b16 %v166
      %v315 = vunpack.c.l.b16 %v167
      %v316 = vunpack.c.l.b16 %v168
      %v317 = vunpack.c.l.b16 %v169
      %v318 = vunpack.c.l.b16 %v170
      %v319 = vunpack.c.l.b16 %v171
      %v320 = vunpack.c.l.b16 %v172
      %v321 = vunpack.c.l.b16 %v173
      %v322 = vunpack.c.l.b16 %v174
      %v323 = vunpack.c.l.b16 %v175
      %v324 = vunpack.c.l.b16 %v176
      %v325 = vunpack.c.l.b16 %v177
      %v326 = vunpack.c.l.b16 %v178
      %v327 = vunpack.c.l.b16 %v179
      %v328 = vunpack.c.l.b16 %v180
      %v329 = vunpack.c.l.b16 %v181
      %v330 = vunpack.c.l.b16 %v182
      %v331 = vunpack.c.l.b16 %v183
      %v332 = vunpack.c.l.b16 %v184
      %v333 = vunpack.c.l.b16 %v185
      %v334 = vunpack.c.l.b16 %v186
      %v335 = vunpack.c.l.b16 %v187
      %v336 = vunpack.c.l.b16 %v188
      %v337 = vunpack.c.l.b16 %v189
      %v338 = vunpack.c.l.b16 %v190
      %v339 = vunpack.c.l.b16 %v191
      %v340 = vunpack.c.l.b16 %v192
      %v341 = vunpack.c.l.b16 %v193
      %v342 = vunpack.c.l.b16 %v194
      %v343 = vunpack.c.l.b16 %v195
      %v344 = vunpack.c.l.b16 %v196
      %v345 = vunpack.c.l.b16 %v197
      %v346 = vunpack.c.l.b16 %v198
      %v347 = vunpack.c.l.b16 %v199
      %v348 = vunpack.c.l.b16 %v200
      %v349 = vunpack.c.l.b16 %v201
      %v350 = vunpack.c.l.b16 %v202
      %v351 = vunpack.c.l.b16 %v203
      %v352 = vunpack.c.l.b16 %v204
      %v353 = vunpack.c.l.b16 %v205
      %v354 = vunpack.c.l.b16 %v206
      %v355 = vunpack.c.l.b16 %v207
      %v356 = vunpack.c.l.b16 %v208
      %v357 = vunpack.c.l.b16 %v209
      %v358 = vunpack.c.l.b16 %v210
      %v359 = vunpack.c.l.b16 %v211
      %v360 = vunpack.c.l.b16 %v212
      %v361 = vunpack.c.l.b16 %v213
      %v362 = vunpack.c.l.b16 %v214
      %v363 = vunpack.c.l.b16 %v215
      %v364 = vpack.c.b16 %v301, %v300
      %v365 = vpack.c.b16 %v303, %v302
      %v366 = vpack.c.b16 %v305, %v304
      %v367 = vpack.c.b16 %v307, %v306
      %v368 = vpack.c.b16 %v309, %v308
      %v369 = vpack.c.b16 %v311, %v310
      %v370 = vpack.c.b16 %v313, %v312
      %v371 = vpack.c.b16 %v315, %v314
      %v372 = vpack.c.b16 %v317, %v316
      %v373 = vpack.c.b16 %v319, %v318
      %v374 = vpack.c.b16 %v321, %v320
      %v375 = vpack.c.b16 %v323, %v322
      %v376 = vpack.c.b16 %v325, %v324
      %v377 = vpack.c.b16 %v327, %v326
      %v378 = vpack.c.b16 %v329, %v328
      %v379 = vpack.c.b16 %v331, %v330
      %v380 = vpack.c.b16 %v333, %v332
      %v381 = vpack.c.b16 %v335, %v334
      %v382 = vpack.c.b16 %v337, %v336
      %v383 = vpack.c.b16 %v339, %v338
      %v384 = vpack.c.b16 %v341, %v340
      %v385 = vpack.c.b16 %v343, %v342
      %v386 = vpack.c.b16 %v345, %v344
      %v387 = vpack.c.b16 %v347, %v346
      %v388 = vpack.c.b16 %v349, %v348
      %v389 = vpack.c.b16 %v351, %v350
      %v390 = vpack.c.b16 %v353, %v352
      %v391 = vpack.c.b16 %v355, %v354
      %v392 = vpack.c.b16 %v357, %v356
      %v393 = vpack.c.b16 %v359, %v358
      %v394 = vpack.c.b16 %v361, %v360
      %v395 = vpack.c.b16 %v363, %v362
      %428 = vmatprep.subr.bf16.mxu0 0
      %429 = vmatpush1.bf16.msra.mxu0 %v364
      %430 = vmatprep.subr.bf16.mxu0 0
      %431 = vmatpush1.bf16.msra.mxu0 %v365
      %432 = vmatprep.subr.bf16.mxu0 0
      %433 = vmatpush1.bf16.msra.mxu0 %v366
      %434 = vmatprep.subr.bf16.mxu0 0
      %435 = vmatpush1.bf16.msra.mxu0 %v367
      %436 = vmatprep.subr.bf16.mxu0 0
      %437 = vmatpush1.bf16.msra.mxu0 %v368
      %438 = vmatprep.subr.bf16.mxu0 0
      %439 = vmatpush1.bf16.msra.mxu0 %v369
      %440 = vmatprep.subr.bf16.mxu0 0
      %441 = vmatpush1.bf16.msra.mxu0 %v370
      %442 = vmatprep.subr.bf16.mxu0 0
      %443 = vmatpush1.bf16.msra.mxu0 %v371
      %444 = vmatprep.subr.bf16.mxu0 0
      %445 = vmatpush1.bf16.msra.mxu0 %v372
      %446 = vmatprep.subr.bf16.mxu0 0
      %447 = vmatpush1.bf16.msra.mxu0 %v373
      %448 = vmatprep.subr.bf16.mxu0 0
      %449 = vmatpush1.bf16.msra.mxu0 %v374
      %450 = vmatprep.subr.bf16.mxu0 0
      %451 = vmatpush1.bf16.msra.mxu0 %v375
      %452 = vmatprep.subr.bf16.mxu0 0
      %453 = vmatpush1.bf16.msra.mxu0 %v376
      %454 = vmatprep.subr.bf16.mxu0 0
      %455 = vmatpush1.bf16.msra.mxu0 %v377
      %456 = vmatprep.subr.bf16.mxu0 0
      %457 = vmatpush1.bf16.msra.mxu0 %v378
      %458 = vmatprep.subr.bf16.mxu0 0
      %459 = vmatpush1.bf16.msra.mxu0 %v379
      %460 = vmatprep.mubr.bf16.mxu0 %v229
      %461 = vmatmul.mubr.bf16.gmra.mrb[0].mxu0 %v228
      %v462 = vpop.f32.mrb[0].mxu0
      %v463 = vadd.f32 0.0, %v462
      %v464 = vpop.f32.mrb[0].mxu0
      %v465 = vpop.f32.mrb[0].mxu0
      %v466 = vadd.f32 0.0, %v465
      %v467 = vpop.f32.mrb[0].mxu0
      %468 = vdwg.mxu0
      %469 = vmatprep.subr.bf16.mxu0 0
      %470 = vmatpush1.bf16.msra.mxu0 %v380
      %471 = vmatprep.subr.bf16.mxu0 0
      %472 = vmatpush1.bf16.msra.mxu0 %v381
      %473 = vmatprep.subr.bf16.mxu0 0
      %474 = vmatpush1.bf16.msra.mxu0 %v382
      %475 = vmatprep.subr.bf16.mxu0 0
      %476 = vmatpush1.bf16.msra.mxu0 %v383
      %477 = vmatprep.subr.bf16.mxu0 0
      %478 = vmatpush1.bf16.msra.mxu0 %v384
      %479 = vmatprep.subr.bf16.mxu0 0
      %480 = vmatpush1.bf16.msra.mxu0 %v385
      %481 = vmatprep.subr.bf16.mxu0 0
      %482 = vmatpush1.bf16.msra.mxu0 %v386
      %483 = vmatprep.subr.bf16.mxu0 0
      %484 = vmatpush1.bf16.msra.mxu0 %v387
      %485 = vmatprep.subr.bf16.mxu0 0
      %486 = vmatpush1.bf16.msra.mxu0 %v388
      %487 = vmatprep.subr.bf16.mxu0 0
      %488 = vmatpush1.bf16.msra.mxu0 %v389
      %489 = vmatprep.subr.bf16.mxu0 0
      %490 = vmatpush1.bf16.msra.mxu0 %v390
      %491 = vmatprep.subr.bf16.mxu0 0
      %492 = vmatpush1.bf16.msra.mxu0 %v391
      %493 = vmatprep.subr.bf16.mxu0 0
      %494 = vmatpush1.bf16.msra.mxu0 %v392
      %495 = vmatprep.subr.bf16.mxu0 0
      %496 = vmatpush1.bf16.msra.mxu0 %v393
      %497 = vmatprep.subr.bf16.mxu0 0
      %498 = vmatpush1.bf16.msra.mxu0 %v394
      %499 = vmatprep.subr.bf16.mxu0 0
      %500 = vmatpush1.bf16.msra.mxu0 %v395
      %501 = vmatprep.mubr.bf16.mxu0 %v231
      %502 = vmatmul.mubr.bf16.gmra.mrb[0].mxu0 %v230
      %v503 = vpop.f32.mrb[0].mxu0
      %v504 = vadd.f32 %v463, %v503
      %v505 = vpop.f32.mrb[0].mxu0
      %v506 = vpop.f32.mrb[0].mxu0
      %v507 = vadd.f32 %v466, %v506
      %v508 = vpop.f32.mrb[0].mxu0
      %509 = vdwg.mxu0
      %v510 = vadd.f32 %v504, %v507
      %v511 = vrot.slane %v510, 4
      %v512 = vadd.f32 %v510, %v511
      %v513 = vrot.slane %v512, 2
      %v514 = vadd.f32 %v512, %v513
      %v515 = vrot.slane %v514, 1
      %v516 = vadd.f32 %v514, %v515
      %v517 = vmul.f32 %v504, %v504
      %v518 = vmul.f32 %v507, %v507
      %v519 = vadd.f32 %v517, %v518
      %v520 = vrot.slane %v519, 4
      %v521 = vadd.f32 %v519, %v520
      %v522 = vrot.slane %v521, 2
      %v523 = vadd.f32 %v521, %v522
      %v524 = vrot.slane %v523, 1
      %v525 = vadd.f32 %v523, %v524
      %vm526 = vcmask 1040384
      %v527 = vsel %vm526, %v516, %v525
      %528 = vst [vmem:[%s146] sm:$0x3] %v527
      %p529 = scmp.lt.s32.totalorder %s13, 1
      %s530 = scalar_select %p529, %s13, 1
      %s531 = smul.addr %s530, 2
      %s532 = scalar_lea.vmem %s2, %s531
      // Predicated region
      $region29: #{discriminator_forward.12} parent=27 // pred_check
        %p533 = pneg %p78
      $region30: #{discriminator_forward.12} parent=27 // pred_check_branch
        %535 = sbr.rel (%p533) target = $region32
      $region31: #{discriminator_forward.12} parent=27 // pred_region
        _
      $region32: #{discriminator_forward.12} parent=27 // pred_fallthru
        _
    $region28: #{discriminator_forward.12} parent=5 // pred_fallthru
      _
    %p536 = scmp.le.s32.totalorder 2, %s8
    // Predicated region
    $region33: #{discriminator_forward.12} parent=5 // pred_check
      %p537 = pneg %p536
    $region34: #{discriminator_forward.12} parent=5 // pred_check_branch
      %539 = sbr.rel (%p537) target = $region36
    $region35: #{discriminator_forward.12} parent=5 // pred_region
      %s540 = ssub.s32 %s8, 2
      // Predicated region
      $region37: #{discriminator_forward.12} parent=35 // pred_check
        %p541 = pneg %p84
      $region38: #{discriminator_forward.12} parent=35 // pred_check_branch
        %543 = sbr.rel (%p541) target = $region40
      $region39: #{discriminator_forward.12} parent=35 // pred_region
        %p544 = scmp.lt.s32.totalorder %s14, 1
        %s545 = scalar_select %p544, %s14, 1
        %s546 = smul.addr %s545, 2
        %s547 = scalar_lea.vmem %s2, %s546
      $region40: #{discriminator_forward.12} parent=35 // pred_fallthru
        _
    $region36: #{discriminator_forward.12} parent=5 // pred_fallthru
      _
  $region6: #{discriminator_forward.12} parent=0 // loop_footer
    %s12 = sadd.s32 1, %s8
  $region7: #{discriminator_forward.12} parent=0 // loop_footer_branch
    %7 = sbr.rel target = $region3
  $region8: #{discriminator_forward.12} parent=0 // loop_exit
    _

// kernel: discriminator_forward.13
$region0: #{discriminator_forward.13}
  #allocation0 [shape = 'u32[]', space=smem, size = 0x4, offset = 0x4, fixed_abs, tag = 'smem constant byte address 0x4 - core index']
  #allocation1 [shape = 'u32[144,128]{1,0:T(1,128)}', space=vmem, size = 0x12000, scoped, tag = 'internal scratch']
  %s0 = inlined_call_operand.vmem [shape: bf16[32,512], index: 0, kind: input, shape index: {}]
  %s1 = inlined_call_operand.vmem [shape: bf16[512,128], index: 1, kind: input, shape index: {}]
  %s2 = inlined_call_operand.vmem [shape: f32[1,128], index: 2, kind: input, shape index: {}]
  %s3 = inlined_call_operand.vmem [shape: f32[1,128], index: 3, kind: input, shape index: {}]
  %s4 = inlined_call_operand.vmem [shape: bf16[32,128], index: 4, kind: output, shape index: {}]
  %s5 = sld [smem:[#allocation0]]
  $region49: #{discriminator_forward.13} parent=0
    _
  %s7 = ssub.s32 1, %s5
  %s8 = scalar_select 0, %s7, %s5
  loop: start=0, step=1, limit=4
  $region2: #{discriminator_forward.13} parent=0 // loop_pre_header
    _
  $region3: #{discriminator_forward.13} parent=0 // loop_header
    %s10 = sphi 0, %s14
    %p11 = scmp.ge.s32.totalorder %s10, 4
    %s20 = sphi 0, %s22
    %s23 = sphi 0, %s20
    %s24 = sphi 0, %s23
    %s40 = sphi 0, %s24
    %s44 = sphi 0, %s44
    %s46 = sphi 0, %s44
    %s47 = sphi 0, %s46
    %s61 = sphi 0, %s47
    %s65 = sphi 0, %s65
    %s67 = sphi 0, %s65
    %s68 = sphi 0, %s67
    %s82 = sphi 0, %s68
    %s86 = sphi 0, %s86
    %s88 = sphi 0, %s86
    %s89 = sphi 0, %s88
    %s103 = sphi 0, %s89
    %s109 = sphi 0, %s111
    %s112 = sphi 0, %s109
    %s113 = sphi 0, %s112
    %s129 = sphi 0, %s113
  $region4: #{discriminator_forward.13} parent=0 // loop_header_branch
    %13 = sbr.rel (%p11) target = $region8
  $region5: #{discriminator_forward.13} parent=0 // loop_body
    %s15 = ssub.s32 %s10, 1
    %s16 = ssub.s32 %s10, 2
    %s17 = sadd.s32 %s10, 1
    %s18 = ssub.s32 %s10, %s17
    %p19 = scmp.eq.s32.totalorder %s18, 0
    %s21 = sadd.s32 %s20, 1
    %s22 = scalar_select %p19, %s20, %s21
    %p25 = pneg %p19
    %p26 = scmp.eq.s32.totalorder %s10, 1
    %p27 = por %p25, %p26
    %p28 = scmp.ne.s32.totalorder %s20, %s23
    %p29 = scmp.eq.s32.totalorder %s10, 0
    %p30 = por %p28, %p29
    %p31 = scmp.ne.s32.totalorder %s20, %s23
    %p32 = scmp.eq.s32.totalorder %s15, 1
    %p33 = por %p31, %p32
    %p34 = scmp.ne.s32.totalorder %s23, %s24
    %p35 = scmp.eq.s32.totalorder %s15, 0
    %p36 = por %p34, %p35
    %p37 = scmp.ne.s32.totalorder %s23, %s24
    %p38 = scmp.eq.s32.totalorder %s16, 1
    %p39 = por %p37, %p38
    %p41 = scmp.ne.s32.totalorder %s24, %s40
    %p42 = scmp.eq.s32.totalorder %s16, 0
    %p43 = por %p41, %p42
    %s45 = sadd.s32 %s44, 1
    %p48 = scmp.eq.s32.totalorder %s10, 1
    %p49 = scmp.ne.s32.totalorder %s44, %s46
    %p50 = scmp.eq.s32.totalorder %s10, 0
    %p51 = por %p49, %p50
    %p52 = scmp.ne.s32.totalorder %s44, %s46
    %p53 = scmp.eq.s32.totalorder %s15, 1
    %p54 = por %p52, %p53
    %p55 = scmp.ne.s32.totalorder %s46, %s47
    %p56 = scmp.eq.s32.totalorder %s15, 0
    %p57 = por %p55, %p56
    %p58 = scmp.ne.s32.totalorder %s46, %s47
    %p59 = scmp.eq.s32.totalorder %s16, 1
    %p60 = por %p58, %p59
    %p62 = scmp.ne.s32.totalorder %s47, %s61
    %p63 = scmp.eq.s32.totalorder %s16, 0
    %p64 = por %p62, %p63
    %s66 = sadd.s32 %s65, 1
    %p69 = scmp.eq.s32.totalorder %s10, 1
    %p70 = scmp.ne.s32.totalorder %s65, %s67
    %p71 = scmp.eq.s32.totalorder %s10, 0
    %p72 = por %p70, %p71
    %p73 = scmp.ne.s32.totalorder %s65, %s67
    %p74 = scmp.eq.s32.totalorder %s15, 1
    %p75 = por %p73, %p74
    %p76 = scmp.ne.s32.totalorder %s67, %s68
    %p77 = scmp.eq.s32.totalorder %s15, 0
    %p78 = por %p76, %p77
    %p79 = scmp.ne.s32.totalorder %s67, %s68
    %p80 = scmp.eq.s32.totalorder %s16, 1
    %p81 = por %p79, %p80
    %p83 = scmp.ne.s32.totalorder %s68, %s82
    %p84 = scmp.eq.s32.totalorder %s16, 0
    %p85 = por %p83, %p84
    %s87 = sadd.s32 %s86, 1
    %p90 = scmp.eq.s32.totalorder %s10, 1
    %p91 = scmp.ne.s32.totalorder %s86, %s88
    %p92 = scmp.eq.s32.totalorder %s10, 0
    %p93 = por %p91, %p92
    %p94 = scmp.ne.s32.totalorder %s86, %s88
    %p95 = scmp.eq.s32.totalorder %s15, 1
    %p96 = por %p94, %p95
    %p97 = scmp.ne.s32.totalorder %s88, %s89
    %p98 = scmp.eq.s32.totalorder %s15, 0
    %p99 = por %p97, %p98
    %p100 = scmp.ne.s32.totalorder %s88, %s89
    %p101 = scmp.eq.s32.totalorder %s16, 1
    %p102 = por %p100, %p101
    %p104 = scmp.ne.s32.totalorder %s89, %s103
    %p105 = scmp.eq.s32.totalorder %s16, 0
    %p106 = por %p104, %p105
    %s107 = ssub.s32 %s10, %s17
    %p108 = scmp.eq.s32.totalorder %s107, 0
    %s110 = sadd.s32 %s109, 1
    %s111 = scalar_select %p108, %s109, %s110
    %p114 = pneg %p108
    %p115 = scmp.eq.s32.totalorder %s10, 1
    %p116 = por %p114, %p115
    %p117 = scmp.ne.s32.totalorder %s109, %s112
    %p118 = scmp.eq.s32.totalorder %s10, 0
    %p119 = por %p117, %p118
    %p120 = scmp.ne.s32.totalorder %s109, %s112
    %p121 = scmp.eq.s32.totalorder %s15, 1
    %p122 = por %p120, %p121
    %p123 = scmp.ne.s32.totalorder %s112, %s113
    %p124 = scmp.eq.s32.totalorder %s15, 0
    %p125 = por %p123, %p124
    %p126 = scmp.ne.s32.totalorder %s112, %s113
    %p127 = scmp.eq.s32.totalorder %s16, 1
    %p128 = por %p126, %p127
    %p130 = scmp.ne.s32.totalorder %s113, %s129
    %p131 = scmp.eq.s32.totalorder %s16, 0
    %p132 = por %p130, %p131
    %p133 = scmp.le.s32.totalorder 1, %s10
    %p134 = scmp.lt.s32.totalorder %s10, 3
    %p135 = pnand %p133, %p134
    %p136 = pneg %p135
    // Predicated region
    $region9: #{discriminator_forward.13} parent=5 // pred_check
      _
    $region10: #{discriminator_forward.13} parent=5 // pred_check_branch
      %138 = sbr.rel (%p135) target = $region12
    $region11: #{discriminator_forward.13} parent=5 // pred_region
      %s139 = ssub.s32 %s10, 1
      // Predicated region
      $region13: #{discriminator_forward.13} parent=11 // pred_check
        %p140 = pneg %p57
      $region14: #{discriminator_forward.13} parent=11 // pred_check_branch
        %142 = sbr.rel (%p140) target = $region16
      $region15: #{discriminator_forward.13} parent=11 // pred_region
        _
      $region16: #{discriminator_forward.13} parent=11 // pred_fallthru
        _
      // Predicated region
      $region17: #{discriminator_forward.13} parent=11 // pred_check
        %p143 = pneg %p78
      $region18: #{discriminator_forward.13} parent=11 // pred_check_branch
        %145 = sbr.rel (%p143) target = $region20
      $region19: #{discriminator_forward.13} parent=11 // pred_region
        _
      $region20: #{discriminator_forward.13} parent=11 // pred_fallthru
        _
      // Predicated region
      $region21: #{discriminator_forward.13} parent=11 // pred_check
        %p146 = pneg %p99
      $region22: #{discriminator_forward.13} parent=11 // pred_check_branch
        %148 = sbr.rel (%p146) target = $region24
      $region23: #{discriminator_forward.13} parent=11 // pred_region
        _
      $region24: #{discriminator_forward.13} parent=11 // pred_fallthru
        _
    $region12: #{discriminator_forward.13} parent=5 // pred_fallthru
      _
    %p149 = scmp.lt.s32.totalorder %s10, 2
    // Predicated region
    $region25: #{discriminator_forward.13} parent=5 // pred_check
      %p150 = pneg %p149
    $region26: #{discriminator_forward.13} parent=5 // pred_check_branch
      %152 = sbr.rel (%p150) target = $region28
    $region27: #{discriminator_forward.13} parent=5 // pred_region
      // Predicated region
      $region29: #{discriminator_forward.13} parent=27 // pred_check
        %p153 = pneg %p30
      $region30: #{discriminator_forward.13} parent=27 // pred_check_branch
        %155 = sbr.rel (%p153) target = $region32
      $region31: #{discriminator_forward.13} parent=27 // pred_region
        %s156 = smul.u32 2, %s10
        %p157 = scmp.lt.s32.totalorder %s156, 3
        %s158 = scalar_select %p157, %s156, 3
        %s159 = smul.addr %s158, 4
        %s160 = smul.addr %s159, 4
        %s161 = scalar_lea.vmem %s0, %s160
        %s162 = smul.u32 2, %s10
      $region32: #{discriminator_forward.13} parent=27 // pred_fallthru
        _
    $region28: #{discriminator_forward.13} parent=5 // pred_fallthru
      _
    %p163 = scmp.le.s32.totalorder 1, %s10
    %p164 = scmp.lt.s32.totalorder %s10, 3
    %p165 = pnand %p163, %p164
    %p166 = pneg %p165
    // Predicated region
    $region33: #{discriminator_forward.13} parent=5 // pred_check
      _
    $region34: #{discriminator_forward.13} parent=5 // pred_check_branch
      %168 = sbr.rel (%p165) target = $region36
    $region35: #{discriminator_forward.13} parent=5 // pred_region
      %s169 = ssub.s32 %s10, 1
      %s170 = smul.u32 2, %s15
      %p171 = scmp.lt.s32.totalorder %s170, 3
      %s172 = scalar_select %p171, %s170, 3
      %s173 = smul.addr %s172, 4
      %s174 = smul.addr %s173, 4
      %s175 = scalar_lea.vmem %s0, %s174
      %p176 = pneg %p36
      %p177 = pneg %p33
      %p178 = pneg %p57
      %p179 = pneg %p54
      %p180 = pneg %p78
      %p181 = pneg %p75
      %p182 = pneg %p99
      %p183 = pneg %p96
      %p184 = pneg %p125
      %p185 = pneg %p122
      %s186 = smul.u32 2, %s15
      %p187 = scmp.lt.s32.totalorder %s186, 3
      %s188 = scalar_select %p187, %s186, 3
      %s189 = smul.addr %s188, 4
      %s190 = scalar_lea.vmem %s4, %s189
      %s191 = smul.u32 2, %s15
      %p192 = scmp.lt.s32.totalorder %s191, 3
      %s193 = scalar_select %p192, %s191, 3
      %s194 = smul.addr %s193, 4
      %s195 = smul.addr %s194, 4
      %s196 = scalar_lea.vmem %s0, %s195
      %s197 = smul.u32 2, %s15
      %s198 = smul.u32 2, %s15
      %p199 = scmp.lt.s32.totalorder %s198, 3
      %s200 = scalar_select %p199, %s198, 3
      %s201 = smul.addr %s200, 4
      %s202 = scalar_lea.vmem %s4, %s201
      %s203 = smul.u32 2, %s15
      %v205 = vld [vmem:[%s196] sm:$0xff]
      %v206 = vld [vmem:[%s196 + $0x8] sm:$0xff]
      %v207 = vld [vmem:[%s196 + $0x10] sm:$0xff]
      %v208 = vld [vmem:[%s196 + $0x18] sm:$0xff]
      %v209 = vld [vmem:[%s1] sm:$0xf]
      %v210 = vld [vmem:[%s1 + $0x4] sm:$0xf]
      %v211 = vld [vmem:[%s1 + $0x8] sm:$0xf]
      %v212 = vld [vmem:[%s1 + $0xc] sm:$0xf]
      %v213 = vld [vmem:[%s1 + $0x10] sm:$0xf]
      %v214 = vld [vmem:[%s1 + $0x14] sm:$0xf]
      %v215 = vld [vmem:[%s1 + $0x18] sm:$0xf]
      %v216 = vld [vmem:[%s1 + $0x1c] sm:$0xf]
      %v217 = vld [vmem:[%s1 + $0x20] sm:$0xf]
      %v218 = vld [vmem:[%s1 + $0x24] sm:$0xf]
      %v219 = vld [vmem:[%s1 + $0x28] sm:$0xf]
      %v220 = vld [vmem:[%s1 + $0x2c] sm:$0xf]
      %v221 = vld [vmem:[%s1 + $0x30] sm:$0xf]
      %v222 = vld [vmem:[%s1 + $0x34] sm:$0xf]
      %v223 = vld [vmem:[%s1 + $0x38] sm:$0xf]
      %v224 = vld [vmem:[%s1 + $0x3c] sm:$0xf]
      %v225 = vld [vmem:[%s1 + $0x40] sm:$0xf]
      %v226 = vld [vmem:[%s1 + $0x44] sm:$0xf]
      %v227 = vld [vmem:[%s1 + $0x48] sm:$0xf]
      %v228 = vld [vmem:[%s1 + $0x4c] sm:$0xf]
      %v229 = vld [vmem:[%s1 + $0x50] sm:$0xf]
      %v230 = vld [vmem:[%s1 + $0x54] sm:$0xf]
      %v231 = vld [vmem:[%s1 + $0x58] sm:$0xf]
      %v232 = vld [vmem:[%s1 + $0x5c] sm:$0xf]
      %v233 = vld [vmem:[%s1 + $0x60] sm:$0xf]
      %v234 = vld [vmem:[%s1 + $0x64] sm:$0xf]
      %v235 = vld [vmem:[%s1 + $0x68] sm:$0xf]
      %v236 = vld [vmem:[%s1 + $0x6c] sm:$0xf]
      %v237 = vld [vmem:[%s1 + $0x70] sm:$0xf]
      %v238 = vld [vmem:[%s1 + $0x74] sm:$0xf]
      %v239 = vld [vmem:[%s1 + $0x78] sm:$0xf]
      %v240 = vld [vmem:[%s1 + $0x7c] sm:$0xf]
      %v241 = vld [vmem:[%s1 + $0x80] sm:$0xf]
      %v242 = vld [vmem:[%s1 + $0x84] sm:$0xf]
      %v243 = vld [vmem:[%s1 + $0x88] sm:$0xf]
      %v244 = vld [vmem:[%s1 + $0x8c] sm:$0xf]
      %v245 = vld [vmem:[%s1 + $0x90] sm:$0xf]
      %v246 = vld [vmem:[%s1 + $0x94] sm:$0xf]
      %v247 = vld [vmem:[%s1 + $0x98] sm:$0xf]
      %v248 = vld [vmem:[%s1 + $0x9c] sm:$0xf]
      %v249 = vld [vmem:[%s1 + $0xa0] sm:$0xf]
      %v250 = vld [vmem:[%s1 + $0xa4] sm:$0xf]
      %v251 = vld [vmem:[%s1 + $0xa8] sm:$0xf]
      %v252 = vld [vmem:[%s1 + $0xac] sm:$0xf]
      %v253 = vld [vmem:[%s1 + $0xb0] sm:$0xf]
      %v254 = vld [vmem:[%s1 + $0xb4] sm:$0xf]
      %v255 = vld [vmem:[%s1 + $0xb8] sm:$0xf]
      %v256 = vld [vmem:[%s1 + $0xbc] sm:$0xf]
      %v257 = vld [vmem:[%s1 + $0xc0] sm:$0xf]
      %v258 = vld [vmem:[%s1 + $0xc4] sm:$0xf]
      %v259 = vld [vmem:[%s1 + $0xc8] sm:$0xf]
      %v260 = vld [vmem:[%s1 + $0xcc] sm:$0xf]
      %v261 = vld [vmem:[%s1 + $0xd0] sm:$0xf]
      %v262 = vld [vmem:[%s1 + $0xd4] sm:$0xf]
      %v263 = vld [vmem:[%s1 + $0xd8] sm:$0xf]
      %v264 = vld [vmem:[%s1 + $0xdc] sm:$0xf]
      %v265 = vld [vmem:[%s1 + $0xe0] sm:$0xf]
      %v266 = vld [vmem:[%s1 + $0xe4] sm:$0xf]
      %v267 = vld [vmem:[%s1 + $0xe8] sm:$0xf]
      %v268 = vld [vmem:[%s1 + $0xec] sm:$0xf]
      %v269 = vld [vmem:[%s1 + $0xf0] sm:$0xf]
      %v270 = vld [vmem:[%s1 + $0xf4] sm:$0xf]
      %v271 = vld [vmem:[%s1 + $0xf8] sm:$0xf]
      %v272 = vld [vmem:[%s1 + $0xfc] sm:$0xf]
      %v277 = vunpack.c.l.b16 %v205
      %v278 = vunpack.c.h.b16 %v205
      %v279 = vunpack.c.l.b16 %v206
      %v280 = vunpack.c.h.b16 %v206
      %v281 = vunpack.c.l.b16 %v207
      %v282 = vunpack.c.h.b16 %v207
      %v283 = vunpack.c.l.b16 %v208
      %v284 = vunpack.c.h.b16 %v208
      %v285 = vpack.c.b16 %v281, %v277
      %v286 = vpack.c.b16 %v282, %v278
      %v287 = vpack.c.b16 %v283, %v279
      %v288 = vpack.c.b16 %v284, %v280
      %v357 = vunpack.c.l.b16 %v209
      %v358 = vunpack.c.l.b16 %v210
      %v359 = vunpack.c.l.b16 %v211
      %v360 = vunpack.c.l.b16 %v212
      %v361 = vunpack.c.l.b16 %v213
      %v362 = vunpack.c.l.b16 %v214
      %v363 = vunpack.c.l.b16 %v215
      %v364 = vunpack.c.l.b16 %v216
      %v365 = vunpack.c.l.b16 %v217
      %v366 = vunpack.c.l.b16 %v218
      %v367 = vunpack.c.l.b16 %v219
      %v368 = vunpack.c.l.b16 %v220
      %v369 = vunpack.c.l.b16 %v221
      %v370 = vunpack.c.l.b16 %v222
      %v371 = vunpack.c.l.b16 %v223
      %v372 = vunpack.c.l.b16 %v224
      %v373 = vunpack.c.l.b16 %v225
      %v374 = vunpack.c.l.b16 %v226
      %v375 = vunpack.c.l.b16 %v227
      %v376 = vunpack.c.l.b16 %v228
      %v377 = vunpack.c.l.b16 %v229
      %v378 = vunpack.c.l.b16 %v230
      %v379 = vunpack.c.l.b16 %v231
      %v380 = vunpack.c.l.b16 %v232
      %v381 = vunpack.c.l.b16 %v233
      %v382 = vunpack.c.l.b16 %v234
      %v383 = vunpack.c.l.b16 %v235
      %v384 = vunpack.c.l.b16 %v236
      %v385 = vunpack.c.l.b16 %v237
      %v386 = vunpack.c.l.b16 %v238
      %v387 = vunpack.c.l.b16 %v239
      %v388 = vunpack.c.l.b16 %v240
      %v389 = vunpack.c.l.b16 %v241
      %v390 = vunpack.c.l.b16 %v242
      %v391 = vunpack.c.l.b16 %v243
      %v392 = vunpack.c.l.b16 %v244
      %v393 = vunpack.c.l.b16 %v245
      %v394 = vunpack.c.l.b16 %v246
      %v395 = vunpack.c.l.b16 %v247
      %v396 = vunpack.c.l.b16 %v248
      %v397 = vunpack.c.l.b16 %v249
      %v398 = vunpack.c.l.b16 %v250
      %v399 = vunpack.c.l.b16 %v251
      %v400 = vunpack.c.l.b16 %v252
      %v401 = vunpack.c.l.b16 %v253
      %v402 = vunpack.c.l.b16 %v254
      %v403 = vunpack.c.l.b16 %v255
      %v404 = vunpack.c.l.b16 %v256
      %v405 = vunpack.c.l.b16 %v257
      %v406 = vunpack.c.l.b16 %v258
      %v407 = vunpack.c.l.b16 %v259
      %v408 = vunpack.c.l.b16 %v260
      %v409 = vunpack.c.l.b16 %v261
      %v410 = vunpack.c.l.b16 %v262
      %v411 = vunpack.c.l.b16 %v263
      %v412 = vunpack.c.l.b16 %v264
      %v413 = vunpack.c.l.b16 %v265
      %v414 = vunpack.c.l.b16 %v266
      %v415 = vunpack.c.l.b16 %v267
      %v416 = vunpack.c.l.b16 %v268
      %v417 = vunpack.c.l.b16 %v269
      %v418 = vunpack.c.l.b16 %v270
      %v419 = vunpack.c.l.b16 %v271
      %v420 = vunpack.c.l.b16 %v272
      %v421 = vpack.c.b16 %v358, %v357
      %v422 = vpack.c.b16 %v360, %v359
      %v423 = vpack.c.b16 %v362, %v361
      %v424 = vpack.c.b16 %v364, %v363
      %v425 = vpack.c.b16 %v366, %v365
      %v426 = vpack.c.b16 %v368, %v367
      %v427 = vpack.c.b16 %v370, %v369
      %v428 = vpack.c.b16 %v372, %v371
      %v429 = vpack.c.b16 %v374, %v373
      %v430 = vpack.c.b16 %v376, %v375
      %v431 = vpack.c.b16 %v378, %v377
      %v432 = vpack.c.b16 %v380, %v379
      %v433 = vpack.c.b16 %v382, %v381
      %v434 = vpack.c.b16 %v384, %v383
      %v435 = vpack.c.b16 %v386, %v385
      %v436 = vpack.c.b16 %v388, %v387
      %v437 = vpack.c.b16 %v390, %v389
      %v438 = vpack.c.b16 %v392, %v391
      %v439 = vpack.c.b16 %v394, %v393
      %v440 = vpack.c.b16 %v396, %v395
      %v441 = vpack.c.b16 %v398, %v397
      %v442 = vpack.c.b16 %v400, %v399
      %v443 = vpack.c.b16 %v402, %v401
      %v444 = vpack.c.b16 %v404, %v403
      %v445 = vpack.c.b16 %v406, %v405
      %v446 = vpack.c.b16 %v408, %v407
      %v447 = vpack.c.b16 %v410, %v409
      %v448 = vpack.c.b16 %v412, %v411
      %v449 = vpack.c.b16 %v414, %v413
      %v450 = vpack.c.b16 %v416, %v415
      %v451 = vpack.c.b16 %v418, %v417
      %v452 = vpack.c.b16 %v420, %v419
      %485 = vmatprep.subr.bf16.mxu0 0
      %486 = vmatpush1.bf16.msra.mxu0 %v421
      %487 = vmatprep.subr.bf16.mxu0 0
      %488 = vmatpush1.bf16.msra.mxu0 %v422
      %489 = vmatprep.subr.bf16.mxu0 0
      %490 = vmatpush1.bf16.msra.mxu0 %v423
      %491 = vmatprep.subr.bf16.mxu0 0
      %492 = vmatpush1.bf16.msra.mxu0 %v424
      %493 = vmatprep.subr.bf16.mxu0 0
      %494 = vmatpush1.bf16.msra.mxu0 %v425
      %495 = vmatprep.subr.bf16.mxu0 0
      %496 = vmatpush1.bf16.msra.mxu0 %v426
      %497 = vmatprep.subr.bf16.mxu0 0
      %498 = vmatpush1.bf16.msra.mxu0 %v427
      %499 = vmatprep.subr.bf16.mxu0 0
      %500 = vmatpush1.bf16.msra.mxu0 %v428
      %501 = vmatprep.subr.bf16.mxu0 0
      %502 = vmatpush1.bf16.msra.mxu0 %v429
      %503 = vmatprep.subr.bf16.mxu0 0
      %504 = vmatpush1.bf16.msra.mxu0 %v430
      %505 = vmatprep.subr.bf16.mxu0 0
      %506 = vmatpush1.bf16.msra.mxu0 %v431
      %507 = vmatprep.subr.bf16.mxu0 0
      %508 = vmatpush1.bf16.msra.mxu0 %v432
      %509 = vmatprep.subr.bf16.mxu0 0
      %510 = vmatpush1.bf16.msra.mxu0 %v433
      %511 = vmatprep.subr.bf16.mxu0 0
      %512 = vmatpush1.bf16.msra.mxu0 %v434
      %513 = vmatprep.subr.bf16.mxu0 0
      %514 = vmatpush1.bf16.msra.mxu0 %v435
      %515 = vmatprep.subr.bf16.mxu0 0
      %516 = vmatpush1.bf16.msra.mxu0 %v436
      %517 = vmatprep.mubr.bf16.mxu0 %v286
      %518 = vmatmul.mubr.bf16.gmra.mrb[0].mxu0 %v285
      %v519 = vpop.f32.mrb[0].mxu0
      %v520 = vadd.f32 0.0, %v519
      %v521 = vpop.f32.mrb[0].mxu0
      %v522 = vpop.f32.mrb[0].mxu0
      %v523 = vadd.f32 0.0, %v522
      %v524 = vpop.f32.mrb[0].mxu0
      %525 = vdwg.mxu0
      %526 = vmatprep.subr.bf16.mxu0 0
      %527 = vmatpush1.bf16.msra.mxu0 %v437
      %528 = vmatprep.subr.bf16.mxu0 0
      %529 = vmatpush1.bf16.msra.mxu0 %v438
      %530 = vmatprep.subr.bf16.mxu0 0
      %531 = vmatpush1.bf16.msra.mxu0 %v439
      %532 = vmatprep.subr.bf16.mxu0 0
      %533 = vmatpush1.bf16.msra.mxu0 %v440
      %534 = vmatprep.subr.bf16.mxu0 0
      %535 = vmatpush1.bf16.msra.mxu0 %v441
      %536 = vmatprep.subr.bf16.mxu0 0
      %537 = vmatpush1.bf16.msra.mxu0 %v442
      %538 = vmatprep.subr.bf16.mxu0 0
      %539 = vmatpush1.bf16.msra.mxu0 %v443
      %540 = vmatprep.subr.bf16.mxu0 0
      %541 = vmatpush1.bf16.msra.mxu0 %v444
      %542 = vmatprep.subr.bf16.mxu0 0
      %543 = vmatpush1.bf16.msra.mxu0 %v445
      %544 = vmatprep.subr.bf16.mxu0 0
      %545 = vmatpush1.bf16.msra.mxu0 %v446
      %546 = vmatprep.subr.bf16.mxu0 0
      %547 = vmatpush1.bf16.msra.mxu0 %v447
      %548 = vmatprep.subr.bf16.mxu0 0
      %549 = vmatpush1.bf16.msra.mxu0 %v448
      %550 = vmatprep.subr.bf16.mxu0 0
      %551 = vmatpush1.bf16.msra.mxu0 %v449
      %552 = vmatprep.subr.bf16.mxu0 0
      %553 = vmatpush1.bf16.msra.mxu0 %v450
      %554 = vmatprep.subr.bf16.mxu0 0
      %555 = vmatpush1.bf16.msra.mxu0 %v451
      %556 = vmatprep.subr.bf16.mxu0 0
      %557 = vmatpush1.bf16.msra.mxu0 %v452
      %558 = vmatprep.mubr.bf16.mxu0 %v288
      %559 = vmatmul.mubr.bf16.gmra.mrb[0].mxu0 %v287
      %v560 = vpop.f32.mrb[0].mxu0
      %v561 = vadd.f32 %v520, %v560
      %v562 = vpop.f32.mrb[0].mxu0
      %v563 = vpop.f32.mrb[0].mxu0
      %v564 = vadd.f32 %v523, %v563
      %v565 = vpop.f32.mrb[0].mxu0
      %566 = vdwg.mxu0
      %v567 = vld [vmem:[%s2] sm:$0x1]
      %v569 = vlaneseq
      %v570 = vshrl.u32 %v569, 7
      %v571 = vsub.s32 0, %v570
      %v572 = vrot.slane %v567, %v571
      %v574 = vmul.f32 %v561, %v572
      %v575 = vmul.f32 %v564, %v572
      %v576 = vld [vmem:[%s3] sm:$0x1]
      %v578 = vlaneseq
      %v579 = vshrl.u32 %v578, 7
      %v580 = vsub.s32 0, %v579
      %v581 = vrot.slane %v576, %v580
      %v583 = vadd.f32 %v574, %v581
      %v584 = vadd.f32 %v575, %v581
      %vm585 = vcmp.gt.f32.partialorder %v583, 0.0
      %vm586 = vcmp.gt.f32.partialorder %v584, 0.0
      %v587 = vmul.f32 %v583, 0.2
      %v588 = vmul.f32 %v584, 0.2
      %v589 = vsel %vm585, %v583, %v587
      %v590 = vsel %vm586, %v584, %v588
      %v591 = vpack.c.bf16 %v590, %v589
      %v593 = vunpack.c.l.b16 %v591
      %v594 = vunpack.c.h.b16 %v591
      %v595 = vpack.c.b16 %v593, %v593
      %v596 = vpack.c.b16 %v594, %v594
      %599 = vst [vmem:[%s202] sm:$0xf] %v595
      %600 = vst [vmem:[%s202 + $0x4] sm:$0xf] %v596
      %s601 = smul.u32 2, %s15
      %p602 = scmp.lt.s32.totalorder %s601, 3
      %s603 = scalar_select %p602, %s601, 3
      %s604 = smul.addr %s603, 4
      %s605 = scalar_lea.vmem %s4, %s604
      // Predicated region
      $region37: #{discriminator_forward.13} parent=35 // pred_check
        %p606 = pneg %p122
      $region38: #{discriminator_forward.13} parent=35 // pred_check_branch
        %608 = sbr.rel (%p606) target = $region40
      $region39: #{discriminator_forward.13} parent=35 // pred_region
        %s609 = smul.u32 2, %s15
      $region40: #{discriminator_forward.13} parent=35 // pred_fallthru
        _
    $region36: #{discriminator_forward.13} parent=5 // pred_fallthru
      _
    %p610 = scmp.le.s32.totalorder 2, %s10
    // Predicated region
    $region41: #{discriminator_forward.13} parent=5 // pred_check
      %p611 = pneg %p610
    $region42: #{discriminator_forward.13} parent=5 // pred_check_branch
      %613 = sbr.rel (%p611) target = $region44
    $region43: #{discriminator_forward.13} parent=5 // pred_region
      %s614 = ssub.s32 %s10, 2
      // Predicated region
      $region45: #{discriminator_forward.13} parent=43 // pred_check
        %p615 = pneg %p128
      $region46: #{discriminator_forward.13} parent=43 // pred_check_branch
        %617 = sbr.rel (%p615) target = $region48
      $region47: #{discriminator_forward.13} parent=43 // pred_region
        %s618 = smul.u32 2, %s16
        %p619 = scmp.lt.s32.totalorder %s618, 3
        %s620 = scalar_select %p619, %s618, 3
        %s621 = smul.addr %s620, 4
        %s622 = scalar_lea.vmem %s4, %s621
      $region48: #{discriminator_forward.13} parent=43 // pred_fallthru
        _
    $region44: #{discriminator_forward.13} parent=5 // pred_fallthru
      _
  $region6: #{discriminator_forward.13} parent=0 // loop_footer
    %s14 = sadd.s32 1, %s10
  $region7: #{discriminator_forward.13} parent=0 // loop_footer_branch
    %9 = sbr.rel target = $region3
  $region8: #{discriminator_forward.13} parent=0 // loop_exit
    _

</llo_original>
